<compile_context>
chip_gen: v6e
topology: v6e:2x2x1
jax: 0.10.0
libtpu: 0.0.40
codegen_flags: <defaults>
</compile_context>

<pallas_src>
import functools

import jax
import jax.numpy as jnp
from jax import lax
from jax.experimental import pallas as pl
from jax.experimental.pallas import tpu as pltpu


def _round_up(a, b):
    return ((a + b - 1) // b) * b


# ----------------------------------------------------------------------------
# Kernel A: conv (im2col matmul) + ReLU + MaxPool(2) + AdaBN(128) affine
#           + hoisted input->hidden LSTM projection (forward direction).
# Rows are time-major (row = lp * B + b).
# ----------------------------------------------------------------------------
def conv_gates_kernel(pe_ref, po_ref, cw_ref, cb_ref, s1_ref, t1_ref,
                      wih_ref, bg_ref, gates_ref, xn_ref):
    cw = cw_ref[...]                                             # (CinK, 128) bf16
    ye = jnp.dot(pe_ref[...], cw, preferred_element_type=jnp.float32) + cb_ref[...]
    yo = jnp.dot(po_ref[...], cw, preferred_element_type=jnp.float32) + cb_ref[...]
    # relu(maxpool) == maxpool(relu): relu is monotonic.
    pooled = jnp.maximum(jnp.maximum(ye, yo), 0.0)               # (TM, 128)
    xn = pooled * s1_ref[...] + t1_ref[...]                      # fused AdaBN(128)
    xn_ref[...] = xn
    gates_ref[...] = (jnp.dot(xn.astype(jnp.bfloat16), wih_ref[...],
                              preferred_element_type=jnp.float32)
                      + bg_ref[...])                             # (TM, 4*Hp)


def conv_gates(pe, po, cw, cb, s1, t1, wih, bg, *, tm):
    mpad, cink = pe.shape
    cf = cw.shape[1]
    g4 = wih.shape[1]
    full = lambda i: (0, 0)
    rows = lambda i: (i, 0)
    return pl.pallas_call(
        conv_gates_kernel,
        out_shape=[jax.ShapeDtypeStruct((mpad, g4), jnp.float32),
                   jax.ShapeDtypeStruct((mpad, cf), jnp.float32)],
        grid=(mpad // tm,),
        in_specs=[pl.BlockSpec((tm, cink), rows),
                  pl.BlockSpec((tm, cink), rows),
                  pl.BlockSpec((cink, cf), full),
                  pl.BlockSpec((1, cf), full),
                  pl.BlockSpec((1, cf), full),
                  pl.BlockSpec((1, cf), full),
                  pl.BlockSpec((cf, g4), full),
                  pl.BlockSpec((1, g4), full)],
        out_specs=[pl.BlockSpec((tm, g4), rows),
                   pl.BlockSpec((tm, cf), rows)],
        compiler_params=pltpu.CompilerParams(
            dimension_semantics=("parallel",)),
    )(pe, po, cw, cb, s1, t1, wih, bg)


# ----------------------------------------------------------------------------
# Kernel B: forward LSTM recurrence (in-kernel fori_loop, h-matmul only on the
# serial path) + single-step backward LSTM + classifier head + softmax.
# Gate layout is lane-aligned: each gate occupies a padded Hp=256-lane block.
# ----------------------------------------------------------------------------
def lstm_head_kernel(gxf_ref, xnl_ref, whh_ref, wihb_ref, bgb_ref,
                     s2f_ref, t2f_ref, s2b_ref, t2b_ref,
                     w3f_ref, w3b_ref, b3_ref, s3_ref, t3_ref,
                     w4_ref, b4_ref, o_ref):
    L, B, _ = gxf_ref.shape
    Hp = whh_ref.shape[0]
    whh = whh_ref[...]                                           # hoisted out of loop

    def step(t, carry):
        h, c = carry
        gates = gxf_ref[t] + jnp.dot(h.astype(jnp.bfloat16), whh,
                                     preferred_element_type=jnp.float32)
        i = jax.nn.sigmoid(gates[:, 0 * Hp:1 * Hp])
        f = jax.nn.sigmoid(gates[:, 1 * Hp:2 * Hp])
        g = jnp.tanh(gates[:, 2 * Hp:3 * Hp])
        o = jax.nn.sigmoid(gates[:, 3 * Hp:4 * Hp])
        c = f * c + i * g
        h = o * jnp.tanh(c)
        return h, c

    zeros = jnp.zeros((B, Hp), jnp.float32)
    h_fwd, _ = lax.fori_loop(0, L, step, (zeros, zeros))

    # Backward direction output at the last original position: exactly one LSTM
    # step on x[L-1] from a zero initial state (so W_hh of that direction and
    # the forget gate are irrelevant).
    gb = (jnp.dot(xnl_ref[...].astype(jnp.bfloat16), wihb_ref[...],
                  preferred_element_type=jnp.float32) + bgb_ref[...])
    ib = jax.nn.sigmoid(gb[:, 0 * Hp:1 * Hp])
    gg = jnp.tanh(gb[:, 2 * Hp:3 * Hp])
    ob = jax.nn.sigmoid(gb[:, 3 * Hp:4 * Hp])
    h_bwd = ob * jnp.tanh(ib * gg)

    # Head: AdaBN(300) -> Linear(300,50) -> AdaBN(50) -> ReLU -> Linear -> Softmax.
    # The (h_fwd, h_bwd) concat is realized as a split matmul (no lane concat).
    xf = h_fwd * s2f_ref[...] + t2f_ref[...]
    xb = h_bwd * s2b_ref[...] + t2b_ref[...]
    z3 = (jnp.dot(xf.astype(jnp.bfloat16), w3f_ref[...],
                  preferred_element_type=jnp.float32)
          + jnp.dot(xb.astype(jnp.bfloat16), w3b_ref[...],
                    preferred_element_type=jnp.float32)
          + b3_ref[...])
    a3 = jnp.maximum(z3 * s3_ref[...] + t3_ref[...], 0.0)
    # Dropout(p=0.2) is identity in eval mode.
    logits = (jnp.dot(a3.astype(jnp.bfloat16), w4_ref[...],
                      preferred_element_type=jnp.float32) + b4_ref[...])
    # Padded class lanes carry a -1e30 bias -> exp underflows to exactly 0.
    m = jnp.max(logits, axis=-1, keepdims=True)
    e = jnp.exp(logits - m)
    o_ref[...] = e / jnp.sum(e, axis=-1, keepdims=True)


def lstm_head(gxf, xn_last, whh, wihb, bgb, s2f, t2f, s2b, t2b,
              w3f, w3b, b3, s3, t3, w4, b4):
    B = gxf.shape[1]
    Np = w4.shape[1]
    args = (gxf, xn_last, whh, wihb, bgb, s2f, t2f, s2b, t2b,
            w3f, w3b, b3, s3, t3, w4, b4)
    vmem = lambda: pl.BlockSpec(memory_space=pltpu.MemorySpace.VMEM)
    return pl.pallas_call(
        lstm_head_kernel,
        out_shape=jax.ShapeDtypeStruct((B, Np), jnp.float32),
        in_specs=[vmem() for _ in args],
        out_specs=vmem(),
    )(*args)


# ----------------------------------------------------------------------------
# Weight packing helpers (gate blocks padded 150 -> 256 lanes, zero fill)
# ----------------------------------------------------------------------------
def adabn_affine(gamma, beta, mean, var, eps=1e-5):
    scale = gamma / jnp.sqrt(var + eps)
    return scale, beta - mean * scale


def _pad_row(vec, n):
    return jnp.zeros((1, n), jnp.float32).at[0, :vec.shape[0]].set(vec)


def _pack_gate_cols(w_t, H, Hp):
    """w_t: (rows, 4H) PyTorch gate order i,f,g,o -> (rows, 4*Hp), each gate
    block zero-padded to Hp lanes (lane-tile aligned)."""
    rows = w_t.shape[0]
    out = jnp.zeros((rows, 4 * Hp), jnp.float32)
    for g in range(4):
        out = out.at[:, g * Hp:g * Hp + H].set(w_t[:, g * H:(g + 1) * H])
    return out


def _pack_lstm(w_ih, w_hh, b_ih, b_hh, H, Hp):
    wih_p = _pack_gate_cols(w_ih.T, H, Hp).astype(jnp.bfloat16)      # (F, 4Hp)
    whh_p = jnp.zeros((Hp, 4 * Hp), jnp.float32).at[:H, :].set(
        _pack_gate_cols(w_hh.T, H, Hp)).astype(jnp.bfloat16)          # (Hp, 4Hp)
    b_p = _pack_gate_cols((b_ih + b_hh)[None, :], H, Hp)              # (1, 4Hp)
    return wih_p, whh_p, b_p


# ----------------------------------------------------------------------------
# Full forward
# ----------------------------------------------------------------------------
@functools.partial(jax.jit, static_argnames=("kernel_size", "n_hidden"))
def forward(x, params, kernel_size=15, n_hidden=150):
    B, Cin, T = x.shape
    K = kernel_size
    H = n_hidden
    Hp = _round_up(H, 128)                       # 150 -> 256 (lane aligned gates)
    n_out = params["fc4_b"].shape[0]
    Np = _round_up(n_out, 128)
    D3 = params["fc3_b"].shape[0]                # 50
    D3p = _round_up(D3, 128)
    Cf = params["conv_w"].shape[0]               # 128 filters

    L_conv = T - K + 1
    L = L_conv // 2                              # after MaxPool1d(2)

    # --- im2col patches for even/odd conv positions, rows in (time, batch) order
    # so the MaxPool, AdaBN and time-major layout all fuse into kernel A.
    base = 2 * jnp.arange(L)

    def make_patches(pos):
        widx = pos[:, None] + jnp.arange(K)[None, :]              # (L, K)
        p = x[:, :, widx]                                         # (B, Cin, L, K)
        p = p.transpose(2, 0, 1, 3).reshape(L * B, Cin * K)       # row = lp*B + b
        return p.astype(jnp.bfloat16)

    pe = make_patches(base)
    po = make_patches(base + 1)

    M = L * B
    TM = 512 if M > 512 else _round_up(M, 32)
    Mpad = _round_up(M, TM)
    if Mpad != M:
        pad = ((0, Mpad - M), (0, 0))
        pe = jnp.pad(pe, pad)
        po = jnp.pad(po, pad)

    # --- fold AdaBN running stats into per-channel affines
    s1, t1 = adabn_affine(params["bn1_g"], params["bn1_b"],
                          params["bn1_m"], params["bn1_v"])
    s2, t2 = adabn_affine(params["bn2_g"], params["bn2_b"],
                          params["bn2_m"], params["bn2_v"])
    s3, t3 = adabn_affine(params["bn3_g"], params["bn3_b"],
                          params["bn3_m"], params["bn3_v"])

    # --- weight packing (bf16 weights, f32 biases / affines)
    conv_wT = params["conv_w"].reshape(Cf, Cin * K).T.astype(jnp.bfloat16)
    conv_b = params["conv_b"][None, :]

    wih_f, whh_f, bg_f = _pack_lstm(params["lstm_wih_f"], params["lstm_whh_f"],
                                    params["lstm_bih_f"], params["lstm_bhh_f"], H, Hp)
    wih_b, _, bg_b = _pack_lstm(params["lstm_wih_b"], params["lstm_whh_b"],
                                params["lstm_bih_b"], params["lstm_bhh_b"], H, Hp)

    s2f, t2f = _pad_row(s2[:H], Hp), _pad_row(t2[:H], Hp)
    s2b, t2b = _pad_row(s2[H:2 * H], Hp), _pad_row(t2[H:2 * H], Hp)
    fc3_w = params["fc3_w"]                                        # (50, 300)
    w3f = jnp.zeros((Hp, D3p), jnp.float32).at[:H, :D3].set(
        fc3_w[:, :H].T).astype(jnp.bfloat16)
    w3b = jnp.zeros((Hp, D3p), jnp.float32).at[:H, :D3].set(
        fc3_w[:, H:2 * H].T).astype(jnp.bfloat16)
    b3 = _pad_row(params["fc3_b"], D3p)
    s3p, t3p = _pad_row(s3, D3p), _pad_row(t3, D3p)
    w4 = jnp.zeros((D3p, Np), jnp.float32).at[:D3, :n_out].set(
        params["fc4_w"].T).astype(jnp.bfloat16)
    b4 = jnp.full((1, Np), -1e30, jnp.float32).at[0, :n_out].set(params["fc4_b"])

    # --- kernel A: conv/relu/pool/adabn + hoisted input->hidden projection
    gates_all, xn_all = conv_gates(pe, po, conv_wT, conv_b,
                                   s1[None, :], t1[None, :], wih_f, bg_f, tm=TM)
    gxf = gates_all[:M].reshape(L, B, 4 * Hp)     # time-major gate inputs
    xn_last = xn_all[M - B:M]                     # normalized input at t = L-1

    # --- kernel B: LSTM recurrence + backward step + head + softmax
    probs_pad = lstm_head(gxf, xn_last, whh_f, wih_b, bg_b,
                          s2f, t2f, s2b, t2b, w3f, w3b, b3, s3p, t3p, w4, b4)
    return probs_pad[:, :n_out]


# ----------------------------------------------------------------------------
# Deterministic parameter construction (synthetic, no checkpoint loading)
# ----------------------------------------------------------------------------
def make_params(key, n_features=3, n_filters=128, kernel_size=15,
                n_hidden=150, n_outputs=10):
    counter = iter(range(1000))

    def rnd(shape, scl=0.1):
        k = jax.random.fold_in(key, next(counter))
        return (scl * jax.random.normal(k, shape)).astype(jnp.float32)

    H2 = 2 * n_hidden
    p = {
        "conv_w": rnd((n_filters, n_features, kernel_size)),
        "conv_b": rnd((n_filters,)),
        "lstm_wih_f": rnd((4 * n_hidden, n_filters)),
        "lstm_whh_f": rnd((4 * n_hidden, n_hidden)),
        "lstm_bih_f": rnd((4 * n_hidden,)),
        "lstm_bhh_f": rnd((4 * n_hidden,)),
        "lstm_wih_b": rnd((4 * n_hidden, n_filters)),
        "lstm_whh_b": rnd((4 * n_hidden, n_hidden)),
        "lstm_bih_b": rnd((4 * n_hidden,)),
        "lstm_bhh_b": rnd((4 * n_hidden,)),
        "fc3_w": rnd((50, H2)),
        "fc3_b": rnd((50,)),
        "fc4_w": rnd((n_outputs, 50)),
        "fc4_b": rnd((n_outputs,)),
    }
    for name, dim in (("bn1", n_filters), ("bn2", H2), ("bn3", 50)):
        p[name + "_g"] = 1.0 + rnd((dim,), 0.05)
        p[name + "_b"] = rnd((dim,), 0.05)
        p[name + "_m"] = rnd((dim,), 0.05)
        p[name + "_v"] = 1.0 + jnp.abs(rnd((dim,), 0.05))
    return p


if __name__ == "__main__":
    key = jax.random.PRNGKey(0)
    k_param, k_x = jax.random.split(key)

    B, n_features, time_steps, n_outputs = 2, 3, 64, 10   # small shapes
    params = make_params(k_param, n_features=n_features, n_outputs=n_outputs)
    x = jax.random.normal(k_x, (B, n_features, time_steps), dtype=jnp.float32)

    out = forward(x, params)
    out = jax.block_until_ready(out)

    assert out.shape == (B, n_outputs)
    assert bool(jnp.all(jnp.isfinite(out)))
    assert bool(jnp.allclose(jnp.sum(out, axis=-1), 1.0, atol=1e-5))
    print("KERNEL_OK")
</pallas_src>

<mosaic_0001>
module attributes {stable_mosaic.version = 11 : i64} {
  func.func @conv_gates_kernel(%arg0: i32, %arg1: memref<64x45xbf16, #tpu.memory_space<vmem>>, %arg2: memref<64x45xbf16, #tpu.memory_space<vmem>>, %arg3: memref<45x128xbf16, #tpu.memory_space<vmem>>, %arg4: memref<1x128xf32, #tpu.memory_space<vmem>>, %arg5: memref<1x128xf32, #tpu.memory_space<vmem>>, %arg6: memref<1x128xf32, #tpu.memory_space<vmem>>, %arg7: memref<128x1024xbf16, #tpu.memory_space<vmem>>, %arg8: memref<1x1024xf32, #tpu.memory_space<vmem>>, %arg9: memref<64x1024xf32, #tpu.memory_space<vmem>>, %arg10: memref<64x128xf32, #tpu.memory_space<vmem>>) attributes {dimension_semantics = [#tpu.dimension_semantics<parallel>], iteration_bounds = array<i64: 1>, scalar_prefetch = 0 : i64, scratch_operands = 0 : i64, tpu.core_type = #tpu.core_type<tc>, window_params = [{transform_indices = @transform_0, window_bounds = array<i64: 64, 45>}, {transform_indices = @transform_1, window_bounds = array<i64: 64, 45>}, {pipeline_mode = #tpu.pipeline_mode<synchronous>, transform_indices = @transform_2, window_bounds = array<i64: 45, 128>}, {pipeline_mode = #tpu.pipeline_mode<synchronous>, transform_indices = @transform_3, window_bounds = array<i64: 1, 128>}, {pipeline_mode = #tpu.pipeline_mode<synchronous>, transform_indices = @transform_4, window_bounds = array<i64: 1, 128>}, {pipeline_mode = #tpu.pipeline_mode<synchronous>, transform_indices = @transform_5, window_bounds = array<i64: 1, 128>}, {pipeline_mode = #tpu.pipeline_mode<synchronous>, transform_indices = @transform_6, window_bounds = array<i64: 128, 1024>}, {pipeline_mode = #tpu.pipeline_mode<synchronous>, transform_indices = @transform_7, window_bounds = array<i64: 1, 1024>}, {transform_indices = @transform_8, window_bounds = array<i64: 64, 1024>}, {transform_indices = @transform_9, window_bounds = array<i64: 64, 128>}]} {
    %c0 = arith.constant 0 : index
    %c0_0 = arith.constant 0 : index
    %0 = vector.load %arg3[%c0, %c0_0] : memref<45x128xbf16, #tpu.memory_space<vmem>>, vector<45x128xbf16>
    %c0_1 = arith.constant 0 : index
    %c0_2 = arith.constant 0 : index
    %1 = vector.load %arg1[%c0_1, %c0_2] : memref<64x45xbf16, #tpu.memory_space<vmem>>, vector<64x45xbf16>
    %cst = arith.constant dense<0.000000e+00> : vector<64x128xf32>
    %2 = tpu.matmul %1, %0, %cst {dimension_numbers = #tpu.dot_dimension_numbers<[1], [0], [0], [1], [0, 0, 1, 1], [], []>} : vector<64x45xbf16>, vector<45x128xbf16>, vector<64x128xf32> -> vector<64x128xf32>
    %c0_3 = arith.constant 0 : index
    %c0_4 = arith.constant 0 : index
    %3 = vector.load %arg4[%c0_3, %c0_4] : memref<1x128xf32, #tpu.memory_space<vmem>>, vector<1x128xf32>
    %4 = vector.broadcast %3 : vector<1x128xf32> to vector<64x128xf32>
    %5 = arith.addf %2, %4 : vector<64x128xf32>
    %c0_5 = arith.constant 0 : index
    %c0_6 = arith.constant 0 : index
    %6 = vector.load %arg2[%c0_5, %c0_6] : memref<64x45xbf16, #tpu.memory_space<vmem>>, vector<64x45xbf16>
    %cst_7 = arith.constant dense<0.000000e+00> : vector<64x128xf32>
    %7 = tpu.matmul %6, %0, %cst_7 {dimension_numbers = #tpu.dot_dimension_numbers<[1], [0], [0], [1], [0, 0, 1, 1], [], []>} : vector<64x45xbf16>, vector<45x128xbf16>, vector<64x128xf32> -> vector<64x128xf32>
    %c0_8 = arith.constant 0 : index
    %c0_9 = arith.constant 0 : index
    %8 = vector.load %arg4[%c0_8, %c0_9] : memref<1x128xf32, #tpu.memory_space<vmem>>, vector<1x128xf32>
    %9 = vector.broadcast %8 : vector<1x128xf32> to vector<64x128xf32>
    %10 = arith.addf %7, %9 : vector<64x128xf32>
    %11 = arith.maximumf %5, %10 : vector<64x128xf32>
    %cst_10 = arith.constant 0.000000e+00 : f32
    %12 = vector.broadcast %cst_10 : f32 to vector<64x128xf32>
    %13 = arith.maximumf %11, %12 : vector<64x128xf32>
    %c0_11 = arith.constant 0 : index
    %c0_12 = arith.constant 0 : index
    %14 = vector.load %arg5[%c0_11, %c0_12] : memref<1x128xf32, #tpu.memory_space<vmem>>, vector<1x128xf32>
    %15 = vector.broadcast %14 : vector<1x128xf32> to vector<64x128xf32>
    %16 = arith.mulf %13, %15 : vector<64x128xf32>
    %c0_13 = arith.constant 0 : index
    %c0_14 = arith.constant 0 : index
    %17 = vector.load %arg6[%c0_13, %c0_14] : memref<1x128xf32, #tpu.memory_space<vmem>>, vector<1x128xf32>
    %18 = vector.broadcast %17 : vector<1x128xf32> to vector<64x128xf32>
    %19 = arith.addf %16, %18 : vector<64x128xf32>
    %c0_15 = arith.constant 0 : index
    %c0_16 = arith.constant 0 : index
    %20 = vector.load %arg10[%c0_15, %c0_16] : memref<64x128xf32, #tpu.memory_space<vmem>>, vector<64x128xf32>
    tpu.vector_store %arg10[%c0_15, %c0_16], %19 {strides = array<i32>} : memref<64x128xf32, #tpu.memory_space<vmem>>, vector<64x128xf32>,
    %21 = arith.truncf %19 : vector<64x128xf32> to vector<64x128xbf16>
    %c0_17 = arith.constant 0 : index
    %c0_18 = arith.constant 0 : index
    %22 = vector.load %arg7[%c0_17, %c0_18] : memref<128x1024xbf16, #tpu.memory_space<vmem>>, vector<128x1024xbf16>
    %cst_19 = arith.constant dense<0.000000e+00> : vector<64x1024xf32>
    %23 = tpu.matmul %21, %22, %cst_19 {dimension_numbers = #tpu.dot_dimension_numbers<[1], [0], [0], [1], [0, 0, 1, 1], [], []>} : vector<64x128xbf16>, vector<128x1024xbf16>, vector<64x1024xf32> -> vector<64x1024xf32>
    %c0_20 = arith.constant 0 : index
    %c0_21 = arith.constant 0 : index
    %24 = vector.load %arg8[%c0_20, %c0_21] : memref<1x1024xf32, #tpu.memory_space<vmem>>, vector<1x1024xf32>
    %25 = vector.broadcast %24 : vector<1x1024xf32> to vector<64x1024xf32>
    %26 = arith.addf %23, %25 : vector<64x1024xf32>
    %c0_22 = arith.constant 0 : index
    %c0_23 = arith.constant 0 : index
    %27 = vector.load %arg9[%c0_22, %c0_23] : memref<64x1024xf32, #tpu.memory_space<vmem>>, vector<64x1024xf32>
    tpu.vector_store %arg9[%c0_22, %c0_23], %26 {strides = array<i32>} : memref<64x1024xf32, #tpu.memory_space<vmem>>, vector<64x1024xf32>,
    return
  }
  func.func @transform_0(%arg0: i32) -> (i32, i32) {
    %c0_i32 = arith.constant 0 : i32
    %c0_i32_0 = arith.constant 0 : i32
    return %arg0, %c0_i32 : i32, i32
  }
  func.func @transform_1(%arg0: i32) -> (i32, i32) {
    %c0_i32 = arith.constant 0 : i32
    %c0_i32_0 = arith.constant 0 : i32
    return %arg0, %c0_i32 : i32, i32
  }
  func.func @transform_2(%arg0: i32) -> (i32, i32) {
    %c0_i32 = arith.constant 0 : i32
    %c0_i32_0 = arith.constant 0 : i32
    %c0_i32_1 = arith.constant 0 : i32
    return %c0_i32, %c0_i32_0 : i32, i32
  }
  func.func @transform_3(%arg0: i32) -> (i32, i32) {
    %c0_i32 = arith.constant 0 : i32
    %c0_i32_0 = arith.constant 0 : i32
    %c0_i32_1 = arith.constant 0 : i32
    return %c0_i32, %c0_i32_0 : i32, i32
  }
  func.func @transform_4(%arg0: i32) -> (i32, i32) {
    %c0_i32 = arith.constant 0 : i32
    %c0_i32_0 = arith.constant 0 : i32
    %c0_i32_1 = arith.constant 0 : i32
    return %c0_i32, %c0_i32_0 : i32, i32
  }
  func.func @transform_5(%arg0: i32) -> (i32, i32) {
    %c0_i32 = arith.constant 0 : i32
    %c0_i32_0 = arith.constant 0 : i32
    %c0_i32_1 = arith.constant 0 : i32
    return %c0_i32, %c0_i32_0 : i32, i32
  }
  func.func @transform_6(%arg0: i32) -> (i32, i32) {
    %c0_i32 = arith.constant 0 : i32
    %c0_i32_0 = arith.constant 0 : i32
    %c0_i32_1 = arith.constant 0 : i32
    return %c0_i32, %c0_i32_0 : i32, i32
  }
  func.func @transform_7(%arg0: i32) -> (i32, i32) {
    %c0_i32 = arith.constant 0 : i32
    %c0_i32_0 = arith.constant 0 : i32
    %c0_i32_1 = arith.constant 0 : i32
    return %c0_i32, %c0_i32_0 : i32, i32
  }
  func.func @transform_8(%arg0: i32) -> (i32, i32) {
    %c0_i32 = arith.constant 0 : i32
    %c0_i32_0 = arith.constant 0 : i32
    return %arg0, %c0_i32 : i32, i32
  }
  func.func @transform_9(%arg0: i32) -> (i32, i32) {
    %c0_i32 = arith.constant 0 : i32
    %c0_i32_0 = arith.constant 0 : i32
    return %arg0, %c0_i32 : i32, i32
  }
}

module attributes {stable_mosaic.version = 11 : i64} {
  func.func @lstm_head_kernel(%arg0: memref<25x2x1024xf32, #tpu.memory_space<vmem>>, %arg1: memref<2x128xf32, #tpu.memory_space<vmem>>, %arg2: memref<256x1024xbf16, #tpu.memory_space<vmem>>, %arg3: memref<128x1024xbf16, #tpu.memory_space<vmem>>, %arg4: memref<1x1024xf32, #tpu.memory_space<vmem>>, %arg5: memref<1x256xf32, #tpu.memory_space<vmem>>, %arg6: memref<1x256xf32, #tpu.memory_space<vmem>>, %arg7: memref<1x256xf32, #tpu.memory_space<vmem>>, %arg8: memref<1x256xf32, #tpu.memory_space<vmem>>, %arg9: memref<256x128xbf16, #tpu.memory_space<vmem>>, %arg10: memref<256x128xbf16, #tpu.memory_space<vmem>>, %arg11: memref<1x128xf32, #tpu.memory_space<vmem>>, %arg12: memref<1x128xf32, #tpu.memory_space<vmem>>, %arg13: memref<1x128xf32, #tpu.memory_space<vmem>>, %arg14: memref<128x128xbf16, #tpu.memory_space<vmem>>, %arg15: memref<1x128xf32, #tpu.memory_space<vmem>>, %arg16: memref<2x128xf32, #tpu.memory_space<vmem>>) attributes {dimension_semantics = [], scalar_prefetch = 0 : i64, scratch_operands = 0 : i64, tpu.core_type = #tpu.core_type<tc>} {
    %c0 = arith.constant 0 : index
    %c0_0 = arith.constant 0 : index
    %0 = vector.load %arg2[%c0, %c0_0] : memref<256x1024xbf16, #tpu.memory_space<vmem>>, vector<256x1024xbf16>
    %cst = arith.constant 0.000000e+00 : f32
    %1 = vector.broadcast %cst : f32 to vector<2x256xf32>
    %c0_i32 = arith.constant 0 : i32
    %c25_i32 = arith.constant 25 : i32
    %2 = arith.addi %c0_i32, %c25_i32 : i32
    %c1_i32 = arith.constant 1 : i32
    %3:2 = scf.for %arg17 = %c0_i32 to %2 step %c1_i32 iter_args(%arg18 = %1, %arg19 = %1) -> (vector<2x256xf32>, vector<2x256xf32>)  : i32 {
      %74 = arith.index_cast %arg17 : i32 to index
      %c0_41 = arith.constant 0 : index
      %c0_42 = arith.constant 0 : index
      %75 = vector.load %arg0[%74, %c0_41, %c0_42] : memref<25x2x1024xf32, #tpu.memory_space<vmem>>, vector<1x2x1024xf32>
      %76 = vector.shape_cast %75 : vector<1x2x1024xf32> to vector<2x1024xf32>
      %77 = arith.truncf %arg18 : vector<2x256xf32> to vector<2x256xbf16>
      %cst_43 = arith.constant dense<0.000000e+00> : vector<2x1024xf32>
      %78 = tpu.matmul %77, %0, %cst_43 {dimension_numbers = #tpu.dot_dimension_numbers<[1], [0], [0], [1], [0, 0, 1, 1], [], []>} : vector<2x256xbf16>, vector<256x1024xbf16>, vector<2x1024xf32> -> vector<2x1024xf32>
      %79 = arith.addf %76, %78 : vector<2x1024xf32>
      %80 = vector.extract_strided_slice %79 {offsets = [0, 0], sizes = [2, 256], strides = [1, 1]} : vector<2x1024xf32> to vector<2x256xf32>
      %81 = arith.negf %80 : vector<2x256xf32>
      %82 = math.exp %81 : vector<2x256xf32>
      %cst_44 = arith.constant 1.000000e+00 : f32
      %83 = vector.broadcast %cst_44 : f32 to vector<2x256xf32>
      %84 = arith.addf %83, %82 : vector<2x256xf32>
      %85 = arith.divf %83, %84 : vector<2x256xf32>
      %86 = vector.extract_strided_slice %79 {offsets = [0, 256], sizes = [2, 256], strides = [1, 1]} : vector<2x1024xf32> to vector<2x256xf32>
      %87 = arith.negf %86 : vector<2x256xf32>
      %88 = math.exp %87 : vector<2x256xf32>
      %cst_45 = arith.constant 1.000000e+00 : f32
      %89 = vector.broadcast %cst_45 : f32 to vector<2x256xf32>
      %90 = arith.addf %89, %88 : vector<2x256xf32>
      %91 = arith.divf %89, %90 : vector<2x256xf32>
      %92 = vector.extract_strided_slice %79 {offsets = [0, 512], sizes = [2, 256], strides = [1, 1]} : vector<2x1024xf32> to vector<2x256xf32>
      %93 = math.tanh %92 : vector<2x256xf32>
      %94 = vector.extract_strided_slice %79 {offsets = [0, 768], sizes = [2, 256], strides = [1, 1]} : vector<2x1024xf32> to vector<2x256xf32>
      %95 = arith.negf %94 : vector<2x256xf32>
      %96 = math.exp %95 : vector<2x256xf32>
      %cst_46 = arith.constant 1.000000e+00 : f32
      %97 = vector.broadcast %cst_46 : f32 to vector<2x256xf32>
      %98 = arith.addf %97, %96 : vector<2x256xf32>
      %99 = arith.divf %97, %98 : vector<2x256xf32>
      %100 = arith.mulf %91, %arg19 : vector<2x256xf32>
      %101 = arith.mulf %85, %93 : vector<2x256xf32>
      %102 = arith.addf %100, %101 : vector<2x256xf32>
      %103 = math.tanh %102 : vector<2x256xf32>
      %104 = arith.mulf %99, %103 : vector<2x256xf32>
      scf.yield %104, %102 : vector<2x256xf32>, vector<2x256xf32>
    }
    %c25_i32_1 = arith.constant 25 : i32
    %c0_2 = arith.constant 0 : index
    %c0_3 = arith.constant 0 : index
    %4 = vector.load %arg1[%c0_2, %c0_3] : memref<2x128xf32, #tpu.memory_space<vmem>>, vector<2x128xf32>
    %5 = arith.truncf %4 : vector<2x128xf32> to vector<2x128xbf16>
    %c0_4 = arith.constant 0 : index
    %c0_5 = arith.constant 0 : index
    %6 = vector.load %arg3[%c0_4, %c0_5] : memref<128x1024xbf16, #tpu.memory_space<vmem>>, vector<128x1024xbf16>
    %cst_6 = arith.constant dense<0.000000e+00> : vector<2x1024xf32>
    %7 = tpu.matmul %5, %6, %cst_6 {dimension_numbers = #tpu.dot_dimension_numbers<[1], [0], [0], [1], [0, 0, 1, 1], [], []>} : vector<2x128xbf16>, vector<128x1024xbf16>, vector<2x1024xf32> -> vector<2x1024xf32>
    %c0_7 = arith.constant 0 : index
    %c0_8 = arith.constant 0 : index
    %8 = vector.load %arg4[%c0_7, %c0_8] : memref<1x1024xf32, #tpu.memory_space<vmem>>, vector<1x1024xf32>
    %9 = vector.broadcast %8 : vector<1x1024xf32> to vector<2x1024xf32>
    %10 = arith.addf %7, %9 : vector<2x1024xf32>
    %11 = vector.extract_strided_slice %10 {offsets = [0, 0], sizes = [2, 256], strides = [1, 1]} : vector<2x1024xf32> to vector<2x256xf32>
    %12 = arith.negf %11 : vector<2x256xf32>
    %13 = math.exp %12 : vector<2x256xf32>
    %cst_9 = arith.constant 1.000000e+00 : f32
    %14 = vector.broadcast %cst_9 : f32 to vector<2x256xf32>
    %15 = arith.addf %14, %13 : vector<2x256xf32>
    %16 = arith.divf %14, %15 : vector<2x256xf32>
    %17 = vector.extract_strided_slice %10 {offsets = [0, 512], sizes = [2, 256], strides = [1, 1]} : vector<2x1024xf32> to vector<2x256xf32>
    %18 = math.tanh %17 : vector<2x256xf32>
    %19 = vector.extract_strided_slice %10 {offsets = [0, 768], sizes = [2, 256], strides = [1, 1]} : vector<2x1024xf32> to vector<2x256xf32>
    %20 = arith.negf %19 : vector<2x256xf32>
    %21 = math.exp %20 : vector<2x256xf32>
    %cst_10 = arith.constant 1.000000e+00 : f32
    %22 = vector.broadcast %cst_10 : f32 to vector<2x256xf32>
    %23 = arith.addf %22, %21 : vector<2x256xf32>
    %24 = arith.divf %22, %23 : vector<2x256xf32>
    %25 = arith.mulf %16, %18 : vector<2x256xf32>
    %26 = math.tanh %25 : vector<2x256xf32>
    %27 = arith.mulf %24, %26 : vector<2x256xf32>
    %c0_11 = arith.constant 0 : index
    %c0_12 = arith.constant 0 : index
    %28 = vector.load %arg5[%c0_11, %c0_12] : memref<1x256xf32, #tpu.memory_space<vmem>>, vector<1x256xf32>
    %29 = vector.broadcast %28 : vector<1x256xf32> to vector<2x256xf32>
    %30 = arith.mulf %3#0, %29 : vector<2x256xf32>
    %c0_13 = arith.constant 0 : index
    %c0_14 = arith.constant 0 : index
    %31 = vector.load %arg6[%c0_13, %c0_14] : memref<1x256xf32, #tpu.memory_space<vmem>>, vector<1x256xf32>
    %32 = vector.broadcast %31 : vector<1x256xf32> to vector<2x256xf32>
    %33 = arith.addf %30, %32 : vector<2x256xf32>
    %c0_15 = arith.constant 0 : index
    %c0_16 = arith.constant 0 : index
    %34 = vector.load %arg7[%c0_15, %c0_16] : memref<1x256xf32, #tpu.memory_space<vmem>>, vector<1x256xf32>
    %35 = vector.broadcast %34 : vector<1x256xf32> to vector<2x256xf32>
    %36 = arith.mulf %27, %35 : vector<2x256xf32>
    %c0_17 = arith.constant 0 : index
    %c0_18 = arith.constant 0 : index
    %37 = vector.load %arg8[%c0_17, %c0_18] : memref<1x256xf32, #tpu.memory_space<vmem>>, vector<1x256xf32>
    %38 = vector.broadcast %37 : vector<1x256xf32> to vector<2x256xf32>
    %39 = arith.addf %36, %38 : vector<2x256xf32>
    %40 = arith.truncf %33 : vector<2x256xf32> to vector<2x256xbf16>
    %c0_19 = arith.constant 0 : index
    %c0_20 = arith.constant 0 : index
    %41 = vector.load %arg9[%c0_19, %c0_20] : memref<256x128xbf16, #tpu.memory_space<vmem>>, vector<256x128xbf16>
    %cst_21 = arith.constant dense<0.000000e+00> : vector<2x128xf32>
    %42 = tpu.matmul %40, %41, %cst_21 {dimension_numbers = #tpu.dot_dimension_numbers<[1], [0], [0], [1], [0, 0, 1, 1], [], []>} : vector<2x256xbf16>, vector<256x128xbf16>, vector<2x128xf32> -> vector<2x128xf32>
    %43 = arith.truncf %39 : vector<2x256xf32> to vector<2x256xbf16>
    %c0_22 = arith.constant 0 : index
    %c0_23 = arith.constant 0 : index
    %44 = vector.load %arg10[%c0_22, %c0_23] : memref<256x128xbf16, #tpu.memory_space<vmem>>, vector<256x128xbf16>
    %cst_24 = arith.constant dense<0.000000e+00> : vector<2x128xf32>
    %45 = tpu.matmul %43, %44, %cst_24 {dimension_numbers = #tpu.dot_dimension_numbers<[1], [0], [0], [1], [0, 0, 1, 1], [], []>} : vector<2x256xbf16>, vector<256x128xbf16>, vector<2x128xf32> -> vector<2x128xf32>
    %46 = arith.addf %42, %45 : vector<2x128xf32>
    %c0_25 = arith.constant 0 : index
    %c0_26 = arith.constant 0 : index
    %47 = vector.load %arg11[%c0_25, %c0_26] : memref<1x128xf32, #tpu.memory_space<vmem>>, vector<1x128xf32>
    %48 = vector.broadcast %47 : vector<1x128xf32> to vector<2x128xf32>
    %49 = arith.addf %46, %48 : vector<2x128xf32>
    %c0_27 = arith.constant 0 : index
    %c0_28 = arith.constant 0 : index
    %50 = vector.load %arg12[%c0_27, %c0_28] : memref<1x128xf32, #tpu.memory_space<vmem>>, vector<1x128xf32>
    %51 = vector.broadcast %50 : vector<1x128xf32> to vector<2x128xf32>
    %52 = arith.mulf %49, %51 : vector<2x128xf32>
    %c0_29 = arith.constant 0 : index
    %c0_30 = arith.constant 0 : index
    %53 = vector.load %arg13[%c0_29, %c0_30] : memref<1x128xf32, #tpu.memory_space<vmem>>, vector<1x128xf32>
    %54 = vector.broadcast %53 : vector<1x128xf32> to vector<2x128xf32>
    %55 = arith.addf %52, %54 : vector<2x128xf32>
    %cst_31 = arith.constant 0.000000e+00 : f32
    %56 = vector.broadcast %cst_31 : f32 to vector<2x128xf32>
    %57 = arith.maximumf %55, %56 : vector<2x128xf32>
    %58 = arith.truncf %57 : vector<2x128xf32> to vector<2x128xbf16>
    %c0_32 = arith.constant 0 : index
    %c0_33 = arith.constant 0 : index
    %59 = vector.load %arg14[%c0_32, %c0_33] : memref<128x128xbf16, #tpu.memory_space<vmem>>, vector<128x128xbf16>
    %cst_34 = arith.constant dense<0.000000e+00> : vector<2x128xf32>
    %60 = tpu.matmul %58, %59, %cst_34 {dimension_numbers = #tpu.dot_dimension_numbers<[1], [0], [0], [1], [0, 0, 1, 1], [], []>} : vector<2x128xbf16>, vector<128x128xbf16>, vector<2x128xf32> -> vector<2x128xf32>
    %c0_35 = arith.constant 0 : index
    %c0_36 = arith.constant 0 : index
    %61 = vector.load %arg15[%c0_35, %c0_36] : memref<1x128xf32, #tpu.memory_space<vmem>>, vector<1x128xf32>
    %62 = vector.broadcast %61 : vector<1x128xf32> to vector<2x128xf32>
    %63 = arith.addf %60, %62 : vector<2x128xf32>
    %cst_37 = arith.constant dense<0xFF800000> : vector<2xf32>
    %64 = vector.multi_reduction <maximumf>, %63, %cst_37 [1] : vector<2x128xf32> to vector<2xf32>
    %65 = vector.shape_cast %64 : vector<2xf32> to vector<2x1xf32>
    %66 = vector.broadcast %65 : vector<2x1xf32> to vector<2x128xf32>
    %67 = arith.subf %63, %66 : vector<2x128xf32>
    %68 = math.exp %67 : vector<2x128xf32>
    %cst_38 = arith.constant dense<0.000000e+00> : vector<2xf32>
    %69 = vector.multi_reduction <add>, %68, %cst_38 [1] : vector<2x128xf32> to vector<2xf32>
    %70 = vector.shape_cast %69 : vector<2xf32> to vector<2x1xf32>
    %71 = vector.broadcast %70 : vector<2x1xf32> to vector<2x128xf32>
    %72 = arith.divf %68, %71 : vector<2x128xf32>
    %c0_39 = arith.constant 0 : index
    %c0_40 = arith.constant 0 : index
    %73 = vector.load %arg16[%c0_39, %c0_40] : memref<2x128xf32, #tpu.memory_space<vmem>>, vector<2x128xf32>
    tpu.vector_store %arg16[%c0_39, %c0_40], %72 {strides = array<i32>} : memref<2x128xf32, #tpu.memory_space<vmem>>, vector<2x128xf32>,
    return
  }
}

</mosaic_0001>

<llo_original>
// kernel: forward.2
$region0: #{forward.2}
  #allocation0 [shape = 'u32[]', space=smem, size = 0x4, offset = 0x4, fixed_abs, tag = 'smem constant byte address 0x4 - core index']
  #allocation1 [shape = 'u32[144,128]{1,0:T(1,128)}', space=vmem, size = 0x12000, scoped, tag = 'internal scratch']
  %s0 = inlined_call_operand.vmem [shape: bf16[64,45], index: 0, kind: input, shape index: {}]
  %s1 = inlined_call_operand.vmem [shape: bf16[64,45], index: 1, kind: input, shape index: {}]
  %s2 = inlined_call_operand.vmem [shape: bf16[45,128], index: 2, kind: input, shape index: {}]
  %s3 = inlined_call_operand.vmem [shape: f32[1,128], index: 3, kind: input, shape index: {}]
  %s4 = inlined_call_operand.vmem [shape: f32[1,128], index: 4, kind: input, shape index: {}]
  %s5 = inlined_call_operand.vmem [shape: f32[1,128], index: 5, kind: input, shape index: {}]
  %s6 = inlined_call_operand.vmem [shape: bf16[128,1024], index: 6, kind: input, shape index: {}]
  %s7 = inlined_call_operand.vmem [shape: f32[1,1024], index: 7, kind: input, shape index: {}]
  %s8 = inlined_call_operand.vmem [shape: f32[64,1024], index: 8, kind: output, shape index: {0}]
  %s9 = inlined_call_operand.vmem [shape: f32[64,128], index: 9, kind: output, shape index: {1}]
  %10 = xla_tuple %s8, %s9
  %s11 = sld [smem:[#allocation0]]
  $region50: #{forward.2} parent=0
    _
  %s13 = ssub.s32 1, %s11
  %s14 = scalar_select 0, %s13, %s11
  // Predicated region
  $region2: #{forward.2} parent=0 // pred_check
    _
  $region3: #{forward.2} parent=0 // pred_check_branch
    %16 = sbr.rel (0) target = $region5
  $region4: #{forward.2} parent=0 // pred_region
    _
  $region5: #{forward.2} parent=0 // pred_fallthru
    _
  // Predicated region
  $region6: #{forward.2} parent=0 // pred_check
    _
  $region7: #{forward.2} parent=0 // pred_check_branch
    %18 = sbr.rel (0) target = $region9
  $region8: #{forward.2} parent=0 // pred_region
    _
  $region9: #{forward.2} parent=0 // pred_fallthru
    _
  // Predicated region
  $region10: #{forward.2} parent=0 // pred_check
    _
  $region11: #{forward.2} parent=0 // pred_check_branch
    %20 = sbr.rel (0) target = $region13
  $region12: #{forward.2} parent=0 // pred_region
    _
  $region13: #{forward.2} parent=0 // pred_fallthru
    _
  // Predicated region
  $region14: #{forward.2} parent=0 // pred_check
    _
  $region15: #{forward.2} parent=0 // pred_check_branch
    %22 = sbr.rel (0) target = $region17
  $region16: #{forward.2} parent=0 // pred_region
    _
  $region17: #{forward.2} parent=0 // pred_fallthru
    _
  // Predicated region
  $region18: #{forward.2} parent=0 // pred_check
    _
  $region19: #{forward.2} parent=0 // pred_check_branch
    %24 = sbr.rel (0) target = $region21
  $region20: #{forward.2} parent=0 // pred_region
    _
  $region21: #{forward.2} parent=0 // pred_fallthru
    _
  // Predicated region
  $region22: #{forward.2} parent=0 // pred_check
    _
  $region23: #{forward.2} parent=0 // pred_check_branch
    %26 = sbr.rel (0) target = $region25
  $region24: #{forward.2} parent=0 // pred_region
    _
  $region25: #{forward.2} parent=0 // pred_fallthru
    _
  // Predicated region
  $region26: #{forward.2} parent=0 // pred_check
    _
  $region27: #{forward.2} parent=0 // pred_check_branch
    %28 = sbr.rel (0) target = $region29
  $region28: #{forward.2} parent=0 // pred_region
    _
  $region29: #{forward.2} parent=0 // pred_fallthru
    _
  // Predicated region
  $region30: #{forward.2} parent=0 // pred_check
    _
  $region31: #{forward.2} parent=0 // pred_check_branch
    %30 = sbr.rel (0) target = $region33
  $region32: #{forward.2} parent=0 // pred_region
    _
  $region33: #{forward.2} parent=0 // pred_fallthru
    _
  %v32 = vld [vmem:[%s2] sm:$0xf]
  %v33 = vld [vmem:[%s2 + $0x4] sm:$0xf]
  %v34 = vld [vmem:[%s2 + $0x8] sm:$0xf]
  %v35 = vld [vmem:[%s2 + $0xc] sm:$0xf]
  %v36 = vld [vmem:[%s2 + $0x10] sm:$0xf]
  %v37 = vld [vmem:[%s2 + $0x14] sm:$0x7]
  %v38 = vld [vmem:[%s0] sm:$0xf]
  %v39 = vld [vmem:[%s0 + $0x4] sm:$0xf]
  %v40 = vld [vmem:[%s0 + $0x8] sm:$0xf]
  %v41 = vld [vmem:[%s0 + $0xc] sm:$0xf]
  %v42 = vld [vmem:[%s0 + $0x10] sm:$0xf]
  %v43 = vld [vmem:[%s0 + $0x14] sm:$0xf]
  %v44 = vld [vmem:[%s0 + $0x18] sm:$0xf]
  %v45 = vld [vmem:[%s0 + $0x1c] sm:$0xf]
  %v46 = vld [vmem:[%s3] sm:$0x1]
  %v48 = vlaneseq
  %v49 = vshrl.u32 %v48, 7
  %v50 = vsub.s32 0, %v49
  %v51 = vrot.slane %v46, %v50
  %v61 = vunpack.c.l.b16 %v38
  %v62 = vunpack.c.l.b16 %v39
  %v63 = vunpack.c.l.b16 %v40
  %v64 = vunpack.c.l.b16 %v41
  %v65 = vunpack.c.l.b16 %v42
  %v66 = vunpack.c.l.b16 %v43
  %v67 = vunpack.c.l.b16 %v44
  %v68 = vunpack.c.l.b16 %v45
  %v69 = vpack.c.b16 %v62, %v61
  %v70 = vpack.c.b16 %v64, %v63
  %v71 = vpack.c.b16 %v66, %v65
  %v72 = vpack.c.b16 %v68, %v67
  %v79 = vunpack.c.l.b16 %v32
  %v80 = vunpack.c.l.b16 %v33
  %v81 = vunpack.c.l.b16 %v34
  %v82 = vunpack.c.l.b16 %v35
  %v83 = vunpack.c.l.b16 %v36
  %v84 = vunpack.c.l.b16 %v37
  %v85 = vpack.c.b16 %v80, %v79
  %v86 = vpack.c.b16 %v82, %v81
  %v87 = vpack.c.b16 %v84, %v83
  %vm90 = vcmask 367616
  %v92 = vsel %vm90, %v69, 0
  %v95 = vsel %vm90, %v70, 0
  %v98 = vsel %vm90, %v71, 0
  %v101 = vsel %vm90, %v72, 0
  %vm103 = vcmask 1045504
  %vm104 = vcmask 1046528
  %v105 = vsel %vm103, 4294967295, 65535
  %v106 = vsel %vm104, %v105, 0
  %v108 = vand.u32 %v87, %v106
  %110 = vmatprep.subr.bf16.mxu0 0
  %111 = vmatpush1.bf16.msra.mxu0 0
  %112 = vmatprep.subr.bf16.mxu0 0
  %113 = vmatpush1.bf16.msra.mxu0 0
  %114 = vmatprep.subr.bf16.mxu0 0
  %115 = vmatpush1.bf16.msra.mxu0 0
  %116 = vmatprep.subr.bf16.mxu0 0
  %117 = vmatpush1.bf16.msra.mxu0 0
  %118 = vmatprep.subr.bf16.mxu0 0
  %119 = vmatpush1.bf16.msra.mxu0 0
  %120 = vmatprep.subr.bf16.mxu0 0
  %121 = vmatpush1.bf16.msra.mxu0 %v108
  %122 = vmatprep.subr.bf16.mxu0 0
  %123 = vmatpush1.bf16.msra.mxu0 %v86
  %124 = vmatprep.subr.bf16.mxu0 0
  %125 = vmatpush1.bf16.msra.mxu0 %v85
  %126 = vmatprep.subr.bf16.mxu0 0
  %127 = vmatpush2.bf16.msra.mxu0 0
  %128 = vmatprep.subr.bf16.mxu0 0
  %129 = vmatpush2.bf16.msra.mxu0 0
  %130 = vmatprep.subr.bf16.mxu0 0
  %131 = vmatpush2.bf16.msra.mxu0 0
  %132 = vmatprep.subr.bf16.mxu0 0
  %133 = vmatpush2.bf16.msra.mxu0 0
  %134 = vmatprep.subr.bf16.mxu0 0
  %135 = vmatpush2.bf16.msra.mxu0 0
  %136 = vmatprep.subr.bf16.mxu0 0
  %137 = vmatpush2.bf16.msra.mxu0 0
  %138 = vmatprep.subr.bf16.mxu0 0
  %139 = vmatpush2.bf16.msra.mxu0 0
  %140 = vmatprep.subr.bf16.mxu0 0
  %141 = vmatpush2.bf16.msra.mxu0 0
  %142 = vmatprep.mubr.bf16.mxu0 0
  %143 = vmatmul.mubr.bf16.gmra.mxu0 %v92
  %v144 = vpop.f32.mrf.mxu0
  %v145 = vadd.f32 %v51, %v144
  %v146 = vpop.f32.mrf.mxu0
  %v147 = vpop.f32.mrf.mxu0
  %v148 = vadd.f32 %v51, %v147
  %v149 = vpop.f32.mrf.mxu0
  %150 = vmatprep.mubr.bf16.mxu0 0
  %151 = vmatmul.mubr.bf16.gmra.mxu0 %v95
  %v152 = vpop.f32.mrf.mxu0
  %v153 = vadd.f32 %v51, %v152
  %v154 = vpop.f32.mrf.mxu0
  %v155 = vpop.f32.mrf.mxu0
  %v156 = vadd.f32 %v51, %v155
  %v157 = vpop.f32.mrf.mxu0
  %158 = vmatprep.mubr.bf16.mxu0 0
  %159 = vmatmul.mubr.bf16.gmra.mxu0 %v98
  %v160 = vpop.f32.mrf.mxu0
  %v161 = vadd.f32 %v51, %v160
  %v162 = vpop.f32.mrf.mxu0
  %v163 = vpop.f32.mrf.mxu0
  %v164 = vadd.f32 %v51, %v163
  %v165 = vpop.f32.mrf.mxu0
  %166 = vmatprep.mubr.bf16.mxu0 0
  %167 = vmatmul.mubr.bf16.gmra.mxu0 %v101
  %v168 = vpop.f32.mrf.mxu0
  %v169 = vadd.f32 %v51, %v168
  %v170 = vpop.f32.mrf.mxu0
  %v171 = vpop.f32.mrf.mxu0
  %v172 = vadd.f32 %v51, %v171
  %v173 = vpop.f32.mrf.mxu0
  %174 = vdwg.mxu0
  %v175 = vld [vmem:[%s1] sm:$0xf]
  %v176 = vld [vmem:[%s1 + $0x4] sm:$0xf]
  %v177 = vld [vmem:[%s1 + $0x8] sm:$0xf]
  %v178 = vld [vmem:[%s1 + $0xc] sm:$0xf]
  %v179 = vld [vmem:[%s1 + $0x10] sm:$0xf]
  %v180 = vld [vmem:[%s1 + $0x14] sm:$0xf]
  %v181 = vld [vmem:[%s1 + $0x18] sm:$0xf]
  %v182 = vld [vmem:[%s1 + $0x1c] sm:$0xf]
  %v191 = vunpack.c.l.b16 %v175
  %v192 = vunpack.c.l.b16 %v176
  %v193 = vunpack.c.l.b16 %v177
  %v194 = vunpack.c.l.b16 %v178
  %v195 = vunpack.c.l.b16 %v179
  %v196 = vunpack.c.l.b16 %v180
  %v197 = vunpack.c.l.b16 %v181
  %v198 = vunpack.c.l.b16 %v182
  %v199 = vpack.c.b16 %v192, %v191
  %v200 = vpack.c.b16 %v194, %v193
  %v201 = vpack.c.b16 %v196, %v195
  %v202 = vpack.c.b16 %v198, %v197
  %v204 = vsel %vm90, %v199, 0
  %v207 = vsel %vm90, %v200, 0
  %v210 = vsel %vm90, %v201, 0
  %v213 = vsel %vm90, %v202, 0
  %215 = vmatprep.subr.bf16.mxu0 0
  %216 = vmatpush1.bf16.msra.mxu0 0
  %217 = vmatprep.subr.bf16.mxu0 0
  %218 = vmatpush1.bf16.msra.mxu0 0
  %219 = vmatprep.subr.bf16.mxu0 0
  %220 = vmatpush1.bf16.msra.mxu0 0
  %221 = vmatprep.subr.bf16.mxu0 0
  %222 = vmatpush1.bf16.msra.mxu0 0
  %223 = vmatprep.subr.bf16.mxu0 0
  %224 = vmatpush1.bf16.msra.mxu0 0
  %225 = vmatprep.subr.bf16.mxu0 0
  %226 = vmatpush1.bf16.msra.mxu0 %v108
  %227 = vmatprep.subr.bf16.mxu0 0
  %228 = vmatpush1.bf16.msra.mxu0 %v86
  %229 = vmatprep.subr.bf16.mxu0 0
  %230 = vmatpush1.bf16.msra.mxu0 %v85
  %231 = vmatprep.subr.bf16.mxu0 0
  %232 = vmatpush2.bf16.msra.mxu0 0
  %233 = vmatprep.subr.bf16.mxu0 0
  %234 = vmatpush2.bf16.msra.mxu0 0
  %235 = vmatprep.subr.bf16.mxu0 0
  %236 = vmatpush2.bf16.msra.mxu0 0
  %237 = vmatprep.subr.bf16.mxu0 0
  %238 = vmatpush2.bf16.msra.mxu0 0
  %239 = vmatprep.subr.bf16.mxu0 0
  %240 = vmatpush2.bf16.msra.mxu0 0
  %241 = vmatprep.subr.bf16.mxu0 0
  %242 = vmatpush2.bf16.msra.mxu0 0
  %243 = vmatprep.subr.bf16.mxu0 0
  %244 = vmatpush2.bf16.msra.mxu0 0
  %245 = vmatprep.subr.bf16.mxu0 0
  %246 = vmatpush2.bf16.msra.mxu0 0
  %247 = vmatprep.mubr.bf16.mxu0 0
  %248 = vmatmul.mubr.bf16.gmra.mxu0 %v204
  %v249 = vpop.f32.mrf.mxu0
  %v250 = vadd.f32 %v51, %v249
  %v251 = vpop.f32.mrf.mxu0
  %v252 = vpop.f32.mrf.mxu0
  %v253 = vadd.f32 %v51, %v252
  %v254 = vpop.f32.mrf.mxu0
  %255 = vmatprep.mubr.bf16.mxu0 0
  %256 = vmatmul.mubr.bf16.gmra.mxu0 %v207
  %v257 = vpop.f32.mrf.mxu0
  %v258 = vadd.f32 %v51, %v257
  %v259 = vpop.f32.mrf.mxu0
  %v260 = vpop.f32.mrf.mxu0
  %v261 = vadd.f32 %v51, %v260
  %v262 = vpop.f32.mrf.mxu0
  %263 = vmatprep.mubr.bf16.mxu0 0
  %264 = vmatmul.mubr.bf16.gmra.mxu0 %v210
  %v265 = vpop.f32.mrf.mxu0
  %v266 = vadd.f32 %v51, %v265
  %v267 = vpop.f32.mrf.mxu0
  %v268 = vpop.f32.mrf.mxu0
  %v269 = vadd.f32 %v51, %v268
  %v270 = vpop.f32.mrf.mxu0
  %271 = vmatprep.mubr.bf16.mxu0 0
  %272 = vmatmul.mubr.bf16.gmra.mxu0 %v213
  %v273 = vpop.f32.mrf.mxu0
  %v274 = vadd.f32 %v51, %v273
  %v275 = vpop.f32.mrf.mxu0
  %v276 = vpop.f32.mrf.mxu0
  %v277 = vadd.f32 %v51, %v276
  %v278 = vpop.f32.mrf.mxu0
  %279 = vdwg.mxu0
  %v280 = vmax.f32 %v145, %v250
  %v281 = vmax.f32 %v148, %v253
  %v282 = vmax.f32 %v153, %v258
  %v283 = vmax.f32 %v156, %v261
  %v284 = vmax.f32 %v161, %v266
  %v285 = vmax.f32 %v164, %v269
  %v286 = vmax.f32 %v169, %v274
  %v287 = vmax.f32 %v172, %v277
  %v288 = vmax.f32 %v280, 0.0
  %v289 = vmax.f32 %v281, 0.0
  %v290 = vmax.f32 %v282, 0.0
  %v291 = vmax.f32 %v283, 0.0
  %v292 = vmax.f32 %v284, 0.0
  %v293 = vmax.f32 %v285, 0.0
  %v294 = vmax.f32 %v286, 0.0
  %v295 = vmax.f32 %v287, 0.0
  %v296 = vld [vmem:[%s4] sm:$0x1]
  %v298 = vlaneseq
  %v299 = vshrl.u32 %v298, 7
  %v300 = vsub.s32 0, %v299
  %v301 = vrot.slane %v296, %v300
  %v303 = vmul.f32 %v288, %v301
  %v304 = vmul.f32 %v289, %v301
  %v305 = vmul.f32 %v290, %v301
  %v306 = vmul.f32 %v291, %v301
  %v307 = vmul.f32 %v292, %v301
  %v308 = vmul.f32 %v293, %v301
  %v309 = vmul.f32 %v294, %v301
  %v310 = vmul.f32 %v295, %v301
  %v311 = vld [vmem:[%s5] sm:$0x1]
  %v313 = vlaneseq
  %v314 = vshrl.u32 %v313, 7
  %v315 = vsub.s32 0, %v314
  %v316 = vrot.slane %v311, %v315
  %v318 = vadd.f32 %v303, %v316
  %v319 = vadd.f32 %v304, %v316
  %v320 = vadd.f32 %v305, %v316
  %v321 = vadd.f32 %v306, %v316
  %v322 = vadd.f32 %v307, %v316
  %v323 = vadd.f32 %v308, %v316
  %v324 = vadd.f32 %v309, %v316
  %v325 = vadd.f32 %v310, %v316
  %326 = vst [vmem:[%s9] sm:$0xff] %v318
  %327 = vst [vmem:[%s9 + $0x8] sm:$0xff] %v319
  %328 = vst [vmem:[%s9 + $0x10] sm:$0xff] %v320
  %329 = vst [vmem:[%s9 + $0x18] sm:$0xff] %v321
  %330 = vst [vmem:[%s9 + $0x20] sm:$0xff] %v322
  %331 = vst [vmem:[%s9 + $0x28] sm:$0xff] %v323
  %332 = vst [vmem:[%s9 + $0x30] sm:$0xff] %v324
  %333 = vst [vmem:[%s9 + $0x38] sm:$0xff] %v325
  %v334 = vpack.c.bf16 %v319, %v318
  %v335 = vpack.c.bf16 %v321, %v320
  %v336 = vpack.c.bf16 %v323, %v322
  %v337 = vpack.c.bf16 %v325, %v324
  %v338 = vld [vmem:[%s6] sm:$0xff]
  %v339 = vld [vmem:[%s6 + $0x8] sm:$0xff]
  %v340 = vld [vmem:[%s6 + $0x10] sm:$0xff]
  %v341 = vld [vmem:[%s6 + $0x18] sm:$0xff]
  %v342 = vld [vmem:[%s6 + $0x20] sm:$0xff]
  %v343 = vld [vmem:[%s6 + $0x28] sm:$0xff]
  %v344 = vld [vmem:[%s6 + $0x30] sm:$0xff]
  %v345 = vld [vmem:[%s6 + $0x38] sm:$0xff]
  %v346 = vld [vmem:[%s6 + $0x40] sm:$0xff]
  %v347 = vld [vmem:[%s6 + $0x48] sm:$0xff]
  %v348 = vld [vmem:[%s6 + $0x50] sm:$0xff]
  %v349 = vld [vmem:[%s6 + $0x58] sm:$0xff]
  %v350 = vld [vmem:[%s6 + $0x60] sm:$0xff]
  %v351 = vld [vmem:[%s6 + $0x68] sm:$0xff]
  %v352 = vld [vmem:[%s6 + $0x70] sm:$0xff]
  %v353 = vld [vmem:[%s6 + $0x78] sm:$0xff]
  %v354 = vld [vmem:[%s6 + $0x80] sm:$0xff]
  %v355 = vld [vmem:[%s6 + $0x88] sm:$0xff]
  %v356 = vld [vmem:[%s6 + $0x90] sm:$0xff]
  %v357 = vld [vmem:[%s6 + $0x98] sm:$0xff]
  %v358 = vld [vmem:[%s6 + $0xa0] sm:$0xff]
  %v359 = vld [vmem:[%s6 + $0xa8] sm:$0xff]
  %v360 = vld [vmem:[%s6 + $0xb0] sm:$0xff]
  %v361 = vld [vmem:[%s6 + $0xb8] sm:$0xff]
  %v362 = vld [vmem:[%s6 + $0xc0] sm:$0xff]
  %v363 = vld [vmem:[%s6 + $0xc8] sm:$0xff]
  %v364 = vld [vmem:[%s6 + $0xd0] sm:$0xff]
  %v365 = vld [vmem:[%s6 + $0xd8] sm:$0xff]
  %v366 = vld [vmem:[%s6 + $0xe0] sm:$0xff]
  %v367 = vld [vmem:[%s6 + $0xe8] sm:$0xff]
  %v368 = vld [vmem:[%s6 + $0xf0] sm:$0xff]
  %v369 = vld [vmem:[%s6 + $0xf8] sm:$0xff]
  %v370 = vld [vmem:[%s6 + $0x100] sm:$0xff]
  %v371 = vld [vmem:[%s6 + $0x108] sm:$0xff]
  %v372 = vld [vmem:[%s6 + $0x110] sm:$0xff]
  %v373 = vld [vmem:[%s6 + $0x118] sm:$0xff]
  %v374 = vld [vmem:[%s6 + $0x120] sm:$0xff]
  %v375 = vld [vmem:[%s6 + $0x128] sm:$0xff]
  %v376 = vld [vmem:[%s6 + $0x130] sm:$0xff]
  %v377 = vld [vmem:[%s6 + $0x138] sm:$0xff]
  %v378 = vld [vmem:[%s6 + $0x140] sm:$0xff]
  %v379 = vld [vmem:[%s6 + $0x148] sm:$0xff]
  %v380 = vld [vmem:[%s6 + $0x150] sm:$0xff]
  %v381 = vld [vmem:[%s6 + $0x158] sm:$0xff]
  %v382 = vld [vmem:[%s6 + $0x160] sm:$0xff]
  %v383 = vld [vmem:[%s6 + $0x168] sm:$0xff]
  %v384 = vld [vmem:[%s6 + $0x170] sm:$0xff]
  %v385 = vld [vmem:[%s6 + $0x178] sm:$0xff]
  %v386 = vld [vmem:[%s6 + $0x180] sm:$0xff]
  %v387 = vld [vmem:[%s6 + $0x188] sm:$0xff]
  %v388 = vld [vmem:[%s6 + $0x190] sm:$0xff]
  %v389 = vld [vmem:[%s6 + $0x198] sm:$0xff]
  %v390 = vld [vmem:[%s6 + $0x1a0] sm:$0xff]
  %v391 = vld [vmem:[%s6 + $0x1a8] sm:$0xff]
  %v392 = vld [vmem:[%s6 + $0x1b0] sm:$0xff]
  %v393 = vld [vmem:[%s6 + $0x1b8] sm:$0xff]
  %v394 = vld [vmem:[%s6 + $0x1c0] sm:$0xff]
  %v395 = vld [vmem:[%s6 + $0x1c8] sm:$0xff]
  %v396 = vld [vmem:[%s6 + $0x1d0] sm:$0xff]
  %v397 = vld [vmem:[%s6 + $0x1d8] sm:$0xff]
  %v398 = vld [vmem:[%s6 + $0x1e0] sm:$0xff]
  %v399 = vld [vmem:[%s6 + $0x1e8] sm:$0xff]
  %v400 = vld [vmem:[%s6 + $0x1f0] sm:$0xff]
  %v401 = vld [vmem:[%s6 + $0x1f8] sm:$0xff]
  %v402 = vld [vmem:[%s7] sm:$0xff]
  %v404 = vlaneseq
  %v405 = vshrl.u32 %v404, 7
  %v406 = vsub.s32 0, %v405
  %v407 = vrot.slane %v402, %v406
  %v408 = vlaneseq
  %v409 = vshrl.u32 %v408, 7
  %v410 = vsub.s32 1, %v409
  %v411 = vrot.slane %v402, %v410
  %v412 = vlaneseq
  %v413 = vshrl.u32 %v412, 7
  %v414 = vsub.s32 2, %v413
  %v415 = vrot.slane %v402, %v414
  %v416 = vlaneseq
  %v417 = vshrl.u32 %v416, 7
  %v418 = vsub.s32 3, %v417
  %v419 = vrot.slane %v402, %v418
  %v420 = vlaneseq
  %v421 = vshrl.u32 %v420, 7
  %v422 = vsub.s32 4, %v421
  %v423 = vrot.slane %v402, %v422
  %v424 = vlaneseq
  %v425 = vshrl.u32 %v424, 7
  %v426 = vsub.s32 5, %v425
  %v427 = vrot.slane %v402, %v426
  %v428 = vlaneseq
  %v429 = vshrl.u32 %v428, 7
  %v430 = vsub.s32 6, %v429
  %v431 = vrot.slane %v402, %v430
  %v432 = vlaneseq
  %v433 = vshrl.u32 %v432, 7
  %v434 = vsub.s32 7, %v433
  %v435 = vrot.slane %v402, %v434
  %v508 = vunpack.c.l.b16 %v338
  %v509 = vunpack.c.h.b16 %v338
  %v510 = vunpack.c.l.b16 %v339
  %v511 = vunpack.c.h.b16 %v339
  %v512 = vunpack.c.l.b16 %v340
  %v513 = vunpack.c.h.b16 %v340
  %v514 = vunpack.c.l.b16 %v341
  %v515 = vunpack.c.h.b16 %v341
  %v516 = vunpack.c.l.b16 %v342
  %v517 = vunpack.c.h.b16 %v342
  %v518 = vunpack.c.l.b16 %v343
  %v519 = vunpack.c.h.b16 %v343
  %v520 = vunpack.c.l.b16 %v344
  %v521 = vunpack.c.h.b16 %v344
  %v522 = vunpack.c.l.b16 %v345
  %v523 = vunpack.c.h.b16 %v345
  %v524 = vunpack.c.l.b16 %v346
  %v525 = vunpack.c.h.b16 %v346
  %v526 = vunpack.c.l.b16 %v347
  %v527 = vunpack.c.h.b16 %v347
  %v528 = vunpack.c.l.b16 %v348
  %v529 = vunpack.c.h.b16 %v348
  %v530 = vunpack.c.l.b16 %v349
  %v531 = vunpack.c.h.b16 %v349
  %v532 = vunpack.c.l.b16 %v350
  %v533 = vunpack.c.h.b16 %v350
  %v534 = vunpack.c.l.b16 %v351
  %v535 = vunpack.c.h.b16 %v351
  %v536 = vunpack.c.l.b16 %v352
  %v537 = vunpack.c.h.b16 %v352
  %v538 = vunpack.c.l.b16 %v353
  %v539 = vunpack.c.h.b16 %v353
  %v540 = vunpack.c.l.b16 %v354
  %v541 = vunpack.c.h.b16 %v354
  %v542 = vunpack.c.l.b16 %v355
  %v543 = vunpack.c.h.b16 %v355
  %v544 = vunpack.c.l.b16 %v356
  %v545 = vunpack.c.h.b16 %v356
  %v546 = vunpack.c.l.b16 %v357
  %v547 = vunpack.c.h.b16 %v357
  %v548 = vunpack.c.l.b16 %v358
  %v549 = vunpack.c.h.b16 %v358
  %v550 = vunpack.c.l.b16 %v359
  %v551 = vunpack.c.h.b16 %v359
  %v552 = vunpack.c.l.b16 %v360
  %v553 = vunpack.c.h.b16 %v360
  %v554 = vunpack.c.l.b16 %v361
  %v555 = vunpack.c.h.b16 %v361
  %v556 = vunpack.c.l.b16 %v362
  %v557 = vunpack.c.h.b16 %v362
  %v558 = vunpack.c.l.b16 %v363
  %v559 = vunpack.c.h.b16 %v363
  %v560 = vunpack.c.l.b16 %v364
  %v561 = vunpack.c.h.b16 %v364
  %v562 = vunpack.c.l.b16 %v365
  %v563 = vunpack.c.h.b16 %v365
  %v564 = vunpack.c.l.b16 %v366
  %v565 = vunpack.c.h.b16 %v366
  %v566 = vunpack.c.l.b16 %v367
  %v567 = vunpack.c.h.b16 %v367
  %v568 = vunpack.c.l.b16 %v368
  %v569 = vunpack.c.h.b16 %v368
  %v570 = vunpack.c.l.b16 %v369
  %v571 = vunpack.c.h.b16 %v369
  %v572 = vunpack.c.l.b16 %v370
  %v573 = vunpack.c.h.b16 %v370
  %v574 = vunpack.c.l.b16 %v371
  %v575 = vunpack.c.h.b16 %v371
  %v576 = vunpack.c.l.b16 %v372
  %v577 = vunpack.c.h.b16 %v372
  %v578 = vunpack.c.l.b16 %v373
  %v579 = vunpack.c.h.b16 %v373
  %v580 = vunpack.c.l.b16 %v374
  %v581 = vunpack.c.h.b16 %v374
  %v582 = vunpack.c.l.b16 %v375
  %v583 = vunpack.c.h.b16 %v375
  %v584 = vunpack.c.l.b16 %v376
  %v585 = vunpack.c.h.b16 %v376
  %v586 = vunpack.c.l.b16 %v377
  %v587 = vunpack.c.h.b16 %v377
  %v588 = vunpack.c.l.b16 %v378
  %v589 = vunpack.c.h.b16 %v378
  %v590 = vunpack.c.l.b16 %v379
  %v591 = vunpack.c.h.b16 %v379
  %v592 = vunpack.c.l.b16 %v380
  %v593 = vunpack.c.h.b16 %v380
  %v594 = vunpack.c.l.b16 %v381
  %v595 = vunpack.c.h.b16 %v381
  %v596 = vunpack.c.l.b16 %v382
  %v597 = vunpack.c.h.b16 %v382
  %v598 = vunpack.c.l.b16 %v383
  %v599 = vunpack.c.h.b16 %v383
  %v600 = vunpack.c.l.b16 %v384
  %v601 = vunpack.c.h.b16 %v384
  %v602 = vunpack.c.l.b16 %v385
  %v603 = vunpack.c.h.b16 %v385
  %v604 = vunpack.c.l.b16 %v386
  %v605 = vunpack.c.h.b16 %v386
  %v606 = vunpack.c.l.b16 %v387
  %v607 = vunpack.c.h.b16 %v387
  %v608 = vunpack.c.l.b16 %v388
  %v609 = vunpack.c.h.b16 %v388
  %v610 = vunpack.c.l.b16 %v389
  %v611 = vunpack.c.h.b16 %v389
  %v612 = vunpack.c.l.b16 %v390
  %v613 = vunpack.c.h.b16 %v390
  %v614 = vunpack.c.l.b16 %v391
  %v615 = vunpack.c.h.b16 %v391
  %v616 = vunpack.c.l.b16 %v392
  %v617 = vunpack.c.h.b16 %v392
  %v618 = vunpack.c.l.b16 %v393
  %v619 = vunpack.c.h.b16 %v393
  %v620 = vunpack.c.l.b16 %v394
  %v621 = vunpack.c.h.b16 %v394
  %v622 = vunpack.c.l.b16 %v395
  %v623 = vunpack.c.h.b16 %v395
  %v624 = vunpack.c.l.b16 %v396
  %v625 = vunpack.c.h.b16 %v396
  %v626 = vunpack.c.l.b16 %v397
  %v627 = vunpack.c.h.b16 %v397
  %v628 = vunpack.c.l.b16 %v398
  %v629 = vunpack.c.h.b16 %v398
  %v630 = vunpack.c.l.b16 %v399
  %v631 = vunpack.c.h.b16 %v399
  %v632 = vunpack.c.l.b16 %v400
  %v633 = vunpack.c.h.b16 %v400
  %v634 = vunpack.c.l.b16 %v401
  %v635 = vunpack.c.h.b16 %v401
  %v636 = vpack.c.b16 %v516, %v508
  %v637 = vpack.c.b16 %v517, %v509
  %v638 = vpack.c.b16 %v518, %v510
  %v639 = vpack.c.b16 %v519, %v511
  %v640 = vpack.c.b16 %v520, %v512
  %v641 = vpack.c.b16 %v521, %v513
  %v642 = vpack.c.b16 %v522, %v514
  %v643 = vpack.c.b16 %v523, %v515
  %v644 = vpack.c.b16 %v532, %v524
  %v645 = vpack.c.b16 %v533, %v525
  %v646 = vpack.c.b16 %v534, %v526
  %v647 = vpack.c.b16 %v535, %v527
  %v648 = vpack.c.b16 %v536, %v528
  %v649 = vpack.c.b16 %v537, %v529
  %v650 = vpack.c.b16 %v538, %v530
  %v651 = vpack.c.b16 %v539, %v531
  %v652 = vpack.c.b16 %v548, %v540
  %v653 = vpack.c.b16 %v549, %v541
  %v654 = vpack.c.b16 %v550, %v542
  %v655 = vpack.c.b16 %v551, %v543
  %v656 = vpack.c.b16 %v552, %v544
  %v657 = vpack.c.b16 %v553, %v545
  %v658 = vpack.c.b16 %v554, %v546
  %v659 = vpack.c.b16 %v555, %v547
  %v660 = vpack.c.b16 %v564, %v556
  %v661 = vpack.c.b16 %v565, %v557
  %v662 = vpack.c.b16 %v566, %v558
  %v663 = vpack.c.b16 %v567, %v559
  %v664 = vpack.c.b16 %v568, %v560
  %v665 = vpack.c.b16 %v569, %v561
  %v666 = vpack.c.b16 %v570, %v562
  %v667 = vpack.c.b16 %v571, %v563
  %v668 = vpack.c.b16 %v580, %v572
  %v669 = vpack.c.b16 %v581, %v573
  %v670 = vpack.c.b16 %v582, %v574
  %v671 = vpack.c.b16 %v583, %v575
  %v672 = vpack.c.b16 %v584, %v576
  %v673 = vpack.c.b16 %v585, %v577
  %v674 = vpack.c.b16 %v586, %v578
  %v675 = vpack.c.b16 %v587, %v579
  %v676 = vpack.c.b16 %v596, %v588
  %v677 = vpack.c.b16 %v597, %v589
  %v678 = vpack.c.b16 %v598, %v590
  %v679 = vpack.c.b16 %v599, %v591
  %v680 = vpack.c.b16 %v600, %v592
  %v681 = vpack.c.b16 %v601, %v593
  %v682 = vpack.c.b16 %v602, %v594
  %v683 = vpack.c.b16 %v603, %v595
  %v684 = vpack.c.b16 %v612, %v604
  %v685 = vpack.c.b16 %v613, %v605
  %v686 = vpack.c.b16 %v614, %v606
  %v687 = vpack.c.b16 %v615, %v607
  %v688 = vpack.c.b16 %v616, %v608
  %v689 = vpack.c.b16 %v617, %v609
  %v690 = vpack.c.b16 %v618, %v610
  %v691 = vpack.c.b16 %v619, %v611
  %v692 = vpack.c.b16 %v628, %v620
  %v693 = vpack.c.b16 %v629, %v621
  %v694 = vpack.c.b16 %v630, %v622
  %v695 = vpack.c.b16 %v631, %v623
  %v696 = vpack.c.b16 %v632, %v624
  %v697 = vpack.c.b16 %v633, %v625
  %v698 = vpack.c.b16 %v634, %v626
  %v699 = vpack.c.b16 %v635, %v627
  %764 = vmatprep.subr.bf16.mxu0 %v693
  %765 = vmatpush1.bf16.msra.mxu0 %v692
  %766 = vmatprep.subr.bf16.mxu0 %v685
  %767 = vmatpush1.bf16.msra.mxu0 %v684
  %768 = vmatprep.subr.bf16.mxu0 %v677
  %769 = vmatpush1.bf16.msra.mxu0 %v676
  %770 = vmatprep.subr.bf16.mxu0 %v669
  %771 = vmatpush1.bf16.msra.mxu0 %v668
  %772 = vmatprep.subr.bf16.mxu0 %v661
  %773 = vmatpush1.bf16.msra.mxu0 %v660
  %774 = vmatprep.subr.bf16.mxu0 %v653
  %775 = vmatpush1.bf16.msra.mxu0 %v652
  %776 = vmatprep.subr.bf16.mxu0 %v645
  %777 = vmatpush1.bf16.msra.mxu0 %v644
  %778 = vmatprep.subr.bf16.mxu0 %v637
  %779 = vmatpush1.bf16.msra.mxu0 %v636
  %780 = vmatprep.subr.bf16.mxu0 0
  %781 = vmatpush2.bf16.msra.mxu0 0
  %782 = vmatprep.subr.bf16.mxu0 0
  %783 = vmatpush2.bf16.msra.mxu0 0
  %784 = vmatprep.subr.bf16.mxu0 0
  %785 = vmatpush2.bf16.msra.mxu0 0
  %786 = vmatprep.subr.bf16.mxu0 0
  %787 = vmatpush2.bf16.msra.mxu0 0
  %788 = vmatprep.subr.bf16.mxu0 0
  %789 = vmatpush2.bf16.msra.mxu0 0
  %790 = vmatprep.subr.bf16.mxu0 0
  %791 = vmatpush2.bf16.msra.mxu0 0
  %792 = vmatprep.subr.bf16.mxu0 0
  %793 = vmatpush2.bf16.msra.mxu0 0
  %794 = vmatprep.subr.bf16.mxu0 0
  %795 = vmatpush2.bf16.msra.mxu0 0
  %796 = vmatprep.mubr.bf16.mxu0 0
  %797 = vmatmul.mubr.bf16.gmra.mxu0 %v334
  %v798 = vpop.f32.mrf.mxu0
  %v799 = vadd.f32 %v407, %v798
  %v800 = vpop.f32.mrf.mxu0
  %v801 = vadd.f32 %v411, %v800
  %v802 = vpop.f32.mrf.mxu0
  %v803 = vadd.f32 %v407, %v802
  %v804 = vpop.f32.mrf.mxu0
  %v805 = vadd.f32 %v411, %v804
  %806 = vmatprep.mubr.bf16.mxu0 0
  %807 = vmatmul.mubr.bf16.gmra.mxu0 %v335
  %v808 = vpop.f32.mrf.mxu0
  %v809 = vadd.f32 %v407, %v808
  %v810 = vpop.f32.mrf.mxu0
  %v811 = vadd.f32 %v411, %v810
  %v812 = vpop.f32.mrf.mxu0
  %v813 = vadd.f32 %v407, %v812
  %v814 = vpop.f32.mrf.mxu0
  %v815 = vadd.f32 %v411, %v814
  %816 = vmatprep.mubr.bf16.mxu0 0
  %817 = vmatmul.mubr.bf16.gmra.mxu0 %v336
  %v818 = vpop.f32.mrf.mxu0
  %v819 = vadd.f32 %v407, %v818
  %v820 = vpop.f32.mrf.mxu0
  %v821 = vadd.f32 %v411, %v820
  %v822 = vpop.f32.mrf.mxu0
  %v823 = vadd.f32 %v407, %v822
  %v824 = vpop.f32.mrf.mxu0
  %v825 = vadd.f32 %v411, %v824
  %826 = vmatprep.mubr.bf16.mxu0 0
  %827 = vmatmul.mubr.bf16.gmra.mxu0 %v337
  %v828 = vpop.f32.mrf.mxu0
  %v829 = vadd.f32 %v407, %v828
  %v830 = vpop.f32.mrf.mxu0
  %v831 = vadd.f32 %v411, %v830
  %v832 = vpop.f32.mrf.mxu0
  %v833 = vadd.f32 %v407, %v832
  %v834 = vpop.f32.mrf.mxu0
  %v835 = vadd.f32 %v411, %v834
  %836 = vdwg.mxu0
  %837 = vmatprep.subr.bf16.mxu0 %v695
  %838 = vmatpush1.bf16.msra.mxu0 %v694
  %839 = vmatprep.subr.bf16.mxu0 %v687
  %840 = vmatpush1.bf16.msra.mxu0 %v686
  %841 = vmatprep.subr.bf16.mxu0 %v679
  %842 = vmatpush1.bf16.msra.mxu0 %v678
  %843 = vmatprep.subr.bf16.mxu0 %v671
  %844 = vmatpush1.bf16.msra.mxu0 %v670
  %845 = vmatprep.subr.bf16.mxu0 %v663
  %846 = vmatpush1.bf16.msra.mxu0 %v662
  %847 = vmatprep.subr.bf16.mxu0 %v655
  %848 = vmatpush1.bf16.msra.mxu0 %v654
  %849 = vmatprep.subr.bf16.mxu0 %v647
  %850 = vmatpush1.bf16.msra.mxu0 %v646
  %851 = vmatprep.subr.bf16.mxu0 %v639
  %852 = vmatpush1.bf16.msra.mxu0 %v638
  %853 = vmatprep.subr.bf16.mxu0 0
  %854 = vmatpush2.bf16.msra.mxu0 0
  %855 = vmatprep.subr.bf16.mxu0 0
  %856 = vmatpush2.bf16.msra.mxu0 0
  %857 = vmatprep.subr.bf16.mxu0 0
  %858 = vmatpush2.bf16.msra.mxu0 0
  %859 = vmatprep.subr.bf16.mxu0 0
  %860 = vmatpush2.bf16.msra.mxu0 0
  %861 = vmatprep.subr.bf16.mxu0 0
  %862 = vmatpush2.bf16.msra.mxu0 0
  %863 = vmatprep.subr.bf16.mxu0 0
  %864 = vmatpush2.bf16.msra.mxu0 0
  %865 = vmatprep.subr.bf16.mxu0 0
  %866 = vmatpush2.bf16.msra.mxu0 0
  %867 = vmatprep.subr.bf16.mxu0 0
  %868 = vmatpush2.bf16.msra.mxu0 0
  %869 = vmatprep.mubr.bf16.mxu0 0
  %870 = vmatmul.mubr.bf16.gmra.mxu0 %v334
  %v871 = vpop.f32.mrf.mxu0
  %v872 = vadd.f32 %v415, %v871
  %v873 = vpop.f32.mrf.mxu0
  %v874 = vadd.f32 %v419, %v873
  %v875 = vpop.f32.mrf.mxu0
  %v876 = vadd.f32 %v415, %v875
  %v877 = vpop.f32.mrf.mxu0
  %v878 = vadd.f32 %v419, %v877
  %879 = vmatprep.mubr.bf16.mxu0 0
  %880 = vmatmul.mubr.bf16.gmra.mxu0 %v335
  %v881 = vpop.f32.mrf.mxu0
  %v882 = vadd.f32 %v415, %v881
  %v883 = vpop.f32.mrf.mxu0
  %v884 = vadd.f32 %v419, %v883
  %v885 = vpop.f32.mrf.mxu0
  %v886 = vadd.f32 %v415, %v885
  %v887 = vpop.f32.mrf.mxu0
  %v888 = vadd.f32 %v419, %v887
  %889 = vmatprep.mubr.bf16.mxu0 0
  %890 = vmatmul.mubr.bf16.gmra.mxu0 %v336
  %v891 = vpop.f32.mrf.mxu0
  %v892 = vadd.f32 %v415, %v891
  %v893 = vpop.f32.mrf.mxu0
  %v894 = vadd.f32 %v419, %v893
  %v895 = vpop.f32.mrf.mxu0
  %v896 = vadd.f32 %v415, %v895
  %v897 = vpop.f32.mrf.mxu0
  %v898 = vadd.f32 %v419, %v897
  %899 = vmatprep.mubr.bf16.mxu0 0
  %900 = vmatmul.mubr.bf16.gmra.mxu0 %v337
  %v901 = vpop.f32.mrf.mxu0
  %v902 = vadd.f32 %v415, %v901
  %v903 = vpop.f32.mrf.mxu0
  %v904 = vadd.f32 %v419, %v903
  %v905 = vpop.f32.mrf.mxu0
  %v906 = vadd.f32 %v415, %v905
  %v907 = vpop.f32.mrf.mxu0
  %v908 = vadd.f32 %v419, %v907
  %909 = vdwg.mxu0
  %910 = vmatprep.subr.bf16.mxu0 %v697
  %911 = vmatpush1.bf16.msra.mxu0 %v696
  %912 = vmatprep.subr.bf16.mxu0 %v689
  %913 = vmatpush1.bf16.msra.mxu0 %v688
  %914 = vmatprep.subr.bf16.mxu0 %v681
  %915 = vmatpush1.bf16.msra.mxu0 %v680
  %916 = vmatprep.subr.bf16.mxu0 %v673
  %917 = vmatpush1.bf16.msra.mxu0 %v672
  %918 = vmatprep.subr.bf16.mxu0 %v665
  %919 = vmatpush1.bf16.msra.mxu0 %v664
  %920 = vmatprep.subr.bf16.mxu0 %v657
  %921 = vmatpush1.bf16.msra.mxu0 %v656
  %922 = vmatprep.subr.bf16.mxu0 %v649
  %923 = vmatpush1.bf16.msra.mxu0 %v648
  %924 = vmatprep.subr.bf16.mxu0 %v641
  %925 = vmatpush1.bf16.msra.mxu0 %v640
  %926 = vmatprep.subr.bf16.mxu0 0
  %927 = vmatpush2.bf16.msra.mxu0 0
  %928 = vmatprep.subr.bf16.mxu0 0
  %929 = vmatpush2.bf16.msra.mxu0 0
  %930 = vmatprep.subr.bf16.mxu0 0
  %931 = vmatpush2.bf16.msra.mxu0 0
  %932 = vmatprep.subr.bf16.mxu0 0
  %933 = vmatpush2.bf16.msra.mxu0 0
  %934 = vmatprep.subr.bf16.mxu0 0
  %935 = vmatpush2.bf16.msra.mxu0 0
  %936 = vmatprep.subr.bf16.mxu0 0
  %937 = vmatpush2.bf16.msra.mxu0 0
  %938 = vmatprep.subr.bf16.mxu0 0
  %939 = vmatpush2.bf16.msra.mxu0 0
  %940 = vmatprep.subr.bf16.mxu0 0
  %941 = vmatpush2.bf16.msra.mxu0 0
  %942 = vmatprep.mubr.bf16.mxu0 0
  %943 = vmatmul.mubr.bf16.gmra.mxu0 %v334
  %v944 = vpop.f32.mrf.mxu0
  %v945 = vadd.f32 %v423, %v944
  %v946 = vpop.f32.mrf.mxu0
  %v947 = vadd.f32 %v427, %v946
  %v948 = vpop.f32.mrf.mxu0
  %v949 = vadd.f32 %v423, %v948
  %v950 = vpop.f32.mrf.mxu0
  %v951 = vadd.f32 %v427, %v950
  %952 = vmatprep.mubr.bf16.mxu0 0
  %953 = vmatmul.mubr.bf16.gmra.mxu0 %v335
  %v954 = vpop.f32.mrf.mxu0
  %v955 = vadd.f32 %v423, %v954
  %v956 = vpop.f32.mrf.mxu0
  %v957 = vadd.f32 %v427, %v956
  %v958 = vpop.f32.mrf.mxu0
  %v959 = vadd.f32 %v423, %v958
  %v960 = vpop.f32.mrf.mxu0
  %v961 = vadd.f32 %v427, %v960
  %962 = vmatprep.mubr.bf16.mxu0 0
  %963 = vmatmul.mubr.bf16.gmra.mxu0 %v336
  %v964 = vpop.f32.mrf.mxu0
  %v965 = vadd.f32 %v423, %v964
  %v966 = vpop.f32.mrf.mxu0
  %v967 = vadd.f32 %v427, %v966
  %v968 = vpop.f32.mrf.mxu0
  %v969 = vadd.f32 %v423, %v968
  %v970 = vpop.f32.mrf.mxu0
  %v971 = vadd.f32 %v427, %v970
  %972 = vmatprep.mubr.bf16.mxu0 0
  %973 = vmatmul.mubr.bf16.gmra.mxu0 %v337
  %v974 = vpop.f32.mrf.mxu0
  %v975 = vadd.f32 %v423, %v974
  %v976 = vpop.f32.mrf.mxu0
  %v977 = vadd.f32 %v427, %v976
  %v978 = vpop.f32.mrf.mxu0
  %v979 = vadd.f32 %v423, %v978
  %v980 = vpop.f32.mrf.mxu0
  %v981 = vadd.f32 %v427, %v980
  %982 = vdwg.mxu0
  %983 = vmatprep.subr.bf16.mxu0 %v699
  %984 = vmatpush1.bf16.msra.mxu0 %v698
  %985 = vmatprep.subr.bf16.mxu0 %v691
  %986 = vmatpush1.bf16.msra.mxu0 %v690
  %987 = vmatprep.subr.bf16.mxu0 %v683
  %988 = vmatpush1.bf16.msra.mxu0 %v682
  %989 = vmatprep.subr.bf16.mxu0 %v675
  %990 = vmatpush1.bf16.msra.mxu0 %v674
  %991 = vmatprep.subr.bf16.mxu0 %v667
  %992 = vmatpush1.bf16.msra.mxu0 %v666
  %993 = vmatprep.subr.bf16.mxu0 %v659
  %994 = vmatpush1.bf16.msra.mxu0 %v658
  %995 = vmatprep.subr.bf16.mxu0 %v651
  %996 = vmatpush1.bf16.msra.mxu0 %v650
  %997 = vmatprep.subr.bf16.mxu0 %v643
  %998 = vmatpush1.bf16.msra.mxu0 %v642
  %999 = vmatprep.subr.bf16.mxu0 0
  %1000 = vmatpush2.bf16.msra.mxu0 0
  %1001 = vmatprep.subr.bf16.mxu0 0
  %1002 = vmatpush2.bf16.msra.mxu0 0
  %1003 = vmatprep.subr.bf16.mxu0 0
  %1004 = vmatpush2.bf16.msra.mxu0 0
  %1005 = vmatprep.subr.bf16.mxu0 0
  %1006 = vmatpush2.bf16.msra.mxu0 0
  %1007 = vmatprep.subr.bf16.mxu0 0
  %1008 = vmatpush2.bf16.msra.mxu0 0
  %1009 = vmatprep.subr.bf16.mxu0 0
  %1010 = vmatpush2.bf16.msra.mxu0 0
  %1011 = vmatprep.subr.bf16.mxu0 0
  %1012 = vmatpush2.bf16.msra.mxu0 0
  %1013 = vmatprep.subr.bf16.mxu0 0
  %1014 = vmatpush2.bf16.msra.mxu0 0
  %1015 = vmatprep.mubr.bf16.mxu0 0
  %1016 = vmatmul.mubr.bf16.gmra.mxu0 %v334
  %v1017 = vpop.f32.mrf.mxu0
  %v1018 = vadd.f32 %v431, %v1017
  %v1019 = vpop.f32.mrf.mxu0
  %v1020 = vadd.f32 %v435, %v1019
  %v1021 = vpop.f32.mrf.mxu0
  %v1022 = vadd.f32 %v431, %v1021
  %v1023 = vpop.f32.mrf.mxu0
  %v1024 = vadd.f32 %v435, %v1023
  %1025 = vmatprep.mubr.bf16.mxu0 0
  %1026 = vmatmul.mubr.bf16.gmra.mxu0 %v335
  %v1027 = vpop.f32.mrf.mxu0
  %v1028 = vadd.f32 %v431, %v1027
  %v1029 = vpop.f32.mrf.mxu0
  %v1030 = vadd.f32 %v435, %v1029
  %v1031 = vpop.f32.mrf.mxu0
  %v1032 = vadd.f32 %v431, %v1031
  %v1033 = vpop.f32.mrf.mxu0
  %v1034 = vadd.f32 %v435, %v1033
  %1035 = vmatprep.mubr.bf16.mxu0 0
  %1036 = vmatmul.mubr.bf16.gmra.mxu0 %v336
  %v1037 = vpop.f32.mrf.mxu0
  %v1038 = vadd.f32 %v431, %v1037
  %v1039 = vpop.f32.mrf.mxu0
  %v1040 = vadd.f32 %v435, %v1039
  %v1041 = vpop.f32.mrf.mxu0
  %v1042 = vadd.f32 %v431, %v1041
  %v1043 = vpop.f32.mrf.mxu0
  %v1044 = vadd.f32 %v435, %v1043
  %1045 = vmatprep.mubr.bf16.mxu0 0
  %1046 = vmatmul.mubr.bf16.gmra.mxu0 %v337
  %v1047 = vpop.f32.mrf.mxu0
  %v1048 = vadd.f32 %v431, %v1047
  %v1049 = vpop.f32.mrf.mxu0
  %v1050 = vadd.f32 %v435, %v1049
  %v1051 = vpop.f32.mrf.mxu0
  %v1052 = vadd.f32 %v431, %v1051
  %v1053 = vpop.f32.mrf.mxu0
  %v1054 = vadd.f32 %v435, %v1053
  %1055 = vdwg.mxu0
  %1056 = vst [vmem:[%s8] sm:$0xff] %v799
  %1057 = vst [vmem:[%s8 + $0x8] sm:$0xff] %v801
  %1058 = vst [vmem:[%s8 + $0x10] sm:$0xff] %v872
  %1059 = vst [vmem:[%s8 + $0x18] sm:$0xff] %v874
  %1060 = vst [vmem:[%s8 + $0x20] sm:$0xff] %v945
  %1061 = vst [vmem:[%s8 + $0x28] sm:$0xff] %v947
  %1062 = vst [vmem:[%s8 + $0x30] sm:$0xff] %v1018
  %1063 = vst [vmem:[%s8 + $0x38] sm:$0xff] %v1020
  %1064 = vst [vmem:[%s8 + $0x40] sm:$0xff] %v803
  %1065 = vst [vmem:[%s8 + $0x48] sm:$0xff] %v805
  %1066 = vst [vmem:[%s8 + $0x50] sm:$0xff] %v876
  %1067 = vst [vmem:[%s8 + $0x58] sm:$0xff] %v878
  %1068 = vst [vmem:[%s8 + $0x60] sm:$0xff] %v949
  %1069 = vst [vmem:[%s8 + $0x68] sm:$0xff] %v951
  %1070 = vst [vmem:[%s8 + $0x70] sm:$0xff] %v1022
  %1071 = vst [vmem:[%s8 + $0x78] sm:$0xff] %v1024
  %1072 = vst [vmem:[%s8 + $0x80] sm:$0xff] %v809
  %1073 = vst [vmem:[%s8 + $0x88] sm:$0xff] %v811
  %1074 = vst [vmem:[%s8 + $0x90] sm:$0xff] %v882
  %1075 = vst [vmem:[%s8 + $0x98] sm:$0xff] %v884
  %1076 = vst [vmem:[%s8 + $0xa0] sm:$0xff] %v955
  %1077 = vst [vmem:[%s8 + $0xa8] sm:$0xff] %v957
  %1078 = vst [vmem:[%s8 + $0xb0] sm:$0xff] %v1028
  %1079 = vst [vmem:[%s8 + $0xb8] sm:$0xff] %v1030
  %1080 = vst [vmem:[%s8 + $0xc0] sm:$0xff] %v813
  %1081 = vst [vmem:[%s8 + $0xc8] sm:$0xff] %v815
  %1082 = vst [vmem:[%s8 + $0xd0] sm:$0xff] %v886
  %1083 = vst [vmem:[%s8 + $0xd8] sm:$0xff] %v888
  %1084 = vst [vmem:[%s8 + $0xe0] sm:$0xff] %v959
  %1085 = vst [vmem:[%s8 + $0xe8] sm:$0xff] %v961
  %1086 = vst [vmem:[%s8 + $0xf0] sm:$0xff] %v1032
  %1087 = vst [vmem:[%s8 + $0xf8] sm:$0xff] %v1034
  %1088 = vst [vmem:[%s8 + $0x100] sm:$0xff] %v819
  %1089 = vst [vmem:[%s8 + $0x108] sm:$0xff] %v821
  %1090 = vst [vmem:[%s8 + $0x110] sm:$0xff] %v892
  %1091 = vst [vmem:[%s8 + $0x118] sm:$0xff] %v894
  %1092 = vst [vmem:[%s8 + $0x120] sm:$0xff] %v965
  %1093 = vst [vmem:[%s8 + $0x128] sm:$0xff] %v967
  %1094 = vst [vmem:[%s8 + $0x130] sm:$0xff] %v1038
  %1095 = vst [vmem:[%s8 + $0x138] sm:$0xff] %v1040
  %1096 = vst [vmem:[%s8 + $0x140] sm:$0xff] %v823
  %1097 = vst [vmem:[%s8 + $0x148] sm:$0xff] %v825
  %1098 = vst [vmem:[%s8 + $0x150] sm:$0xff] %v896
  %1099 = vst [vmem:[%s8 + $0x158] sm:$0xff] %v898
  %1100 = vst [vmem:[%s8 + $0x160] sm:$0xff] %v969
  %1101 = vst [vmem:[%s8 + $0x168] sm:$0xff] %v971
  %1102 = vst [vmem:[%s8 + $0x170] sm:$0xff] %v1042
  %1103 = vst [vmem:[%s8 + $0x178] sm:$0xff] %v1044
  %1104 = vst [vmem:[%s8 + $0x180] sm:$0xff] %v829
  %1105 = vst [vmem:[%s8 + $0x188] sm:$0xff] %v831
  %1106 = vst [vmem:[%s8 + $0x190] sm:$0xff] %v902
  %1107 = vst [vmem:[%s8 + $0x198] sm:$0xff] %v904
  %1108 = vst [vmem:[%s8 + $0x1a0] sm:$0xff] %v975
  %1109 = vst [vmem:[%s8 + $0x1a8] sm:$0xff] %v977
  %1110 = vst [vmem:[%s8 + $0x1b0] sm:$0xff] %v1048
  %1111 = vst [vmem:[%s8 + $0x1b8] sm:$0xff] %v1050
  %1112 = vst [vmem:[%s8 + $0x1c0] sm:$0xff] %v833
  %1113 = vst [vmem:[%s8 + $0x1c8] sm:$0xff] %v835
  %1114 = vst [vmem:[%s8 + $0x1d0] sm:$0xff] %v906
  %1115 = vst [vmem:[%s8 + $0x1d8] sm:$0xff] %v908
  %1116 = vst [vmem:[%s8 + $0x1e0] sm:$0xff] %v979
  %1117 = vst [vmem:[%s8 + $0x1e8] sm:$0xff] %v981
  %1118 = vst [vmem:[%s8 + $0x1f0] sm:$0xff] %v1052
  %1119 = vst [vmem:[%s8 + $0x1f8] sm:$0xff] %v1054
  // Predicated region
  $region34: #{forward.2} parent=0 // pred_check
    _
  $region35: #{forward.2} parent=0 // pred_check_branch
    %1121 = sbr.rel (0) target = $region37
  $region36: #{forward.2} parent=0 // pred_region
    _
  $region37: #{forward.2} parent=0 // pred_fallthru
    _
  // Predicated region
  $region38: #{forward.2} parent=0 // pred_check
    _
  $region39: #{forward.2} parent=0 // pred_check_branch
    %1123 = sbr.rel (0) target = $region41
  $region40: #{forward.2} parent=0 // pred_region
    _
  $region41: #{forward.2} parent=0 // pred_fallthru
    _
  // Predicated region
  $region42: #{forward.2} parent=0 // pred_check
    _
  $region43: #{forward.2} parent=0 // pred_check_branch
    %1125 = sbr.rel (0) target = $region45
  $region44: #{forward.2} parent=0 // pred_region
    _
  $region45: #{forward.2} parent=0 // pred_fallthru
    _
  // Predicated region
  $region46: #{forward.2} parent=0 // pred_check
    _
  $region47: #{forward.2} parent=0 // pred_check_branch
    %1127 = sbr.rel (0) target = $region49
  $region48: #{forward.2} parent=0 // pred_region
    _
  $region49: #{forward.2} parent=0 // pred_fallthru
    _

// kernel: forward.3
$region0: #{forward.3}
  #allocation0 [shape = 'u32[]', space=smem, size = 0x4, offset = 0x4, fixed_abs, tag = 'smem constant byte address 0x4 - core index']
  #allocation1 [shape = 'u32[144,128]{1,0:T(1,128)}', space=vmem, size = 0x12000, scoped, tag = 'internal scratch']
  %s0 = inlined_call_operand.vmem [shape: f32[25,2,1024], index: 0, kind: input, shape index: {}]
  %s1 = inlined_call_operand.vmem [shape: f32[2,128], index: 1, kind: input, shape index: {}]
  %s2 = inlined_call_operand.vmem [shape: bf16[256,1024], index: 2, kind: input, shape index: {}]
  %s3 = inlined_call_operand.vmem [shape: bf16[128,1024], index: 3, kind: input, shape index: {}]
  %s4 = inlined_call_operand.vmem [shape: f32[1,1024], index: 4, kind: input, shape index: {}]
  %s5 = inlined_call_operand.vmem [shape: f32[1,256], index: 5, kind: input, shape index: {}]
  %s6 = inlined_call_operand.vmem [shape: f32[1,256], index: 6, kind: input, shape index: {}]
  %s7 = inlined_call_operand.vmem [shape: f32[1,256], index: 7, kind: input, shape index: {}]
  %s8 = inlined_call_operand.vmem [shape: f32[1,256], index: 8, kind: input, shape index: {}]
  %s9 = inlined_call_operand.vmem [shape: bf16[256,128], index: 9, kind: input, shape index: {}]
  %s10 = inlined_call_operand.vmem [shape: bf16[256,128], index: 10, kind: input, shape index: {}]
  %s11 = inlined_call_operand.vmem [shape: f32[1,128], index: 11, kind: input, shape index: {}]
  %s12 = inlined_call_operand.vmem [shape: f32[1,128], index: 12, kind: input, shape index: {}]
  %s13 = inlined_call_operand.vmem [shape: f32[1,128], index: 13, kind: input, shape index: {}]
  %s14 = inlined_call_operand.vmem [shape: bf16[128,128], index: 14, kind: input, shape index: {}]
  %s15 = inlined_call_operand.vmem [shape: f32[1,128], index: 15, kind: input, shape index: {}]
  %s16 = inlined_call_operand.hbm [shape: f32[2,128], index: 16, kind: output, shape index: {}]
  %s17 = sld [smem:[#allocation0]]
  $region81: #{forward.3} parent=0
    _
  %s19 = ssub.s32 1, %s17
  %s20 = scalar_select 0, %s19, %s17
  $region1: #{forward.3} parent=0
    #allocation2 [shape = 'u8[1024]{0}', space=vmem, size = 0x400, scoped, tag = 'output window, operand 0, single buffered']
    #allocation3 [shape = 's32[1]{0}', space=sflag, size = 0x4, scoped, tag = 'scoped memory for forward.3']
    %21 = vsyncpa [#allocation3], 0
    // Predicated region
    $region2: #{forward.3} parent=1 // pred_check
      _
    $region3: #{forward.3} parent=1 // pred_check_branch
      %23 = sbr.rel (0) target = $region5
    $region4: #{forward.3} parent=1 // pred_region
      _
    $region5: #{forward.3} parent=1 // pred_fallthru
      _
    // Predicated region
    $region6: #{forward.3} parent=1 // pred_check
      _
    $region7: #{forward.3} parent=1 // pred_check_branch
      %25 = sbr.rel (0) target = $region9
    $region8: #{forward.3} parent=1 // pred_region
      _
    $region9: #{forward.3} parent=1 // pred_fallthru
      _
    // Predicated region
    $region10: #{forward.3} parent=1 // pred_check
      _
    $region11: #{forward.3} parent=1 // pred_check_branch
      %27 = sbr.rel (0) target = $region13
    $region12: #{forward.3} parent=1 // pred_region
      _
    $region13: #{forward.3} parent=1 // pred_fallthru
      _
    // Predicated region
    $region14: #{forward.3} parent=1 // pred_check
      _
    $region15: #{forward.3} parent=1 // pred_check_branch
      %29 = sbr.rel (0) target = $region17
    $region16: #{forward.3} parent=1 // pred_region
      _
    $region17: #{forward.3} parent=1 // pred_fallthru
      _
    // Predicated region
    $region18: #{forward.3} parent=1 // pred_check
      _
    $region19: #{forward.3} parent=1 // pred_check_branch
      %31 = sbr.rel (0) target = $region21
    $region20: #{forward.3} parent=1 // pred_region
      _
    $region21: #{forward.3} parent=1 // pred_fallthru
      _
    // Predicated region
    $region22: #{forward.3} parent=1 // pred_check
      _
    $region23: #{forward.3} parent=1 // pred_check_branch
      %33 = sbr.rel (0) target = $region25
    $region24: #{forward.3} parent=1 // pred_region
      _
    $region25: #{forward.3} parent=1 // pred_fallthru
      _
    // Predicated region
    $region26: #{forward.3} parent=1 // pred_check
      _
    $region27: #{forward.3} parent=1 // pred_check_branch
      %35 = sbr.rel (0) target = $region29
    $region28: #{forward.3} parent=1 // pred_region
      _
    $region29: #{forward.3} parent=1 // pred_fallthru
      _
    // Predicated region
    $region30: #{forward.3} parent=1 // pred_check
      _
    $region31: #{forward.3} parent=1 // pred_check_branch
      %37 = sbr.rel (0) target = $region33
    $region32: #{forward.3} parent=1 // pred_region
      _
    $region33: #{forward.3} parent=1 // pred_fallthru
      _
    // Predicated region
    $region34: #{forward.3} parent=1 // pred_check
      _
    $region35: #{forward.3} parent=1 // pred_check_branch
      %39 = sbr.rel (0) target = $region37
    $region36: #{forward.3} parent=1 // pred_region
      _
    $region37: #{forward.3} parent=1 // pred_fallthru
      _
    // Predicated region
    $region38: #{forward.3} parent=1 // pred_check
      _
    $region39: #{forward.3} parent=1 // pred_check_branch
      %41 = sbr.rel (0) target = $region41
    $region40: #{forward.3} parent=1 // pred_region
      _
    $region41: #{forward.3} parent=1 // pred_fallthru
      _
    // Predicated region
    $region42: #{forward.3} parent=1 // pred_check
      _
    $region43: #{forward.3} parent=1 // pred_check_branch
      %43 = sbr.rel (0) target = $region45
    $region44: #{forward.3} parent=1 // pred_region
      _
    $region45: #{forward.3} parent=1 // pred_fallthru
      _
    // Predicated region
    $region46: #{forward.3} parent=1 // pred_check
      _
    $region47: #{forward.3} parent=1 // pred_check_branch
      %45 = sbr.rel (0) target = $region49
    $region48: #{forward.3} parent=1 // pred_region
      _
    $region49: #{forward.3} parent=1 // pred_fallthru
      _
    // Predicated region
    $region50: #{forward.3} parent=1 // pred_check
      _
    $region51: #{forward.3} parent=1 // pred_check_branch
      %47 = sbr.rel (0) target = $region53
    $region52: #{forward.3} parent=1 // pred_region
      _
    $region53: #{forward.3} parent=1 // pred_fallthru
      _
    // Predicated region
    $region54: #{forward.3} parent=1 // pred_check
      _
    $region55: #{forward.3} parent=1 // pred_check_branch
      %49 = sbr.rel (0) target = $region57
    $region56: #{forward.3} parent=1 // pred_region
      _
    $region57: #{forward.3} parent=1 // pred_fallthru
      _
    // Predicated region
    $region58: #{forward.3} parent=1 // pred_check
      _
    $region59: #{forward.3} parent=1 // pred_check_branch
      %51 = sbr.rel (0) target = $region61
    $region60: #{forward.3} parent=1 // pred_region
      _
    $region61: #{forward.3} parent=1 // pred_fallthru
      _
    // Predicated region
    $region62: #{forward.3} parent=1 // pred_check
      _
    $region63: #{forward.3} parent=1 // pred_check_branch
      %53 = sbr.rel (0) target = $region65
    $region64: #{forward.3} parent=1 // pred_region
      _
    $region65: #{forward.3} parent=1 // pred_fallthru
      _
    %v55 = vld [vmem:[%s2] sm:$0xff]
    %v56 = vld [vmem:[%s2 + $0x8] sm:$0xff]
    %v57 = vld [vmem:[%s2 + $0x10] sm:$0xff]
    %v58 = vld [vmem:[%s2 + $0x18] sm:$0xff]
    %v59 = vld [vmem:[%s2 + $0x20] sm:$0xff]
    %v60 = vld [vmem:[%s2 + $0x28] sm:$0xff]
    %v61 = vld [vmem:[%s2 + $0x30] sm:$0xff]
    %v62 = vld [vmem:[%s2 + $0x38] sm:$0xff]
    %v63 = vld [vmem:[%s2 + $0x40] sm:$0xff]
    %v64 = vld [vmem:[%s2 + $0x48] sm:$0xff]
    %v65 = vld [vmem:[%s2 + $0x50] sm:$0xff]
    %v66 = vld [vmem:[%s2 + $0x58] sm:$0xff]
    %v67 = vld [vmem:[%s2 + $0x60] sm:$0xff]
    %v68 = vld [vmem:[%s2 + $0x68] sm:$0xff]
    %v69 = vld [vmem:[%s2 + $0x70] sm:$0xff]
    %v70 = vld [vmem:[%s2 + $0x78] sm:$0xff]
    %v71 = vld [vmem:[%s2 + $0x80] sm:$0xff]
    %v72 = vld [vmem:[%s2 + $0x88] sm:$0xff]
    %v73 = vld [vmem:[%s2 + $0x90] sm:$0xff]
    %v74 = vld [vmem:[%s2 + $0x98] sm:$0xff]
    %v75 = vld [vmem:[%s2 + $0xa0] sm:$0xff]
    %v76 = vld [vmem:[%s2 + $0xa8] sm:$0xff]
    %v77 = vld [vmem:[%s2 + $0xb0] sm:$0xff]
    %v78 = vld [vmem:[%s2 + $0xb8] sm:$0xff]
    %v79 = vld [vmem:[%s2 + $0xc0] sm:$0xff]
    %v80 = vld [vmem:[%s2 + $0xc8] sm:$0xff]
    %v81 = vld [vmem:[%s2 + $0xd0] sm:$0xff]
    %v82 = vld [vmem:[%s2 + $0xd8] sm:$0xff]
    %v83 = vld [vmem:[%s2 + $0xe0] sm:$0xff]
    %v84 = vld [vmem:[%s2 + $0xe8] sm:$0xff]
    %v85 = vld [vmem:[%s2 + $0xf0] sm:$0xff]
    %v86 = vld [vmem:[%s2 + $0xf8] sm:$0xff]
    %v87 = vld [vmem:[%s2 + $0x100] sm:$0xff]
    %v88 = vld [vmem:[%s2 + $0x108] sm:$0xff]
    %v89 = vld [vmem:[%s2 + $0x110] sm:$0xff]
    %v90 = vld [vmem:[%s2 + $0x118] sm:$0xff]
    %v91 = vld [vmem:[%s2 + $0x120] sm:$0xff]
    %v92 = vld [vmem:[%s2 + $0x128] sm:$0xff]
    %v93 = vld [vmem:[%s2 + $0x130] sm:$0xff]
    %v94 = vld [vmem:[%s2 + $0x138] sm:$0xff]
    %v95 = vld [vmem:[%s2 + $0x140] sm:$0xff]
    %v96 = vld [vmem:[%s2 + $0x148] sm:$0xff]
    %v97 = vld [vmem:[%s2 + $0x150] sm:$0xff]
    %v98 = vld [vmem:[%s2 + $0x158] sm:$0xff]
    %v99 = vld [vmem:[%s2 + $0x160] sm:$0xff]
    %v100 = vld [vmem:[%s2 + $0x168] sm:$0xff]
    %v101 = vld [vmem:[%s2 + $0x170] sm:$0xff]
    %v102 = vld [vmem:[%s2 + $0x178] sm:$0xff]
    %v103 = vld [vmem:[%s2 + $0x180] sm:$0xff]
    %v104 = vld [vmem:[%s2 + $0x188] sm:$0xff]
    %v105 = vld [vmem:[%s2 + $0x190] sm:$0xff]
    %v106 = vld [vmem:[%s2 + $0x198] sm:$0xff]
    %v107 = vld [vmem:[%s2 + $0x1a0] sm:$0xff]
    %v108 = vld [vmem:[%s2 + $0x1a8] sm:$0xff]
    %v109 = vld [vmem:[%s2 + $0x1b0] sm:$0xff]
    %v110 = vld [vmem:[%s2 + $0x1b8] sm:$0xff]
    %v111 = vld [vmem:[%s2 + $0x1c0] sm:$0xff]
    %v112 = vld [vmem:[%s2 + $0x1c8] sm:$0xff]
    %v113 = vld [vmem:[%s2 + $0x1d0] sm:$0xff]
    %v114 = vld [vmem:[%s2 + $0x1d8] sm:$0xff]
    %v115 = vld [vmem:[%s2 + $0x1e0] sm:$0xff]
    %v116 = vld [vmem:[%s2 + $0x1e8] sm:$0xff]
    %v117 = vld [vmem:[%s2 + $0x1f0] sm:$0xff]
    %v118 = vld [vmem:[%s2 + $0x1f8] sm:$0xff]
    %v119 = vld [vmem:[%s2 + $0x200] sm:$0xff]
    %v120 = vld [vmem:[%s2 + $0x208] sm:$0xff]
    %v121 = vld [vmem:[%s2 + $0x210] sm:$0xff]
    %v122 = vld [vmem:[%s2 + $0x218] sm:$0xff]
    %v123 = vld [vmem:[%s2 + $0x220] sm:$0xff]
    %v124 = vld [vmem:[%s2 + $0x228] sm:$0xff]
    %v125 = vld [vmem:[%s2 + $0x230] sm:$0xff]
    %v126 = vld [vmem:[%s2 + $0x238] sm:$0xff]
    %v127 = vld [vmem:[%s2 + $0x240] sm:$0xff]
    %v128 = vld [vmem:[%s2 + $0x248] sm:$0xff]
    %v129 = vld [vmem:[%s2 + $0x250] sm:$0xff]
    %v130 = vld [vmem:[%s2 + $0x258] sm:$0xff]
    %v131 = vld [vmem:[%s2 + $0x260] sm:$0xff]
    %v132 = vld [vmem:[%s2 + $0x268] sm:$0xff]
    %v133 = vld [vmem:[%s2 + $0x270] sm:$0xff]
    %v134 = vld [vmem:[%s2 + $0x278] sm:$0xff]
    %v135 = vld [vmem:[%s2 + $0x280] sm:$0xff]
    %v136 = vld [vmem:[%s2 + $0x288] sm:$0xff]
    %v137 = vld [vmem:[%s2 + $0x290] sm:$0xff]
    %v138 = vld [vmem:[%s2 + $0x298] sm:$0xff]
    %v139 = vld [vmem:[%s2 + $0x2a0] sm:$0xff]
    %v140 = vld [vmem:[%s2 + $0x2a8] sm:$0xff]
    %v141 = vld [vmem:[%s2 + $0x2b0] sm:$0xff]
    %v142 = vld [vmem:[%s2 + $0x2b8] sm:$0xff]
    %v143 = vld [vmem:[%s2 + $0x2c0] sm:$0xff]
    %v144 = vld [vmem:[%s2 + $0x2c8] sm:$0xff]
    %v145 = vld [vmem:[%s2 + $0x2d0] sm:$0xff]
    %v146 = vld [vmem:[%s2 + $0x2d8] sm:$0xff]
    %v147 = vld [vmem:[%s2 + $0x2e0] sm:$0xff]
    %v148 = vld [vmem:[%s2 + $0x2e8] sm:$0xff]
    %v149 = vld [vmem:[%s2 + $0x2f0] sm:$0xff]
    %v150 = vld [vmem:[%s2 + $0x2f8] sm:$0xff]
    %v151 = vld [vmem:[%s2 + $0x300] sm:$0xff]
    %v152 = vld [vmem:[%s2 + $0x308] sm:$0xff]
    %v153 = vld [vmem:[%s2 + $0x310] sm:$0xff]
    %v154 = vld [vmem:[%s2 + $0x318] sm:$0xff]
    %v155 = vld [vmem:[%s2 + $0x320] sm:$0xff]
    %v156 = vld [vmem:[%s2 + $0x328] sm:$0xff]
    %v157 = vld [vmem:[%s2 + $0x330] sm:$0xff]
    %v158 = vld [vmem:[%s2 + $0x338] sm:$0xff]
    %v159 = vld [vmem:[%s2 + $0x340] sm:$0xff]
    %v160 = vld [vmem:[%s2 + $0x348] sm:$0xff]
    %v161 = vld [vmem:[%s2 + $0x350] sm:$0xff]
    %v162 = vld [vmem:[%s2 + $0x358] sm:$0xff]
    %v163 = vld [vmem:[%s2 + $0x360] sm:$0xff]
    %v164 = vld [vmem:[%s2 + $0x368] sm:$0xff]
    %v165 = vld [vmem:[%s2 + $0x370] sm:$0xff]
    %v166 = vld [vmem:[%s2 + $0x378] sm:$0xff]
    %v167 = vld [vmem:[%s2 + $0x380] sm:$0xff]
    %v168 = vld [vmem:[%s2 + $0x388] sm:$0xff]
    %v169 = vld [vmem:[%s2 + $0x390] sm:$0xff]
    %v170 = vld [vmem:[%s2 + $0x398] sm:$0xff]
    %v171 = vld [vmem:[%s2 + $0x3a0] sm:$0xff]
    %v172 = vld [vmem:[%s2 + $0x3a8] sm:$0xff]
    %v173 = vld [vmem:[%s2 + $0x3b0] sm:$0xff]
    %v174 = vld [vmem:[%s2 + $0x3b8] sm:$0xff]
    %v175 = vld [vmem:[%s2 + $0x3c0] sm:$0xff]
    %v176 = vld [vmem:[%s2 + $0x3c8] sm:$0xff]
    %v177 = vld [vmem:[%s2 + $0x3d0] sm:$0xff]
    %v178 = vld [vmem:[%s2 + $0x3d8] sm:$0xff]
    %v179 = vld [vmem:[%s2 + $0x3e0] sm:$0xff]
    %v180 = vld [vmem:[%s2 + $0x3e8] sm:$0xff]
    %v181 = vld [vmem:[%s2 + $0x3f0] sm:$0xff]
    %v182 = vld [vmem:[%s2 + $0x3f8] sm:$0xff]
    loop: start=0, step=1, limit=25
    $region66: #{forward.3} parent=1 // loop_pre_header
      _
    $region67: #{forward.3} parent=1 // loop_header
      %s184 = sphi 0, %s188
      %p185 = scmp.ge.s32.totalorder %s184, 25
      %v189 = vphi 0.0, %v1088
      %v190 = vphi 0.0, %v1086
    $region68: #{forward.3} parent=1 // loop_header_branch
      %187 = sbr.rel (%p185) target = $region72
    $region69: #{forward.3} parent=1 // loop_body
      %s191 = smul.u32 %s184, 8
      %s192 = smul.addr %s191, 2
      %s193 = scalar_lea.vmem %s0, %s192
      %v194 = vld [vmem:[%s193] sm:$0xff]
      %v195 = vld [vmem:[%s193 + $0x8] sm:$0xff]
      %v198 = vunpack.c.l.s4 1983009808
      %v199 = vunpack.c.0.s8 %v198
      %v200 = vlaneseq
      %v201 = vshrl.u32 %v200, 7
      %v202 = vsub.s32 %v199, %v201
      %v203 = vrot.slane %v189, %v202
      %v204 = vcombine.high %v203, %v203
      %v207 = vpack.c.bf16 %v203, %v203
      %v208 = vpack.c.bf16 %v204, %v204
      %v337 = vunpack.c.l.b16 %v55
      %v338 = vunpack.c.h.b16 %v55
      %v339 = vunpack.c.l.b16 %v56
      %v340 = vunpack.c.h.b16 %v56
      %v341 = vunpack.c.l.b16 %v57
      %v342 = vunpack.c.h.b16 %v57
      %v343 = vunpack.c.l.b16 %v58
      %v344 = vunpack.c.h.b16 %v58
      %v345 = vunpack.c.l.b16 %v59
      %v346 = vunpack.c.h.b16 %v59
      %v347 = vunpack.c.l.b16 %v60
      %v348 = vunpack.c.h.b16 %v60
      %v349 = vunpack.c.l.b16 %v61
      %v350 = vunpack.c.h.b16 %v61
      %v351 = vunpack.c.l.b16 %v62
      %v352 = vunpack.c.h.b16 %v62
      %v353 = vunpack.c.l.b16 %v63
      %v354 = vunpack.c.h.b16 %v63
      %v355 = vunpack.c.l.b16 %v64
      %v356 = vunpack.c.h.b16 %v64
      %v357 = vunpack.c.l.b16 %v65
      %v358 = vunpack.c.h.b16 %v65
      %v359 = vunpack.c.l.b16 %v66
      %v360 = vunpack.c.h.b16 %v66
      %v361 = vunpack.c.l.b16 %v67
      %v362 = vunpack.c.h.b16 %v67
      %v363 = vunpack.c.l.b16 %v68
      %v364 = vunpack.c.h.b16 %v68
      %v365 = vunpack.c.l.b16 %v69
      %v366 = vunpack.c.h.b16 %v69
      %v367 = vunpack.c.l.b16 %v70
      %v368 = vunpack.c.h.b16 %v70
      %v369 = vunpack.c.l.b16 %v71
      %v370 = vunpack.c.h.b16 %v71
      %v371 = vunpack.c.l.b16 %v72
      %v372 = vunpack.c.h.b16 %v72
      %v373 = vunpack.c.l.b16 %v73
      %v374 = vunpack.c.h.b16 %v73
      %v375 = vunpack.c.l.b16 %v74
      %v376 = vunpack.c.h.b16 %v74
      %v377 = vunpack.c.l.b16 %v75
      %v378 = vunpack.c.h.b16 %v75
      %v379 = vunpack.c.l.b16 %v76
      %v380 = vunpack.c.h.b16 %v76
      %v381 = vunpack.c.l.b16 %v77
      %v382 = vunpack.c.h.b16 %v77
      %v383 = vunpack.c.l.b16 %v78
      %v384 = vunpack.c.h.b16 %v78
      %v385 = vunpack.c.l.b16 %v79
      %v386 = vunpack.c.h.b16 %v79
      %v387 = vunpack.c.l.b16 %v80
      %v388 = vunpack.c.h.b16 %v80
      %v389 = vunpack.c.l.b16 %v81
      %v390 = vunpack.c.h.b16 %v81
      %v391 = vunpack.c.l.b16 %v82
      %v392 = vunpack.c.h.b16 %v82
      %v393 = vunpack.c.l.b16 %v83
      %v394 = vunpack.c.h.b16 %v83
      %v395 = vunpack.c.l.b16 %v84
      %v396 = vunpack.c.h.b16 %v84
      %v397 = vunpack.c.l.b16 %v85
      %v398 = vunpack.c.h.b16 %v85
      %v399 = vunpack.c.l.b16 %v86
      %v400 = vunpack.c.h.b16 %v86
      %v401 = vunpack.c.l.b16 %v87
      %v402 = vunpack.c.h.b16 %v87
      %v403 = vunpack.c.l.b16 %v88
      %v404 = vunpack.c.h.b16 %v88
      %v405 = vunpack.c.l.b16 %v89
      %v406 = vunpack.c.h.b16 %v89
      %v407 = vunpack.c.l.b16 %v90
      %v408 = vunpack.c.h.b16 %v90
      %v409 = vunpack.c.l.b16 %v91
      %v410 = vunpack.c.h.b16 %v91
      %v411 = vunpack.c.l.b16 %v92
      %v412 = vunpack.c.h.b16 %v92
      %v413 = vunpack.c.l.b16 %v93
      %v414 = vunpack.c.h.b16 %v93
      %v415 = vunpack.c.l.b16 %v94
      %v416 = vunpack.c.h.b16 %v94
      %v417 = vunpack.c.l.b16 %v95
      %v418 = vunpack.c.h.b16 %v95
      %v419 = vunpack.c.l.b16 %v96
      %v420 = vunpack.c.h.b16 %v96
      %v421 = vunpack.c.l.b16 %v97
      %v422 = vunpack.c.h.b16 %v97
      %v423 = vunpack.c.l.b16 %v98
      %v424 = vunpack.c.h.b16 %v98
      %v425 = vunpack.c.l.b16 %v99
      %v426 = vunpack.c.h.b16 %v99
      %v427 = vunpack.c.l.b16 %v100
      %v428 = vunpack.c.h.b16 %v100
      %v429 = vunpack.c.l.b16 %v101
      %v430 = vunpack.c.h.b16 %v101
      %v431 = vunpack.c.l.b16 %v102
      %v432 = vunpack.c.h.b16 %v102
      %v433 = vunpack.c.l.b16 %v103
      %v434 = vunpack.c.h.b16 %v103
      %v435 = vunpack.c.l.b16 %v104
      %v436 = vunpack.c.h.b16 %v104
      %v437 = vunpack.c.l.b16 %v105
      %v438 = vunpack.c.h.b16 %v105
      %v439 = vunpack.c.l.b16 %v106
      %v440 = vunpack.c.h.b16 %v106
      %v441 = vunpack.c.l.b16 %v107
      %v442 = vunpack.c.h.b16 %v107
      %v443 = vunpack.c.l.b16 %v108
      %v444 = vunpack.c.h.b16 %v108
      %v445 = vunpack.c.l.b16 %v109
      %v446 = vunpack.c.h.b16 %v109
      %v447 = vunpack.c.l.b16 %v110
      %v448 = vunpack.c.h.b16 %v110
      %v449 = vunpack.c.l.b16 %v111
      %v450 = vunpack.c.h.b16 %v111
      %v451 = vunpack.c.l.b16 %v112
      %v452 = vunpack.c.h.b16 %v112
      %v453 = vunpack.c.l.b16 %v113
      %v454 = vunpack.c.h.b16 %v113
      %v455 = vunpack.c.l.b16 %v114
      %v456 = vunpack.c.h.b16 %v114
      %v457 = vunpack.c.l.b16 %v115
      %v458 = vunpack.c.h.b16 %v115
      %v459 = vunpack.c.l.b16 %v116
      %v460 = vunpack.c.h.b16 %v116
      %v461 = vunpack.c.l.b16 %v117
      %v462 = vunpack.c.h.b16 %v117
      %v463 = vunpack.c.l.b16 %v118
      %v464 = vunpack.c.h.b16 %v118
      %v465 = vunpack.c.l.b16 %v119
      %v466 = vunpack.c.h.b16 %v119
      %v467 = vunpack.c.l.b16 %v120
      %v468 = vunpack.c.h.b16 %v120
      %v469 = vunpack.c.l.b16 %v121
      %v470 = vunpack.c.h.b16 %v121
      %v471 = vunpack.c.l.b16 %v122
      %v472 = vunpack.c.h.b16 %v122
      %v473 = vunpack.c.l.b16 %v123
      %v474 = vunpack.c.h.b16 %v123
      %v475 = vunpack.c.l.b16 %v124
      %v476 = vunpack.c.h.b16 %v124
      %v477 = vunpack.c.l.b16 %v125
      %v478 = vunpack.c.h.b16 %v125
      %v479 = vunpack.c.l.b16 %v126
      %v480 = vunpack.c.h.b16 %v126
      %v481 = vunpack.c.l.b16 %v127
      %v482 = vunpack.c.h.b16 %v127
      %v483 = vunpack.c.l.b16 %v128
      %v484 = vunpack.c.h.b16 %v128
      %v485 = vunpack.c.l.b16 %v129
      %v486 = vunpack.c.h.b16 %v129
      %v487 = vunpack.c.l.b16 %v130
      %v488 = vunpack.c.h.b16 %v130
      %v489 = vunpack.c.l.b16 %v131
      %v490 = vunpack.c.h.b16 %v131
      %v491 = vunpack.c.l.b16 %v132
      %v492 = vunpack.c.h.b16 %v132
      %v493 = vunpack.c.l.b16 %v133
      %v494 = vunpack.c.h.b16 %v133
      %v495 = vunpack.c.l.b16 %v134
      %v496 = vunpack.c.h.b16 %v134
      %v497 = vunpack.c.l.b16 %v135
      %v498 = vunpack.c.h.b16 %v135
      %v499 = vunpack.c.l.b16 %v136
      %v500 = vunpack.c.h.b16 %v136
      %v501 = vunpack.c.l.b16 %v137
      %v502 = vunpack.c.h.b16 %v137
      %v503 = vunpack.c.l.b16 %v138
      %v504 = vunpack.c.h.b16 %v138
      %v505 = vunpack.c.l.b16 %v139
      %v506 = vunpack.c.h.b16 %v139
      %v507 = vunpack.c.l.b16 %v140
      %v508 = vunpack.c.h.b16 %v140
      %v509 = vunpack.c.l.b16 %v141
      %v510 = vunpack.c.h.b16 %v141
      %v511 = vunpack.c.l.b16 %v142
      %v512 = vunpack.c.h.b16 %v142
      %v513 = vunpack.c.l.b16 %v143
      %v514 = vunpack.c.h.b16 %v143
      %v515 = vunpack.c.l.b16 %v144
      %v516 = vunpack.c.h.b16 %v144
      %v517 = vunpack.c.l.b16 %v145
      %v518 = vunpack.c.h.b16 %v145
      %v519 = vunpack.c.l.b16 %v146
      %v520 = vunpack.c.h.b16 %v146
      %v521 = vunpack.c.l.b16 %v147
      %v522 = vunpack.c.h.b16 %v147
      %v523 = vunpack.c.l.b16 %v148
      %v524 = vunpack.c.h.b16 %v148
      %v525 = vunpack.c.l.b16 %v149
      %v526 = vunpack.c.h.b16 %v149
      %v527 = vunpack.c.l.b16 %v150
      %v528 = vunpack.c.h.b16 %v150
      %v529 = vunpack.c.l.b16 %v151
      %v530 = vunpack.c.h.b16 %v151
      %v531 = vunpack.c.l.b16 %v152
      %v532 = vunpack.c.h.b16 %v152
      %v533 = vunpack.c.l.b16 %v153
      %v534 = vunpack.c.h.b16 %v153
      %v535 = vunpack.c.l.b16 %v154
      %v536 = vunpack.c.h.b16 %v154
      %v537 = vunpack.c.l.b16 %v155
      %v538 = vunpack.c.h.b16 %v155
      %v539 = vunpack.c.l.b16 %v156
      %v540 = vunpack.c.h.b16 %v156
      %v541 = vunpack.c.l.b16 %v157
      %v542 = vunpack.c.h.b16 %v157
      %v543 = vunpack.c.l.b16 %v158
      %v544 = vunpack.c.h.b16 %v158
      %v545 = vunpack.c.l.b16 %v159
      %v546 = vunpack.c.h.b16 %v159
      %v547 = vunpack.c.l.b16 %v160
      %v548 = vunpack.c.h.b16 %v160
      %v549 = vunpack.c.l.b16 %v161
      %v550 = vunpack.c.h.b16 %v161
      %v551 = vunpack.c.l.b16 %v162
      %v552 = vunpack.c.h.b16 %v162
      %v553 = vunpack.c.l.b16 %v163
      %v554 = vunpack.c.h.b16 %v163
      %v555 = vunpack.c.l.b16 %v164
      %v556 = vunpack.c.h.b16 %v164
      %v557 = vunpack.c.l.b16 %v165
      %v558 = vunpack.c.h.b16 %v165
      %v559 = vunpack.c.l.b16 %v166
      %v560 = vunpack.c.h.b16 %v166
      %v561 = vunpack.c.l.b16 %v167
      %v562 = vunpack.c.h.b16 %v167
      %v563 = vunpack.c.l.b16 %v168
      %v564 = vunpack.c.h.b16 %v168
      %v565 = vunpack.c.l.b16 %v169
      %v566 = vunpack.c.h.b16 %v169
      %v567 = vunpack.c.l.b16 %v170
      %v568 = vunpack.c.h.b16 %v170
      %v569 = vunpack.c.l.b16 %v171
      %v570 = vunpack.c.h.b16 %v171
      %v571 = vunpack.c.l.b16 %v172
      %v572 = vunpack.c.h.b16 %v172
      %v573 = vunpack.c.l.b16 %v173
      %v574 = vunpack.c.h.b16 %v173
      %v575 = vunpack.c.l.b16 %v174
      %v576 = vunpack.c.h.b16 %v174
      %v577 = vunpack.c.l.b16 %v175
      %v578 = vunpack.c.h.b16 %v175
      %v579 = vunpack.c.l.b16 %v176
      %v580 = vunpack.c.h.b16 %v176
      %v581 = vunpack.c.l.b16 %v177
      %v582 = vunpack.c.h.b16 %v177
      %v583 = vunpack.c.l.b16 %v178
      %v584 = vunpack.c.h.b16 %v178
      %v585 = vunpack.c.l.b16 %v179
      %v586 = vunpack.c.h.b16 %v179
      %v587 = vunpack.c.l.b16 %v180
      %v588 = vunpack.c.h.b16 %v180
      %v589 = vunpack.c.l.b16 %v181
      %v590 = vunpack.c.h.b16 %v181
      %v591 = vunpack.c.l.b16 %v182
      %v592 = vunpack.c.h.b16 %v182
      %v593 = vpack.c.b16 %v345, %v337
      %v594 = vpack.c.b16 %v346, %v338
      %v595 = vpack.c.b16 %v347, %v339
      %v596 = vpack.c.b16 %v348, %v340
      %v597 = vpack.c.b16 %v349, %v341
      %v598 = vpack.c.b16 %v350, %v342
      %v599 = vpack.c.b16 %v351, %v343
      %v600 = vpack.c.b16 %v352, %v344
      %v601 = vpack.c.b16 %v361, %v353
      %v602 = vpack.c.b16 %v362, %v354
      %v603 = vpack.c.b16 %v363, %v355
      %v604 = vpack.c.b16 %v364, %v356
      %v605 = vpack.c.b16 %v365, %v357
      %v606 = vpack.c.b16 %v366, %v358
      %v607 = vpack.c.b16 %v367, %v359
      %v608 = vpack.c.b16 %v368, %v360
      %v609 = vpack.c.b16 %v377, %v369
      %v610 = vpack.c.b16 %v378, %v370
      %v611 = vpack.c.b16 %v379, %v371
      %v612 = vpack.c.b16 %v380, %v372
      %v613 = vpack.c.b16 %v381, %v373
      %v614 = vpack.c.b16 %v382, %v374
      %v615 = vpack.c.b16 %v383, %v375
      %v616 = vpack.c.b16 %v384, %v376
      %v617 = vpack.c.b16 %v393, %v385
      %v618 = vpack.c.b16 %v394, %v386
      %v619 = vpack.c.b16 %v395, %v387
      %v620 = vpack.c.b16 %v396, %v388
      %v621 = vpack.c.b16 %v397, %v389
      %v622 = vpack.c.b16 %v398, %v390
      %v623 = vpack.c.b16 %v399, %v391
      %v624 = vpack.c.b16 %v400, %v392
      %v625 = vpack.c.b16 %v409, %v401
      %v626 = vpack.c.b16 %v410, %v402
      %v627 = vpack.c.b16 %v411, %v403
      %v628 = vpack.c.b16 %v412, %v404
      %v629 = vpack.c.b16 %v413, %v405
      %v630 = vpack.c.b16 %v414, %v406
      %v631 = vpack.c.b16 %v415, %v407
      %v632 = vpack.c.b16 %v416, %v408
      %v633 = vpack.c.b16 %v425, %v417
      %v634 = vpack.c.b16 %v426, %v418
      %v635 = vpack.c.b16 %v427, %v419
      %v636 = vpack.c.b16 %v428, %v420
      %v637 = vpack.c.b16 %v429, %v421
      %v638 = vpack.c.b16 %v430, %v422
      %v639 = vpack.c.b16 %v431, %v423
      %v640 = vpack.c.b16 %v432, %v424
      %v641 = vpack.c.b16 %v441, %v433
      %v642 = vpack.c.b16 %v442, %v434
      %v643 = vpack.c.b16 %v443, %v435
      %v644 = vpack.c.b16 %v444, %v436
      %v645 = vpack.c.b16 %v445, %v437
      %v646 = vpack.c.b16 %v446, %v438
      %v647 = vpack.c.b16 %v447, %v439
      %v648 = vpack.c.b16 %v448, %v440
      %v649 = vpack.c.b16 %v457, %v449
      %v650 = vpack.c.b16 %v458, %v450
      %v651 = vpack.c.b16 %v459, %v451
      %v652 = vpack.c.b16 %v460, %v452
      %v653 = vpack.c.b16 %v461, %v453
      %v654 = vpack.c.b16 %v462, %v454
      %v655 = vpack.c.b16 %v463, %v455
      %v656 = vpack.c.b16 %v464, %v456
      %v657 = vpack.c.b16 %v473, %v465
      %v658 = vpack.c.b16 %v474, %v466
      %v659 = vpack.c.b16 %v475, %v467
      %v660 = vpack.c.b16 %v476, %v468
      %v661 = vpack.c.b16 %v477, %v469
      %v662 = vpack.c.b16 %v478, %v470
      %v663 = vpack.c.b16 %v479, %v471
      %v664 = vpack.c.b16 %v480, %v472
      %v665 = vpack.c.b16 %v489, %v481
      %v666 = vpack.c.b16 %v490, %v482
      %v667 = vpack.c.b16 %v491, %v483
      %v668 = vpack.c.b16 %v492, %v484
      %v669 = vpack.c.b16 %v493, %v485
      %v670 = vpack.c.b16 %v494, %v486
      %v671 = vpack.c.b16 %v495, %v487
      %v672 = vpack.c.b16 %v496, %v488
      %v673 = vpack.c.b16 %v505, %v497
      %v674 = vpack.c.b16 %v506, %v498
      %v675 = vpack.c.b16 %v507, %v499
      %v676 = vpack.c.b16 %v508, %v500
      %v677 = vpack.c.b16 %v509, %v501
      %v678 = vpack.c.b16 %v510, %v502
      %v679 = vpack.c.b16 %v511, %v503
      %v680 = vpack.c.b16 %v512, %v504
      %v681 = vpack.c.b16 %v521, %v513
      %v682 = vpack.c.b16 %v522, %v514
      %v683 = vpack.c.b16 %v523, %v515
      %v684 = vpack.c.b16 %v524, %v516
      %v685 = vpack.c.b16 %v525, %v517
      %v686 = vpack.c.b16 %v526, %v518
      %v687 = vpack.c.b16 %v527, %v519
      %v688 = vpack.c.b16 %v528, %v520
      %v689 = vpack.c.b16 %v537, %v529
      %v690 = vpack.c.b16 %v538, %v530
      %v691 = vpack.c.b16 %v539, %v531
      %v692 = vpack.c.b16 %v540, %v532
      %v693 = vpack.c.b16 %v541, %v533
      %v694 = vpack.c.b16 %v542, %v534
      %v695 = vpack.c.b16 %v543, %v535
      %v696 = vpack.c.b16 %v544, %v536
      %v697 = vpack.c.b16 %v553, %v545
      %v698 = vpack.c.b16 %v554, %v546
      %v699 = vpack.c.b16 %v555, %v547
      %v700 = vpack.c.b16 %v556, %v548
      %v701 = vpack.c.b16 %v557, %v549
      %v702 = vpack.c.b16 %v558, %v550
      %v703 = vpack.c.b16 %v559, %v551
      %v704 = vpack.c.b16 %v560, %v552
      %v705 = vpack.c.b16 %v569, %v561
      %v706 = vpack.c.b16 %v570, %v562
      %v707 = vpack.c.b16 %v571, %v563
      %v708 = vpack.c.b16 %v572, %v564
      %v709 = vpack.c.b16 %v573, %v565
      %v710 = vpack.c.b16 %v574, %v566
      %v711 = vpack.c.b16 %v575, %v567
      %v712 = vpack.c.b16 %v576, %v568
      %v713 = vpack.c.b16 %v585, %v577
      %v714 = vpack.c.b16 %v586, %v578
      %v715 = vpack.c.b16 %v587, %v579
      %v716 = vpack.c.b16 %v588, %v580
      %v717 = vpack.c.b16 %v589, %v581
      %v718 = vpack.c.b16 %v590, %v582
      %v719 = vpack.c.b16 %v591, %v583
      %v720 = vpack.c.b16 %v592, %v584
      %849 = vmatprep.subr.bf16.mxu0 %v650
      %850 = vmatpush1.bf16.msra.mxu0 %v649
      %851 = vmatprep.subr.bf16.mxu0 %v642
      %852 = vmatpush1.bf16.msra.mxu0 %v641
      %853 = vmatprep.subr.bf16.mxu0 %v634
      %854 = vmatpush1.bf16.msra.mxu0 %v633
      %855 = vmatprep.subr.bf16.mxu0 %v626
      %856 = vmatpush1.bf16.msra.mxu0 %v625
      %857 = vmatprep.subr.bf16.mxu0 %v618
      %858 = vmatpush1.bf16.msra.mxu0 %v617
      %859 = vmatprep.subr.bf16.mxu0 %v610
      %860 = vmatpush1.bf16.msra.mxu0 %v609
      %861 = vmatprep.subr.bf16.mxu0 %v602
      %862 = vmatpush1.bf16.msra.mxu0 %v601
      %863 = vmatprep.subr.bf16.mxu0 %v594
      %864 = vmatpush1.bf16.msra.mxu0 %v593
      %865 = vmatprep.subr.bf16.mxu0 %v714
      %866 = vmatpush2.bf16.msra.mxu0 %v713
      %867 = vmatprep.subr.bf16.mxu0 %v706
      %868 = vmatpush2.bf16.msra.mxu0 %v705
      %869 = vmatprep.subr.bf16.mxu0 %v698
      %870 = vmatpush2.bf16.msra.mxu0 %v697
      %871 = vmatprep.subr.bf16.mxu0 %v690
      %872 = vmatpush2.bf16.msra.mxu0 %v689
      %873 = vmatprep.subr.bf16.mxu0 %v682
      %874 = vmatpush2.bf16.msra.mxu0 %v681
      %875 = vmatprep.subr.bf16.mxu0 %v674
      %876 = vmatpush2.bf16.msra.mxu0 %v673
      %877 = vmatprep.subr.bf16.mxu0 %v666
      %878 = vmatpush2.bf16.msra.mxu0 %v665
      %879 = vmatprep.subr.bf16.mxu0 %v658
      %880 = vmatpush2.bf16.msra.mxu0 %v657
      %881 = vmatprep.mubr.bf16.mxu0 %v208
      %882 = vmatmul.mubr.bf16.gmra.mxu0 %v207
      %v883 = vpop.f32.mrf.mxu0
      %v884 = vadd.f32 0.0, %v883
      %v885 = vpop.f32.mrf.mxu0
      %v886 = vadd.f32 0.0, %v885
      %v887 = vpop.f32.mrf.mxu0
      %v888 = vpop.f32.mrf.mxu0
      %889 = vdwg.mxu0
      %890 = vmatprep.subr.bf16.mxu0 %v652
      %891 = vmatpush1.bf16.msra.mxu0 %v651
      %892 = vmatprep.subr.bf16.mxu0 %v644
      %893 = vmatpush1.bf16.msra.mxu0 %v643
      %894 = vmatprep.subr.bf16.mxu0 %v636
      %895 = vmatpush1.bf16.msra.mxu0 %v635
      %896 = vmatprep.subr.bf16.mxu0 %v628
      %897 = vmatpush1.bf16.msra.mxu0 %v627
      %898 = vmatprep.subr.bf16.mxu0 %v620
      %899 = vmatpush1.bf16.msra.mxu0 %v619
      %900 = vmatprep.subr.bf16.mxu0 %v612
      %901 = vmatpush1.bf16.msra.mxu0 %v611
      %902 = vmatprep.subr.bf16.mxu0 %v604
      %903 = vmatpush1.bf16.msra.mxu0 %v603
      %904 = vmatprep.subr.bf16.mxu0 %v596
      %905 = vmatpush1.bf16.msra.mxu0 %v595
      %906 = vmatprep.subr.bf16.mxu0 %v716
      %907 = vmatpush2.bf16.msra.mxu0 %v715
      %908 = vmatprep.subr.bf16.mxu0 %v708
      %909 = vmatpush2.bf16.msra.mxu0 %v707
      %910 = vmatprep.subr.bf16.mxu0 %v700
      %911 = vmatpush2.bf16.msra.mxu0 %v699
      %912 = vmatprep.subr.bf16.mxu0 %v692
      %913 = vmatpush2.bf16.msra.mxu0 %v691
      %914 = vmatprep.subr.bf16.mxu0 %v684
      %915 = vmatpush2.bf16.msra.mxu0 %v683
      %916 = vmatprep.subr.bf16.mxu0 %v676
      %917 = vmatpush2.bf16.msra.mxu0 %v675
      %918 = vmatprep.subr.bf16.mxu0 %v668
      %919 = vmatpush2.bf16.msra.mxu0 %v667
      %920 = vmatprep.subr.bf16.mxu0 %v660
      %921 = vmatpush2.bf16.msra.mxu0 %v659
      %922 = vmatprep.mubr.bf16.mxu0 %v208
      %923 = vmatmul.mubr.bf16.gmra.mxu0 %v207
      %v924 = vpop.f32.mrf.mxu0
      %v925 = vadd.f32 0.0, %v924
      %v926 = vpop.f32.mrf.mxu0
      %v927 = vadd.f32 0.0, %v926
      %v928 = vpop.f32.mrf.mxu0
      %v929 = vpop.f32.mrf.mxu0
      %930 = vdwg.mxu0
      %931 = vmatprep.subr.bf16.mxu0 %v654
      %932 = vmatpush1.bf16.msra.mxu0 %v653
      %933 = vmatprep.subr.bf16.mxu0 %v646
      %934 = vmatpush1.bf16.msra.mxu0 %v645
      %935 = vmatprep.subr.bf16.mxu0 %v638
      %936 = vmatpush1.bf16.msra.mxu0 %v637
      %937 = vmatprep.subr.bf16.mxu0 %v630
      %938 = vmatpush1.bf16.msra.mxu0 %v629
      %939 = vmatprep.subr.bf16.mxu0 %v622
      %940 = vmatpush1.bf16.msra.mxu0 %v621
      %941 = vmatprep.subr.bf16.mxu0 %v614
      %942 = vmatpush1.bf16.msra.mxu0 %v613
      %943 = vmatprep.subr.bf16.mxu0 %v606
      %944 = vmatpush1.bf16.msra.mxu0 %v605
      %945 = vmatprep.subr.bf16.mxu0 %v598
      %946 = vmatpush1.bf16.msra.mxu0 %v597
      %947 = vmatprep.subr.bf16.mxu0 %v718
      %948 = vmatpush2.bf16.msra.mxu0 %v717
      %949 = vmatprep.subr.bf16.mxu0 %v710
      %950 = vmatpush2.bf16.msra.mxu0 %v709
      %951 = vmatprep.subr.bf16.mxu0 %v702
      %952 = vmatpush2.bf16.msra.mxu0 %v701
      %953 = vmatprep.subr.bf16.mxu0 %v694
      %954 = vmatpush2.bf16.msra.mxu0 %v693
      %955 = vmatprep.subr.bf16.mxu0 %v686
      %956 = vmatpush2.bf16.msra.mxu0 %v685
      %957 = vmatprep.subr.bf16.mxu0 %v678
      %958 = vmatpush2.bf16.msra.mxu0 %v677
      %959 = vmatprep.subr.bf16.mxu0 %v670
      %960 = vmatpush2.bf16.msra.mxu0 %v669
      %961 = vmatprep.subr.bf16.mxu0 %v662
      %962 = vmatpush2.bf16.msra.mxu0 %v661
      %963 = vmatprep.mubr.bf16.mxu0 %v208
      %964 = vmatmul.mubr.bf16.gmra.mxu0 %v207
      %v965 = vpop.f32.mrf.mxu0
      %v966 = vadd.f32 0.0, %v965
      %v967 = vpop.f32.mrf.mxu0
      %v968 = vadd.f32 0.0, %v967
      %v969 = vpop.f32.mrf.mxu0
      %v970 = vpop.f32.mrf.mxu0
      %971 = vdwg.mxu0
      %972 = vmatprep.subr.bf16.mxu0 %v656
      %973 = vmatpush1.bf16.msra.mxu0 %v655
      %974 = vmatprep.subr.bf16.mxu0 %v648
      %975 = vmatpush1.bf16.msra.mxu0 %v647
      %976 = vmatprep.subr.bf16.mxu0 %v640
      %977 = vmatpush1.bf16.msra.mxu0 %v639
      %978 = vmatprep.subr.bf16.mxu0 %v632
      %979 = vmatpush1.bf16.msra.mxu0 %v631
      %980 = vmatprep.subr.bf16.mxu0 %v624
      %981 = vmatpush1.bf16.msra.mxu0 %v623
      %982 = vmatprep.subr.bf16.mxu0 %v616
      %983 = vmatpush1.bf16.msra.mxu0 %v615
      %984 = vmatprep.subr.bf16.mxu0 %v608
      %985 = vmatpush1.bf16.msra.mxu0 %v607
      %986 = vmatprep.subr.bf16.mxu0 %v600
      %987 = vmatpush1.bf16.msra.mxu0 %v599
      %988 = vmatprep.subr.bf16.mxu0 %v720
      %989 = vmatpush2.bf16.msra.mxu0 %v719
      %990 = vmatprep.subr.bf16.mxu0 %v712
      %991 = vmatpush2.bf16.msra.mxu0 %v711
      %992 = vmatprep.subr.bf16.mxu0 %v704
      %993 = vmatpush2.bf16.msra.mxu0 %v703
      %994 = vmatprep.subr.bf16.mxu0 %v696
      %995 = vmatpush2.bf16.msra.mxu0 %v695
      %996 = vmatprep.subr.bf16.mxu0 %v688
      %997 = vmatpush2.bf16.msra.mxu0 %v687
      %998 = vmatprep.subr.bf16.mxu0 %v680
      %999 = vmatpush2.bf16.msra.mxu0 %v679
      %1000 = vmatprep.subr.bf16.mxu0 %v672
      %1001 = vmatpush2.bf16.msra.mxu0 %v671
      %1002 = vmatprep.subr.bf16.mxu0 %v664
      %1003 = vmatpush2.bf16.msra.mxu0 %v663
      %1004 = vmatprep.mubr.bf16.mxu0 %v208
      %1005 = vmatmul.mubr.bf16.gmra.mxu0 %v207
      %v1006 = vpop.f32.mrf.mxu0
      %v1007 = vadd.f32 0.0, %v1006
      %v1008 = vpop.f32.mrf.mxu0
      %v1009 = vadd.f32 0.0, %v1008
      %v1010 = vpop.f32.mrf.mxu0
      %v1011 = vpop.f32.mrf.mxu0
      %1012 = vdwg.mxu0
      %v1021 = vcombine.low %v884, %v886
      %v1022 = vcombine.low %v925, %v927
      %v1024 = vunpack.c.l.s4 1983009808
      %v1025 = vunpack.c.0.s8 %v1024
      %v1026 = vlaneseq
      %v1027 = vshrl.u32 %v1026, 7
      %v1028 = vsub.s32 %v1025, %v1027
      %v1029 = vrot.slane %v1021, %v1028
      %v1031 = vunpack.c.l.s4 1983009808
      %v1032 = vunpack.c.0.s8 %v1031
      %v1033 = vlaneseq
      %v1034 = vshrl.u32 %v1033, 7
      %v1035 = vsub.s32 %v1032, %v1034
      %v1036 = vrot.slane %v1022, %v1035
      %v1037 = vcombine.low %v1029, %v1036
      %v1038 = vcombine.low %v966, %v968
      %v1039 = vcombine.low %v1007, %v1009
      %v1041 = vunpack.c.l.s4 1983009808
      %v1042 = vunpack.c.0.s8 %v1041
      %v1043 = vlaneseq
      %v1044 = vshrl.u32 %v1043, 7
      %v1045 = vsub.s32 %v1042, %v1044
      %v1046 = vrot.slane %v1038, %v1045
      %v1048 = vunpack.c.l.s4 1983009808
      %v1049 = vunpack.c.0.s8 %v1048
      %v1050 = vlaneseq
      %v1051 = vshrl.u32 %v1050, 7
      %v1052 = vsub.s32 %v1049, %v1051
      %v1053 = vrot.slane %v1039, %v1052
      %v1054 = vcombine.low %v1046, %v1053
      %v1057 = vadd.f32 %v194, %v1037
      %v1058 = vadd.f32 %v195, %v1054
      %v1059 = vxor.u32 %v1057, 2147483648
      %v1060 = vmul.f32 %v1059, 1.442695
      %v1061 = vpow.pop %v1060
      %v1062 = vadd.f32 %v1061, 1.0
      %v1063 = vrcp.pop %v1062
      %v1064 = vmul.f32 1.0, %v1063
      %v1066 = vrot.slane %v1057, 4
      %v1068 = vxor.u32 %v1066, 2147483648
      %v1069 = vmul.f32 %v1068, 1.442695
      %v1070 = vpow.pop %v1069
      %v1071 = vadd.f32 %v1070, 1.0
      %v1072 = vrcp.pop %v1071
      %v1073 = vmul.f32 1.0, %v1072
      %v1074 = vtanh.pop %v1058
      %v1076 = vrot.slane %v1058, 4
      %v1078 = vxor.u32 %v1076, 2147483648
      %v1079 = vmul.f32 %v1078, 1.442695
      %v1080 = vpow.pop %v1079
      %v1081 = vadd.f32 %v1080, 1.0
      %v1082 = vrcp.pop %v1081
      %v1083 = vmul.f32 1.0, %v1082
      %v1084 = vmul.f32 %v1073, %v190
      %v1085 = vmul.f32 %v1064, %v1074
      %v1086 = vadd.f32 %v1084, %v1085
      %v1087 = vtanh.pop %v1086
      %v1088 = vmul.f32 %v1083, %v1087
    $region70: #{forward.3} parent=1 // loop_footer
      %s188 = sadd.s32 1, %s184
    $region71: #{forward.3} parent=1 // loop_footer_branch
      %183 = sbr.rel target = $region67
    $region72: #{forward.3} parent=1 // loop_exit
      _
    %v1089 = vld [vmem:[%s1] sm:$0x3]
    %v1090 = vpack.c.bf16 %v1089, %v1089
    %v1091 = vld [vmem:[%s3] sm:$0xff]
    %v1092 = vld [vmem:[%s3 + $0x10] sm:$0xff]
    %v1093 = vld [vmem:[%s3 + $0x18] sm:$0xff]
    %v1094 = vld [vmem:[%s3 + $0x20] sm:$0xff]
    %v1095 = vld [vmem:[%s3 + $0x30] sm:$0xff]
    %v1096 = vld [vmem:[%s3 + $0x38] sm:$0xff]
    %v1097 = vld [vmem:[%s3 + $0x40] sm:$0xff]
    %v1098 = vld [vmem:[%s3 + $0x50] sm:$0xff]
    %v1099 = vld [vmem:[%s3 + $0x58] sm:$0xff]
    %v1100 = vld [vmem:[%s3 + $0x60] sm:$0xff]
    %v1101 = vld [vmem:[%s3 + $0x70] sm:$0xff]
    %v1102 = vld [vmem:[%s3 + $0x78] sm:$0xff]
    %v1103 = vld [vmem:[%s3 + $0x80] sm:$0xff]
    %v1104 = vld [vmem:[%s3 + $0x90] sm:$0xff]
    %v1105 = vld [vmem:[%s3 + $0x98] sm:$0xff]
    %v1106 = vld [vmem:[%s3 + $0xa0] sm:$0xff]
    %v1107 = vld [vmem:[%s3 + $0xb0] sm:$0xff]
    %v1108 = vld [vmem:[%s3 + $0xb8] sm:$0xff]
    %v1109 = vld [vmem:[%s3 + $0xc0] sm:$0xff]
    %v1110 = vld [vmem:[%s3 + $0xd0] sm:$0xff]
    %v1111 = vld [vmem:[%s3 + $0xd8] sm:$0xff]
    %v1112 = vld [vmem:[%s3 + $0xe0] sm:$0xff]
    %v1113 = vld [vmem:[%s3 + $0xf0] sm:$0xff]
    %v1114 = vld [vmem:[%s3 + $0xf8] sm:$0xff]
    %v1115 = vld [vmem:[%s3 + $0x100] sm:$0xff]
    %v1116 = vld [vmem:[%s3 + $0x110] sm:$0xff]
    %v1117 = vld [vmem:[%s3 + $0x118] sm:$0xff]
    %v1118 = vld [vmem:[%s3 + $0x120] sm:$0xff]
    %v1119 = vld [vmem:[%s3 + $0x130] sm:$0xff]
    %v1120 = vld [vmem:[%s3 + $0x138] sm:$0xff]
    %v1121 = vld [vmem:[%s3 + $0x140] sm:$0xff]
    %v1122 = vld [vmem:[%s3 + $0x150] sm:$0xff]
    %v1123 = vld [vmem:[%s3 + $0x158] sm:$0xff]
    %v1124 = vld [vmem:[%s3 + $0x160] sm:$0xff]
    %v1125 = vld [vmem:[%s3 + $0x170] sm:$0xff]
    %v1126 = vld [vmem:[%s3 + $0x178] sm:$0xff]
    %v1127 = vld [vmem:[%s3 + $0x180] sm:$0xff]
    %v1128 = vld [vmem:[%s3 + $0x190] sm:$0xff]
    %v1129 = vld [vmem:[%s3 + $0x198] sm:$0xff]
    %v1130 = vld [vmem:[%s3 + $0x1a0] sm:$0xff]
    %v1131 = vld [vmem:[%s3 + $0x1b0] sm:$0xff]
    %v1132 = vld [vmem:[%s3 + $0x1b8] sm:$0xff]
    %v1133 = vld [vmem:[%s3 + $0x1c0] sm:$0xff]
    %v1134 = vld [vmem:[%s3 + $0x1d0] sm:$0xff]
    %v1135 = vld [vmem:[%s3 + $0x1d8] sm:$0xff]
    %v1136 = vld [vmem:[%s3 + $0x1e0] sm:$0xff]
    %v1137 = vld [vmem:[%s3 + $0x1f0] sm:$0xff]
    %v1138 = vld [vmem:[%s3 + $0x1f8] sm:$0xff]
    %v1139 = vld [vmem:[%s4] sm:$0xff]
    %v1141 = vlaneseq
    %v1142 = vshrl.u32 %v1141, 7
    %v1143 = vsub.s32 0, %v1142
    %v1144 = vrot.slane %v1139, %v1143
    %v1145 = vlaneseq
    %v1146 = vshrl.u32 %v1145, 7
    %v1147 = vsub.s32 1, %v1146
    %v1148 = vrot.slane %v1139, %v1147
    %v1149 = vlaneseq
    %v1150 = vshrl.u32 %v1149, 7
    %v1151 = vsub.s32 4, %v1150
    %v1152 = vrot.slane %v1139, %v1151
    %v1153 = vlaneseq
    %v1154 = vshrl.u32 %v1153, 7
    %v1155 = vsub.s32 5, %v1154
    %v1156 = vrot.slane %v1139, %v1155
    %v1157 = vlaneseq
    %v1158 = vshrl.u32 %v1157, 7
    %v1159 = vsub.s32 6, %v1158
    %v1160 = vrot.slane %v1139, %v1159
    %v1161 = vlaneseq
    %v1162 = vshrl.u32 %v1161, 7
    %v1163 = vsub.s32 7, %v1162
    %v1164 = vrot.slane %v1139, %v1163
    %v1219 = vunpack.c.l.b16 %v1091
    %v1220 = vunpack.c.h.b16 %v1091
    %v1221 = vunpack.c.l.b16 %v1092
    %v1222 = vunpack.c.h.b16 %v1092
    %v1223 = vunpack.c.l.b16 %v1093
    %v1224 = vunpack.c.h.b16 %v1093
    %v1225 = vunpack.c.l.b16 %v1094
    %v1226 = vunpack.c.h.b16 %v1094
    %v1227 = vunpack.c.l.b16 %v1095
    %v1228 = vunpack.c.h.b16 %v1095
    %v1229 = vunpack.c.l.b16 %v1096
    %v1230 = vunpack.c.h.b16 %v1096
    %v1231 = vunpack.c.l.b16 %v1097
    %v1232 = vunpack.c.h.b16 %v1097
    %v1233 = vunpack.c.l.b16 %v1098
    %v1234 = vunpack.c.h.b16 %v1098
    %v1235 = vunpack.c.l.b16 %v1099
    %v1236 = vunpack.c.h.b16 %v1099
    %v1237 = vunpack.c.l.b16 %v1100
    %v1238 = vunpack.c.h.b16 %v1100
    %v1239 = vunpack.c.l.b16 %v1101
    %v1240 = vunpack.c.h.b16 %v1101
    %v1241 = vunpack.c.l.b16 %v1102
    %v1242 = vunpack.c.h.b16 %v1102
    %v1243 = vunpack.c.l.b16 %v1103
    %v1244 = vunpack.c.h.b16 %v1103
    %v1245 = vunpack.c.l.b16 %v1104
    %v1246 = vunpack.c.h.b16 %v1104
    %v1247 = vunpack.c.l.b16 %v1105
    %v1248 = vunpack.c.h.b16 %v1105
    %v1249 = vunpack.c.l.b16 %v1106
    %v1250 = vunpack.c.h.b16 %v1106
    %v1251 = vunpack.c.l.b16 %v1107
    %v1252 = vunpack.c.h.b16 %v1107
    %v1253 = vunpack.c.l.b16 %v1108
    %v1254 = vunpack.c.h.b16 %v1108
    %v1255 = vunpack.c.l.b16 %v1109
    %v1256 = vunpack.c.h.b16 %v1109
    %v1257 = vunpack.c.l.b16 %v1110
    %v1258 = vunpack.c.h.b16 %v1110
    %v1259 = vunpack.c.l.b16 %v1111
    %v1260 = vunpack.c.h.b16 %v1111
    %v1261 = vunpack.c.l.b16 %v1112
    %v1262 = vunpack.c.h.b16 %v1112
    %v1263 = vunpack.c.l.b16 %v1113
    %v1264 = vunpack.c.h.b16 %v1113
    %v1265 = vunpack.c.l.b16 %v1114
    %v1266 = vunpack.c.h.b16 %v1114
    %v1267 = vunpack.c.l.b16 %v1115
    %v1268 = vunpack.c.h.b16 %v1115
    %v1269 = vunpack.c.l.b16 %v1116
    %v1270 = vunpack.c.h.b16 %v1116
    %v1271 = vunpack.c.l.b16 %v1117
    %v1272 = vunpack.c.h.b16 %v1117
    %v1273 = vunpack.c.l.b16 %v1118
    %v1274 = vunpack.c.h.b16 %v1118
    %v1275 = vunpack.c.l.b16 %v1119
    %v1276 = vunpack.c.h.b16 %v1119
    %v1277 = vunpack.c.l.b16 %v1120
    %v1278 = vunpack.c.h.b16 %v1120
    %v1279 = vunpack.c.l.b16 %v1121
    %v1280 = vunpack.c.h.b16 %v1121
    %v1281 = vunpack.c.l.b16 %v1122
    %v1282 = vunpack.c.h.b16 %v1122
    %v1283 = vunpack.c.l.b16 %v1123
    %v1284 = vunpack.c.h.b16 %v1123
    %v1285 = vunpack.c.l.b16 %v1124
    %v1286 = vunpack.c.h.b16 %v1124
    %v1287 = vunpack.c.l.b16 %v1125
    %v1288 = vunpack.c.h.b16 %v1125
    %v1289 = vunpack.c.l.b16 %v1126
    %v1290 = vunpack.c.h.b16 %v1126
    %v1291 = vunpack.c.l.b16 %v1127
    %v1292 = vunpack.c.h.b16 %v1127
    %v1293 = vunpack.c.l.b16 %v1128
    %v1294 = vunpack.c.h.b16 %v1128
    %v1295 = vunpack.c.l.b16 %v1129
    %v1296 = vunpack.c.h.b16 %v1129
    %v1297 = vunpack.c.l.b16 %v1130
    %v1298 = vunpack.c.h.b16 %v1130
    %v1299 = vunpack.c.l.b16 %v1131
    %v1300 = vunpack.c.h.b16 %v1131
    %v1301 = vunpack.c.l.b16 %v1132
    %v1302 = vunpack.c.h.b16 %v1132
    %v1303 = vunpack.c.l.b16 %v1133
    %v1304 = vunpack.c.h.b16 %v1133
    %v1305 = vunpack.c.l.b16 %v1134
    %v1306 = vunpack.c.h.b16 %v1134
    %v1307 = vunpack.c.l.b16 %v1135
    %v1308 = vunpack.c.h.b16 %v1135
    %v1309 = vunpack.c.l.b16 %v1136
    %v1310 = vunpack.c.h.b16 %v1136
    %v1311 = vunpack.c.l.b16 %v1137
    %v1312 = vunpack.c.h.b16 %v1137
    %v1313 = vunpack.c.l.b16 %v1138
    %v1314 = vunpack.c.h.b16 %v1138
    %v1315 = vpack.c.b16 %v1225, %v1219
    %v1316 = vpack.c.b16 %v1226, %v1220
    %v1317 = vpack.c.b16 %v1227, %v1221
    %v1318 = vpack.c.b16 %v1228, %v1222
    %v1319 = vpack.c.b16 %v1229, %v1223
    %v1320 = vpack.c.b16 %v1230, %v1224
    %v1321 = vpack.c.b16 %v1237, %v1231
    %v1322 = vpack.c.b16 %v1238, %v1232
    %v1323 = vpack.c.b16 %v1239, %v1233
    %v1324 = vpack.c.b16 %v1240, %v1234
    %v1325 = vpack.c.b16 %v1241, %v1235
    %v1326 = vpack.c.b16 %v1242, %v1236
    %v1327 = vpack.c.b16 %v1249, %v1243
    %v1328 = vpack.c.b16 %v1250, %v1244
    %v1329 = vpack.c.b16 %v1251, %v1245
    %v1330 = vpack.c.b16 %v1252, %v1246
    %v1331 = vpack.c.b16 %v1253, %v1247
    %v1332 = vpack.c.b16 %v1254, %v1248
    %v1333 = vpack.c.b16 %v1261, %v1255
    %v1334 = vpack.c.b16 %v1262, %v1256
    %v1335 = vpack.c.b16 %v1263, %v1257
    %v1336 = vpack.c.b16 %v1264, %v1258
    %v1337 = vpack.c.b16 %v1265, %v1259
    %v1338 = vpack.c.b16 %v1266, %v1260
    %v1339 = vpack.c.b16 %v1273, %v1267
    %v1340 = vpack.c.b16 %v1274, %v1268
    %v1341 = vpack.c.b16 %v1275, %v1269
    %v1342 = vpack.c.b16 %v1276, %v1270
    %v1343 = vpack.c.b16 %v1277, %v1271
    %v1344 = vpack.c.b16 %v1278, %v1272
    %v1345 = vpack.c.b16 %v1285, %v1279
    %v1346 = vpack.c.b16 %v1286, %v1280
    %v1347 = vpack.c.b16 %v1287, %v1281
    %v1348 = vpack.c.b16 %v1288, %v1282
    %v1349 = vpack.c.b16 %v1289, %v1283
    %v1350 = vpack.c.b16 %v1290, %v1284
    %v1351 = vpack.c.b16 %v1297, %v1291
    %v1352 = vpack.c.b16 %v1298, %v1292
    %v1353 = vpack.c.b16 %v1299, %v1293
    %v1354 = vpack.c.b16 %v1300, %v1294
    %v1355 = vpack.c.b16 %v1301, %v1295
    %v1356 = vpack.c.b16 %v1302, %v1296
    %v1357 = vpack.c.b16 %v1309, %v1303
    %v1358 = vpack.c.b16 %v1310, %v1304
    %v1359 = vpack.c.b16 %v1311, %v1305
    %v1360 = vpack.c.b16 %v1312, %v1306
    %v1361 = vpack.c.b16 %v1313, %v1307
    %v1362 = vpack.c.b16 %v1314, %v1308
    %1411 = vmatprep.subr.bf16.mxu0 %v1358
    %1412 = vmatpush1.bf16.msra.mxu0 %v1357
    %1413 = vmatprep.subr.bf16.mxu0 %v1352
    %1414 = vmatpush1.bf16.msra.mxu0 %v1351
    %1415 = vmatprep.subr.bf16.mxu0 %v1346
    %1416 = vmatpush1.bf16.msra.mxu0 %v1345
    %1417 = vmatprep.subr.bf16.mxu0 %v1340
    %1418 = vmatpush1.bf16.msra.mxu0 %v1339
    %1419 = vmatprep.subr.bf16.mxu0 %v1334
    %1420 = vmatpush1.bf16.msra.mxu0 %v1333
    %1421 = vmatprep.subr.bf16.mxu0 %v1328
    %1422 = vmatpush1.bf16.msra.mxu0 %v1327
    %1423 = vmatprep.subr.bf16.mxu0 %v1322
    %1424 = vmatpush1.bf16.msra.mxu0 %v1321
    %1425 = vmatprep.subr.bf16.mxu0 %v1316
    %1426 = vmatpush1.bf16.msra.mxu0 %v1315
    %1427 = vmatprep.subr.bf16.mxu0 0
    %1428 = vmatpush2.bf16.msra.mxu0 0
    %1429 = vmatprep.subr.bf16.mxu0 0
    %1430 = vmatpush2.bf16.msra.mxu0 0
    %1431 = vmatprep.subr.bf16.mxu0 0
    %1432 = vmatpush2.bf16.msra.mxu0 0
    %1433 = vmatprep.subr.bf16.mxu0 0
    %1434 = vmatpush2.bf16.msra.mxu0 0
    %1435 = vmatprep.subr.bf16.mxu0 0
    %1436 = vmatpush2.bf16.msra.mxu0 0
    %1437 = vmatprep.subr.bf16.mxu0 0
    %1438 = vmatpush2.bf16.msra.mxu0 0
    %1439 = vmatprep.subr.bf16.mxu0 0
    %1440 = vmatpush2.bf16.msra.mxu0 0
    %1441 = vmatprep.subr.bf16.mxu0 0
    %1442 = vmatpush2.bf16.msra.mxu0 0
    %1443 = vmatprep.mubr.bf16.mxu0 0
    %1444 = vmatmul.mubr.bf16.gmra.mxu0 %v1090
    %v1445 = vpop.f32.mrf.mxu0
    %v1446 = vadd.f32 %v1144, %v1445
    %v1447 = vpop.f32.mrf.mxu0
    %v1448 = vadd.f32 %v1148, %v1447
    %v1449 = vpop.f32.mrf.mxu0
    %v1450 = vpop.f32.mrf.mxu0
    %1451 = vdwg.mxu0
    %1452 = vmatprep.subr.bf16.mxu0 %v1360
    %1453 = vmatpush1.bf16.msra.mxu0 %v1359
    %1454 = vmatprep.subr.bf16.mxu0 %v1354
    %1455 = vmatpush1.bf16.msra.mxu0 %v1353
    %1456 = vmatprep.subr.bf16.mxu0 %v1348
    %1457 = vmatpush1.bf16.msra.mxu0 %v1347
    %1458 = vmatprep.subr.bf16.mxu0 %v1342
    %1459 = vmatpush1.bf16.msra.mxu0 %v1341
    %1460 = vmatprep.subr.bf16.mxu0 %v1336
    %1461 = vmatpush1.bf16.msra.mxu0 %v1335
    %1462 = vmatprep.subr.bf16.mxu0 %v1330
    %1463 = vmatpush1.bf16.msra.mxu0 %v1329
    %1464 = vmatprep.subr.bf16.mxu0 %v1324
    %1465 = vmatpush1.bf16.msra.mxu0 %v1323
    %1466 = vmatprep.subr.bf16.mxu0 %v1318
    %1467 = vmatpush1.bf16.msra.mxu0 %v1317
    %1468 = vmatprep.subr.bf16.mxu0 0
    %1469 = vmatpush2.bf16.msra.mxu0 0
    %1470 = vmatprep.subr.bf16.mxu0 0
    %1471 = vmatpush2.bf16.msra.mxu0 0
    %1472 = vmatprep.subr.bf16.mxu0 0
    %1473 = vmatpush2.bf16.msra.mxu0 0
    %1474 = vmatprep.subr.bf16.mxu0 0
    %1475 = vmatpush2.bf16.msra.mxu0 0
    %1476 = vmatprep.subr.bf16.mxu0 0
    %1477 = vmatpush2.bf16.msra.mxu0 0
    %1478 = vmatprep.subr.bf16.mxu0 0
    %1479 = vmatpush2.bf16.msra.mxu0 0
    %1480 = vmatprep.subr.bf16.mxu0 0
    %1481 = vmatpush2.bf16.msra.mxu0 0
    %1482 = vmatprep.subr.bf16.mxu0 0
    %1483 = vmatpush2.bf16.msra.mxu0 0
    %1484 = vmatprep.mubr.bf16.mxu0 0
    %1485 = vmatmul.mubr.bf16.gmra.mxu0 %v1090
    %v1486 = vpop.f32.mrf.mxu0
    %v1487 = vadd.f32 %v1152, %v1486
    %v1488 = vpop.f32.mrf.mxu0
    %v1489 = vadd.f32 %v1156, %v1488
    %v1490 = vpop.f32.mrf.mxu0
    %v1491 = vpop.f32.mrf.mxu0
    %1492 = vdwg.mxu0
    %1493 = vmatprep.subr.bf16.mxu0 %v1362
    %1494 = vmatpush1.bf16.msra.mxu0 %v1361
    %1495 = vmatprep.subr.bf16.mxu0 %v1356
    %1496 = vmatpush1.bf16.msra.mxu0 %v1355
    %1497 = vmatprep.subr.bf16.mxu0 %v1350
    %1498 = vmatpush1.bf16.msra.mxu0 %v1349
    %1499 = vmatprep.subr.bf16.mxu0 %v1344
    %1500 = vmatpush1.bf16.msra.mxu0 %v1343
    %1501 = vmatprep.subr.bf16.mxu0 %v1338
    %1502 = vmatpush1.bf16.msra.mxu0 %v1337
    %1503 = vmatprep.subr.bf16.mxu0 %v1332
    %1504 = vmatpush1.bf16.msra.mxu0 %v1331
    %1505 = vmatprep.subr.bf16.mxu0 %v1326
    %1506 = vmatpush1.bf16.msra.mxu0 %v1325
    %1507 = vmatprep.subr.bf16.mxu0 %v1320
    %1508 = vmatpush1.bf16.msra.mxu0 %v1319
    %1509 = vmatprep.subr.bf16.mxu0 0
    %1510 = vmatpush2.bf16.msra.mxu0 0
    %1511 = vmatprep.subr.bf16.mxu0 0
    %1512 = vmatpush2.bf16.msra.mxu0 0
    %1513 = vmatprep.subr.bf16.mxu0 0
    %1514 = vmatpush2.bf16.msra.mxu0 0
    %1515 = vmatprep.subr.bf16.mxu0 0
    %1516 = vmatpush2.bf16.msra.mxu0 0
    %1517 = vmatprep.subr.bf16.mxu0 0
    %1518 = vmatpush2.bf16.msra.mxu0 0
    %1519 = vmatprep.subr.bf16.mxu0 0
    %1520 = vmatpush2.bf16.msra.mxu0 0
    %1521 = vmatprep.subr.bf16.mxu0 0
    %1522 = vmatpush2.bf16.msra.mxu0 0
    %1523 = vmatprep.subr.bf16.mxu0 0
    %1524 = vmatpush2.bf16.msra.mxu0 0
    %1525 = vmatprep.mubr.bf16.mxu0 0
    %1526 = vmatmul.mubr.bf16.gmra.mxu0 %v1090
    %v1527 = vpop.f32.mrf.mxu0
    %v1528 = vadd.f32 %v1160, %v1527
    %v1529 = vpop.f32.mrf.mxu0
    %v1530 = vadd.f32 %v1164, %v1529
    %v1531 = vpop.f32.mrf.mxu0
    %v1532 = vpop.f32.mrf.mxu0
    %1533 = vdwg.mxu0
    %v1534 = vxor.u32 %v1446, 2147483648
    %v1535 = vxor.u32 %v1448, 2147483648
    %v1536 = vmul.f32 %v1534, 1.442695
    %v1537 = vpow.pop %v1536
    %v1538 = vmul.f32 %v1535, 1.442695
    %v1539 = vpow.pop %v1538
    %v1540 = vadd.f32 %v1537, 1.0
    %v1541 = vadd.f32 %v1539, 1.0
    %v1542 = vrcp.pop %v1540
    %v1543 = vmul.f32 1.0, %v1542
    %v1544 = vrcp.pop %v1541
    %v1545 = vmul.f32 1.0, %v1544
    %v1546 = vtanh.pop %v1487
    %v1547 = vtanh.pop %v1489
    %v1548 = vxor.u32 %v1528, 2147483648
    %v1549 = vxor.u32 %v1530, 2147483648
    %v1550 = vmul.f32 %v1548, 1.442695
    %v1551 = vpow.pop %v1550
    %v1552 = vmul.f32 %v1549, 1.442695
    %v1553 = vpow.pop %v1552
    %v1554 = vadd.f32 %v1551, 1.0
    %v1555 = vadd.f32 %v1553, 1.0
    %v1556 = vrcp.pop %v1554
    %v1557 = vmul.f32 1.0, %v1556
    %v1558 = vrcp.pop %v1555
    %v1559 = vmul.f32 1.0, %v1558
    %v1560 = vmul.f32 %v1543, %v1546
    %v1561 = vmul.f32 %v1545, %v1547
    %v1562 = vtanh.pop %v1560
    %v1563 = vtanh.pop %v1561
    %v1564 = vmul.f32 %v1557, %v1562
    %v1565 = vmul.f32 %v1559, %v1563
    %v1566 = vld [vmem:[%s5] sm:$0x3]
    %v1568 = vlaneseq
    %v1569 = vshrl.u32 %v1568, 7
    %v1570 = vsub.s32 0, %v1569
    %v1571 = vrot.slane %v1566, %v1570
    %v1572 = vlaneseq
    %v1573 = vshrl.u32 %v1572, 7
    %v1574 = vsub.s32 1, %v1573
    %v1575 = vrot.slane %v1566, %v1574
    %v1576 = vcombine.low %v1571, %v1575
    %v1578 = vunpack.c.l.s4 1983009808
    %v1579 = vunpack.c.0.s8 %v1578
    %v1580 = vlaneseq
    %v1581 = vshrl.u32 %v1580, 7
    %v1582 = vsub.s32 %v1579, %v1581
    %v1583 = vrot.slane %v1576, %v1582
    %v1585 = vmul.f32 %v189, %v1583
    %v1586 = vld [vmem:[%s6] sm:$0x3]
    %v1588 = vlaneseq
    %v1589 = vshrl.u32 %v1588, 7
    %v1590 = vsub.s32 0, %v1589
    %v1591 = vrot.slane %v1586, %v1590
    %v1592 = vlaneseq
    %v1593 = vshrl.u32 %v1592, 7
    %v1594 = vsub.s32 1, %v1593
    %v1595 = vrot.slane %v1586, %v1594
    %v1596 = vcombine.low %v1591, %v1595
    %v1598 = vunpack.c.l.s4 1983009808
    %v1599 = vunpack.c.0.s8 %v1598
    %v1600 = vlaneseq
    %v1601 = vshrl.u32 %v1600, 7
    %v1602 = vsub.s32 %v1599, %v1601
    %v1603 = vrot.slane %v1596, %v1602
    %v1605 = vadd.f32 %v1585, %v1603
    %v1606 = vld [vmem:[%s7] sm:$0x3]
    %v1608 = vlaneseq
    %v1609 = vshrl.u32 %v1608, 7
    %v1610 = vsub.s32 0, %v1609
    %v1611 = vrot.slane %v1606, %v1610
    %v1612 = vlaneseq
    %v1613 = vshrl.u32 %v1612, 7
    %v1614 = vsub.s32 1, %v1613
    %v1615 = vrot.slane %v1606, %v1614
    %v1618 = vmul.f32 %v1564, %v1611
    %v1619 = vmul.f32 %v1565, %v1615
    %v1620 = vld [vmem:[%s8] sm:$0x3]
    %v1622 = vlaneseq
    %v1623 = vshrl.u32 %v1622, 7
    %v1624 = vsub.s32 0, %v1623
    %v1625 = vrot.slane %v1620, %v1624
    %v1626 = vlaneseq
    %v1627 = vshrl.u32 %v1626, 7
    %v1628 = vsub.s32 1, %v1627
    %v1629 = vrot.slane %v1620, %v1628
    %v1632 = vadd.f32 %v1618, %v1625
    %v1633 = vadd.f32 %v1619, %v1629
    %v1636 = vunpack.c.l.s4 1983009808
    %v1637 = vunpack.c.0.s8 %v1636
    %v1638 = vlaneseq
    %v1639 = vshrl.u32 %v1638, 7
    %v1640 = vsub.s32 %v1637, %v1639
    %v1641 = vrot.slane %v1605, %v1640
    %v1642 = vcombine.high %v1641, %v1641
    %v1645 = vpack.c.bf16 %v1641, %v1641
    %v1646 = vpack.c.bf16 %v1642, %v1642
    %v1647 = vld [vmem:[%s9] sm:$0xf]
    %v1648 = vld [vmem:[%s9 + $0x4] sm:$0xf]
    %v1649 = vld [vmem:[%s9 + $0x8] sm:$0xf]
    %v1650 = vld [vmem:[%s9 + $0xc] sm:$0xf]
    %v1651 = vld [vmem:[%s9 + $0x10] sm:$0xf]
    %v1652 = vld [vmem:[%s9 + $0x14] sm:$0xf]
    %v1653 = vld [vmem:[%s9 + $0x18] sm:$0xf]
    %v1654 = vld [vmem:[%s9 + $0x1c] sm:$0xf]
    %v1655 = vld [vmem:[%s9 + $0x20] sm:$0xf]
    %v1656 = vld [vmem:[%s9 + $0x24] sm:$0xf]
    %v1657 = vld [vmem:[%s9 + $0x28] sm:$0xf]
    %v1658 = vld [vmem:[%s9 + $0x2c] sm:$0xf]
    %v1659 = vld [vmem:[%s9 + $0x30] sm:$0xf]
    %v1660 = vld [vmem:[%s9 + $0x34] sm:$0xf]
    %v1661 = vld [vmem:[%s9 + $0x38] sm:$0xf]
    %v1662 = vld [vmem:[%s9 + $0x3c] sm:$0xf]
    %v1663 = vld [vmem:[%s9 + $0x40] sm:$0xf]
    %v1664 = vld [vmem:[%s9 + $0x44] sm:$0xf]
    %v1665 = vld [vmem:[%s9 + $0x48] sm:$0xf]
    %v1666 = vld [vmem:[%s9 + $0x4c] sm:$0xf]
    %v1667 = vld [vmem:[%s9 + $0x50] sm:$0xf]
    %v1668 = vld [vmem:[%s9 + $0x54] sm:$0xf]
    %v1669 = vld [vmem:[%s9 + $0x58] sm:$0xf]
    %v1670 = vld [vmem:[%s9 + $0x5c] sm:$0xf]
    %v1671 = vld [vmem:[%s9 + $0x60] sm:$0xf]
    %v1672 = vld [vmem:[%s9 + $0x64] sm:$0xf]
    %v1673 = vld [vmem:[%s9 + $0x68] sm:$0xf]
    %v1674 = vld [vmem:[%s9 + $0x6c] sm:$0xf]
    %v1675 = vld [vmem:[%s9 + $0x70] sm:$0xf]
    %v1676 = vld [vmem:[%s9 + $0x74] sm:$0xf]
    %v1677 = vld [vmem:[%s9 + $0x78] sm:$0xf]
    %v1678 = vld [vmem:[%s9 + $0x7c] sm:$0xf]
    %v1679 = vpack.c.bf16 %v1632, %v1632
    %v1680 = vpack.c.bf16 %v1633, %v1633
    %v1681 = vld [vmem:[%s10] sm:$0xf]
    %v1682 = vld [vmem:[%s10 + $0x4] sm:$0xf]
    %v1683 = vld [vmem:[%s10 + $0x8] sm:$0xf]
    %v1684 = vld [vmem:[%s10 + $0xc] sm:$0xf]
    %v1685 = vld [vmem:[%s10 + $0x10] sm:$0xf]
    %v1686 = vld [vmem:[%s10 + $0x14] sm:$0xf]
    %v1687 = vld [vmem:[%s10 + $0x18] sm:$0xf]
    %v1688 = vld [vmem:[%s10 + $0x1c] sm:$0xf]
    %v1689 = vld [vmem:[%s10 + $0x20] sm:$0xf]
    %v1690 = vld [vmem:[%s10 + $0x24] sm:$0xf]
    %v1691 = vld [vmem:[%s10 + $0x28] sm:$0xf]
    %v1692 = vld [vmem:[%s10 + $0x2c] sm:$0xf]
    %v1693 = vld [vmem:[%s10 + $0x30] sm:$0xf]
    %v1694 = vld [vmem:[%s10 + $0x34] sm:$0xf]
    %v1695 = vld [vmem:[%s10 + $0x38] sm:$0xf]
    %v1696 = vld [vmem:[%s10 + $0x3c] sm:$0xf]
    %v1697 = vld [vmem:[%s10 + $0x40] sm:$0xf]
    %v1698 = vld [vmem:[%s10 + $0x44] sm:$0xf]
    %v1699 = vld [vmem:[%s10 + $0x48] sm:$0xf]
    %v1700 = vld [vmem:[%s10 + $0x4c] sm:$0xf]
    %v1701 = vld [vmem:[%s10 + $0x50] sm:$0xf]
    %v1702 = vld [vmem:[%s10 + $0x54] sm:$0xf]
    %v1703 = vld [vmem:[%s10 + $0x58] sm:$0xf]
    %v1704 = vld [vmem:[%s10 + $0x5c] sm:$0xf]
    %v1705 = vld [vmem:[%s10 + $0x60] sm:$0xf]
    %v1706 = vld [vmem:[%s10 + $0x64] sm:$0xf]
    %v1707 = vld [vmem:[%s10 + $0x68] sm:$0xf]
    %v1708 = vld [vmem:[%s10 + $0x6c] sm:$0xf]
    %v1709 = vld [vmem:[%s10 + $0x70] sm:$0xf]
    %v1710 = vld [vmem:[%s10 + $0x74] sm:$0xf]
    %v1711 = vld [vmem:[%s10 + $0x78] sm:$0xf]
    %v1712 = vld [vmem:[%s10 + $0x7c] sm:$0xf]
    %v1745 = vunpack.c.l.b16 %v1681
    %v1746 = vunpack.c.l.b16 %v1682
    %v1747 = vunpack.c.l.b16 %v1683
    %v1748 = vunpack.c.l.b16 %v1684
    %v1749 = vunpack.c.l.b16 %v1685
    %v1750 = vunpack.c.l.b16 %v1686
    %v1751 = vunpack.c.l.b16 %v1687
    %v1752 = vunpack.c.l.b16 %v1688
    %v1753 = vunpack.c.l.b16 %v1689
    %v1754 = vunpack.c.l.b16 %v1690
    %v1755 = vunpack.c.l.b16 %v1691
    %v1756 = vunpack.c.l.b16 %v1692
    %v1757 = vunpack.c.l.b16 %v1693
    %v1758 = vunpack.c.l.b16 %v1694
    %v1759 = vunpack.c.l.b16 %v1695
    %v1760 = vunpack.c.l.b16 %v1696
    %v1761 = vunpack.c.l.b16 %v1697
    %v1762 = vunpack.c.l.b16 %v1698
    %v1763 = vunpack.c.l.b16 %v1699
    %v1764 = vunpack.c.l.b16 %v1700
    %v1765 = vunpack.c.l.b16 %v1701
    %v1766 = vunpack.c.l.b16 %v1702
    %v1767 = vunpack.c.l.b16 %v1703
    %v1768 = vunpack.c.l.b16 %v1704
    %v1769 = vunpack.c.l.b16 %v1705
    %v1770 = vunpack.c.l.b16 %v1706
    %v1771 = vunpack.c.l.b16 %v1707
    %v1772 = vunpack.c.l.b16 %v1708
    %v1773 = vunpack.c.l.b16 %v1709
    %v1774 = vunpack.c.l.b16 %v1710
    %v1775 = vunpack.c.l.b16 %v1711
    %v1776 = vunpack.c.l.b16 %v1712
    %v1777 = vpack.c.b16 %v1746, %v1745
    %v1778 = vpack.c.b16 %v1748, %v1747
    %v1779 = vpack.c.b16 %v1750, %v1749
    %v1780 = vpack.c.b16 %v1752, %v1751
    %v1781 = vpack.c.b16 %v1754, %v1753
    %v1782 = vpack.c.b16 %v1756, %v1755
    %v1783 = vpack.c.b16 %v1758, %v1757
    %v1784 = vpack.c.b16 %v1760, %v1759
    %v1785 = vpack.c.b16 %v1762, %v1761
    %v1786 = vpack.c.b16 %v1764, %v1763
    %v1787 = vpack.c.b16 %v1766, %v1765
    %v1788 = vpack.c.b16 %v1768, %v1767
    %v1789 = vpack.c.b16 %v1770, %v1769
    %v1790 = vpack.c.b16 %v1772, %v1771
    %v1791 = vpack.c.b16 %v1774, %v1773
    %v1792 = vpack.c.b16 %v1776, %v1775
    %1809 = vmatprep.subr.bf16.mxu0 0
    %1810 = vmatpush1.bf16.msra.mxu0 %v1784
    %1811 = vmatprep.subr.bf16.mxu0 0
    %1812 = vmatpush1.bf16.msra.mxu0 %v1783
    %1813 = vmatprep.subr.bf16.mxu0 0
    %1814 = vmatpush1.bf16.msra.mxu0 %v1782
    %1815 = vmatprep.subr.bf16.mxu0 0
    %1816 = vmatpush1.bf16.msra.mxu0 %v1781
    %1817 = vmatprep.subr.bf16.mxu0 0
    %1818 = vmatpush1.bf16.msra.mxu0 %v1780
    %1819 = vmatprep.subr.bf16.mxu0 0
    %1820 = vmatpush1.bf16.msra.mxu0 %v1779
    %1821 = vmatprep.subr.bf16.mxu0 0
    %1822 = vmatpush1.bf16.msra.mxu0 %v1778
    %1823 = vmatprep.subr.bf16.mxu0 0
    %1824 = vmatpush1.bf16.msra.mxu0 %v1777
    %1825 = vmatprep.subr.bf16.mxu0 0
    %1826 = vmatpush2.bf16.msra.mxu0 %v1792
    %1827 = vmatprep.subr.bf16.mxu0 0
    %1828 = vmatpush2.bf16.msra.mxu0 %v1791
    %1829 = vmatprep.subr.bf16.mxu0 0
    %1830 = vmatpush2.bf16.msra.mxu0 %v1790
    %1831 = vmatprep.subr.bf16.mxu0 0
    %1832 = vmatpush2.bf16.msra.mxu0 %v1789
    %1833 = vmatprep.subr.bf16.mxu0 0
    %1834 = vmatpush2.bf16.msra.mxu0 %v1788
    %1835 = vmatprep.subr.bf16.mxu0 0
    %1836 = vmatpush2.bf16.msra.mxu0 %v1787
    %1837 = vmatprep.subr.bf16.mxu0 0
    %1838 = vmatpush2.bf16.msra.mxu0 %v1786
    %1839 = vmatprep.subr.bf16.mxu0 0
    %1840 = vmatpush2.bf16.msra.mxu0 %v1785
    %1841 = vmatprep.mubr.bf16.mxu0 %v1680
    %1842 = vmatmul.mubr.bf16.gmra.mxu0 %v1679
    %v1843 = vpop.f32.mrf.mxu0
    %v1844 = vadd.f32 0.0, %v1843
    %v1845 = vpop.f32.mrf.mxu0
    %v1846 = vpop.f32.mrf.mxu0
    %v1847 = vpop.f32.mrf.mxu0
    %1848 = vdwg.mxu0
    %v1881 = vunpack.c.l.b16 %v1647
    %v1882 = vunpack.c.l.b16 %v1648
    %v1883 = vunpack.c.l.b16 %v1649
    %v1884 = vunpack.c.l.b16 %v1650
    %v1885 = vunpack.c.l.b16 %v1651
    %v1886 = vunpack.c.l.b16 %v1652
    %v1887 = vunpack.c.l.b16 %v1653
    %v1888 = vunpack.c.l.b16 %v1654
    %v1889 = vunpack.c.l.b16 %v1655
    %v1890 = vunpack.c.l.b16 %v1656
    %v1891 = vunpack.c.l.b16 %v1657
    %v1892 = vunpack.c.l.b16 %v1658
    %v1893 = vunpack.c.l.b16 %v1659
    %v1894 = vunpack.c.l.b16 %v1660
    %v1895 = vunpack.c.l.b16 %v1661
    %v1896 = vunpack.c.l.b16 %v1662
    %v1897 = vunpack.c.l.b16 %v1663
    %v1898 = vunpack.c.l.b16 %v1664
    %v1899 = vunpack.c.l.b16 %v1665
    %v1900 = vunpack.c.l.b16 %v1666
    %v1901 = vunpack.c.l.b16 %v1667
    %v1902 = vunpack.c.l.b16 %v1668
    %v1903 = vunpack.c.l.b16 %v1669
    %v1904 = vunpack.c.l.b16 %v1670
    %v1905 = vunpack.c.l.b16 %v1671
    %v1906 = vunpack.c.l.b16 %v1672
    %v1907 = vunpack.c.l.b16 %v1673
    %v1908 = vunpack.c.l.b16 %v1674
    %v1909 = vunpack.c.l.b16 %v1675
    %v1910 = vunpack.c.l.b16 %v1676
    %v1911 = vunpack.c.l.b16 %v1677
    %v1912 = vunpack.c.l.b16 %v1678
    %v1913 = vpack.c.b16 %v1882, %v1881
    %v1914 = vpack.c.b16 %v1884, %v1883
    %v1915 = vpack.c.b16 %v1886, %v1885
    %v1916 = vpack.c.b16 %v1888, %v1887
    %v1917 = vpack.c.b16 %v1890, %v1889
    %v1918 = vpack.c.b16 %v1892, %v1891
    %v1919 = vpack.c.b16 %v1894, %v1893
    %v1920 = vpack.c.b16 %v1896, %v1895
    %v1921 = vpack.c.b16 %v1898, %v1897
    %v1922 = vpack.c.b16 %v1900, %v1899
    %v1923 = vpack.c.b16 %v1902, %v1901
    %v1924 = vpack.c.b16 %v1904, %v1903
    %v1925 = vpack.c.b16 %v1906, %v1905
    %v1926 = vpack.c.b16 %v1908, %v1907
    %v1927 = vpack.c.b16 %v1910, %v1909
    %v1928 = vpack.c.b16 %v1912, %v1911
    %1945 = vmatprep.subr.bf16.mxu0 0
    %1946 = vmatpush1.bf16.msra.mxu0 %v1920
    %1947 = vmatprep.subr.bf16.mxu0 0
    %1948 = vmatpush1.bf16.msra.mxu0 %v1919
    %1949 = vmatprep.subr.bf16.mxu0 0
    %1950 = vmatpush1.bf16.msra.mxu0 %v1918
    %1951 = vmatprep.subr.bf16.mxu0 0
    %1952 = vmatpush1.bf16.msra.mxu0 %v1917
    %1953 = vmatprep.subr.bf16.mxu0 0
    %1954 = vmatpush1.bf16.msra.mxu0 %v1916
    %1955 = vmatprep.subr.bf16.mxu0 0
    %1956 = vmatpush1.bf16.msra.mxu0 %v1915
    %1957 = vmatprep.subr.bf16.mxu0 0
    %1958 = vmatpush1.bf16.msra.mxu0 %v1914
    %1959 = vmatprep.subr.bf16.mxu0 0
    %1960 = vmatpush1.bf16.msra.mxu0 %v1913
    %1961 = vmatprep.subr.bf16.mxu0 0
    %1962 = vmatpush2.bf16.msra.mxu0 %v1928
    %1963 = vmatprep.subr.bf16.mxu0 0
    %1964 = vmatpush2.bf16.msra.mxu0 %v1927
    %1965 = vmatprep.subr.bf16.mxu0 0
    %1966 = vmatpush2.bf16.msra.mxu0 %v1926
    %1967 = vmatprep.subr.bf16.mxu0 0
    %1968 = vmatpush2.bf16.msra.mxu0 %v1925
    %1969 = vmatprep.subr.bf16.mxu0 0
    %1970 = vmatpush2.bf16.msra.mxu0 %v1924
    %1971 = vmatprep.subr.bf16.mxu0 0
    %1972 = vmatpush2.bf16.msra.mxu0 %v1923
    %1973 = vmatprep.subr.bf16.mxu0 0
    %1974 = vmatpush2.bf16.msra.mxu0 %v1922
    %1975 = vmatprep.subr.bf16.mxu0 0
    %1976 = vmatpush2.bf16.msra.mxu0 %v1921
    %1977 = vmatprep.mubr.bf16.mxu0 %v1646
    %1978 = vmatmul.mubr.bf16.gmra.mxu0 %v1645
    %v1979 = vpop.f32.mrf.mxu0
    %v1980 = vadd.f32 %v1844, %v1979
    %v1981 = vpop.f32.mrf.mxu0
    %v1982 = vpop.f32.mrf.mxu0
    %v1983 = vpop.f32.mrf.mxu0
    %1984 = vdwg.mxu0
    %v1985 = vld [vmem:[%s11] sm:$0x1]
    %v1987 = vlaneseq
    %v1988 = vshrl.u32 %v1987, 7
    %v1989 = vsub.s32 0, %v1988
    %v1990 = vrot.slane %v1985, %v1989
    %v1992 = vadd.f32 %v1980, %v1990
    %v1993 = vld [vmem:[%s12] sm:$0x1]
    %v1995 = vlaneseq
    %v1996 = vshrl.u32 %v1995, 7
    %v1997 = vsub.s32 0, %v1996
    %v1998 = vrot.slane %v1993, %v1997
    %v2000 = vmul.f32 %v1992, %v1998
    %v2001 = vld [vmem:[%s13] sm:$0x1]
    %v2003 = vlaneseq
    %v2004 = vshrl.u32 %v2003, 7
    %v2005 = vsub.s32 0, %v2004
    %v2006 = vrot.slane %v2001, %v2005
    %v2008 = vadd.f32 %v2000, %v2006
    %v2009 = vmax.f32 %v2008, 0.0
    %v2010 = vpack.c.bf16 %v2009, %v2009
    %v2011 = vld [vmem:[%s14] sm:$0xf]
    %v2012 = vld [vmem:[%s14 + $0x4] sm:$0xf]
    %v2013 = vld [vmem:[%s14 + $0x8] sm:$0xf]
    %v2014 = vld [vmem:[%s14 + $0xc] sm:$0xf]
    %v2015 = vld [vmem:[%s14 + $0x10] sm:$0xf]
    %v2016 = vld [vmem:[%s14 + $0x14] sm:$0xf]
    %v2017 = vld [vmem:[%s14 + $0x18] sm:$0xf]
    %v2018 = vld [vmem:[%s14 + $0x1c] sm:$0xf]
    %v2019 = vld [vmem:[%s14 + $0x20] sm:$0xf]
    %v2020 = vld [vmem:[%s14 + $0x24] sm:$0xf]
    %v2021 = vld [vmem:[%s14 + $0x28] sm:$0xf]
    %v2022 = vld [vmem:[%s14 + $0x2c] sm:$0xf]
    %v2023 = vld [vmem:[%s14 + $0x30] sm:$0xf]
    %v2024 = vld [vmem:[%s14 + $0x34] sm:$0xf]
    %v2025 = vld [vmem:[%s14 + $0x38] sm:$0xf]
    %v2026 = vld [vmem:[%s14 + $0x3c] sm:$0xf]
    %v2027 = vld [vmem:[%s15] sm:$0x1]
    %v2029 = vlaneseq
    %v2030 = vshrl.u32 %v2029, 7
    %v2031 = vsub.s32 0, %v2030
    %v2032 = vrot.slane %v2027, %v2031
    %v2050 = vunpack.c.l.b16 %v2011
    %v2051 = vunpack.c.l.b16 %v2012
    %v2052 = vunpack.c.l.b16 %v2013
    %v2053 = vunpack.c.l.b16 %v2014
    %v2054 = vunpack.c.l.b16 %v2015
    %v2055 = vunpack.c.l.b16 %v2016
    %v2056 = vunpack.c.l.b16 %v2017
    %v2057 = vunpack.c.l.b16 %v2018
    %v2058 = vunpack.c.l.b16 %v2019
    %v2059 = vunpack.c.l.b16 %v2020
    %v2060 = vunpack.c.l.b16 %v2021
    %v2061 = vunpack.c.l.b16 %v2022
    %v2062 = vunpack.c.l.b16 %v2023
    %v2063 = vunpack.c.l.b16 %v2024
    %v2064 = vunpack.c.l.b16 %v2025
    %v2065 = vunpack.c.l.b16 %v2026
    %v2066 = vpack.c.b16 %v2051, %v2050
    %v2067 = vpack.c.b16 %v2053, %v2052
    %v2068 = vpack.c.b16 %v2055, %v2054
    %v2069 = vpack.c.b16 %v2057, %v2056
    %v2070 = vpack.c.b16 %v2059, %v2058
    %v2071 = vpack.c.b16 %v2061, %v2060
    %v2072 = vpack.c.b16 %v2063, %v2062
    %v2073 = vpack.c.b16 %v2065, %v2064
    %2082 = vmatprep.subr.bf16.mxu0 0
    %2083 = vmatpush1.bf16.msra.mxu0 %v2073
    %2084 = vmatprep.subr.bf16.mxu0 0
    %2085 = vmatpush1.bf16.msra.mxu0 %v2072
    %2086 = vmatprep.subr.bf16.mxu0 0
    %2087 = vmatpush1.bf16.msra.mxu0 %v2071
    %2088 = vmatprep.subr.bf16.mxu0 0
    %2089 = vmatpush1.bf16.msra.mxu0 %v2070
    %2090 = vmatprep.subr.bf16.mxu0 0
    %2091 = vmatpush1.bf16.msra.mxu0 %v2069
    %2092 = vmatprep.subr.bf16.mxu0 0
    %2093 = vmatpush1.bf16.msra.mxu0 %v2068
    %2094 = vmatprep.subr.bf16.mxu0 0
    %2095 = vmatpush1.bf16.msra.mxu0 %v2067
    %2096 = vmatprep.subr.bf16.mxu0 0
    %2097 = vmatpush1.bf16.msra.mxu0 %v2066
    %2098 = vmatprep.subr.bf16.mxu0 0
    %2099 = vmatpush2.bf16.msra.mxu0 0
    %2100 = vmatprep.subr.bf16.mxu0 0
    %2101 = vmatpush2.bf16.msra.mxu0 0
    %2102 = vmatprep.subr.bf16.mxu0 0
    %2103 = vmatpush2.bf16.msra.mxu0 0
    %2104 = vmatprep.subr.bf16.mxu0 0
    %2105 = vmatpush2.bf16.msra.mxu0 0
    %2106 = vmatprep.subr.bf16.mxu0 0
    %2107 = vmatpush2.bf16.msra.mxu0 0
    %2108 = vmatprep.subr.bf16.mxu0 0
    %2109 = vmatpush2.bf16.msra.mxu0 0
    %2110 = vmatprep.subr.bf16.mxu0 0
    %2111 = vmatpush2.bf16.msra.mxu0 0
    %2112 = vmatprep.subr.bf16.mxu0 0
    %2113 = vmatpush2.bf16.msra.mxu0 0
    %2114 = vmatprep.mubr.bf16.mxu0 0
    %2115 = vmatmul.mubr.bf16.gmra.mxu0 %v2010
    %v2116 = vpop.f32.mrf.mxu0
    %v2117 = vadd.f32 %v2032, %v2116
    %v2118 = vpop.f32.mrf.mxu0
    %v2119 = vpop.f32.mrf.mxu0
    %v2120 = vpop.f32.mrf.mxu0
    %2121 = vdwg.mxu0
    %vm2122 = vcmask 1041408
    %v2123 = vsel %vm2122, %v2117, -inf
    %2124 = vmax.xlane.f32.xlu0 %v2123
    %v2125 = vpop.xlane.xlu0 %2124
    %v2126 = vsub.f32 %v2117, %v2125
    %v2127 = vmul.f32 %v2126, 1.442695
    %v2128 = vpow.pop %v2127
    %v2129 = vsel %vm2122, %v2128, 0.0
    %2130 = vadd.xlane.f32.xlu0 %v2129
    %v2131 = vpop.xlane.xlu0 %2130
    %v2132 = vrcp.pop %v2131
    %v2133 = vmul.f32 %v2128, %v2132
    %2134 = vst [vmem:[#allocation2] sm:$0x3] %v2133
    // Predicated region
    $region73: #{forward.3} parent=1 // pred_check
      _
    $region74: #{forward.3} parent=1 // pred_check_branch
      %2136 = sbr.rel (0) target = $region76
    $region75: #{forward.3} parent=1 // pred_region
      %s2138 = ssub.s32 32, 32
      %2139 = vsyncadd [#allocation3], %s2138
      %s2141 = sshll.u32 [#allocation2], 4
      %s2142 = int_to_ptr.vmem [resolvable:$true] %s2141
      %2144 = dma.vmem_to_hbm [thread:$0]  %s2142, 32, %s16, [#allocation3]
    $region76: #{forward.3} parent=1 // pred_fallthru
      _
    // Predicated region
    $region77: #{forward.3} parent=1 // pred_check
      _
    $region78: #{forward.3} parent=1 // pred_check_branch
      %2146 = sbr.rel (0) target = $region80
    $region79: #{forward.3} parent=1 // pred_region
      %2147 = dma.done [#allocation3], 32
    $region80: #{forward.3} parent=1 // pred_fallthru
      _
    %2148 = vsyncpa [#allocation3], 1

</llo_original>
